<compile_context>
chip_gen: v7x
topology: tpu7x:2x2x1
jax: 0.10.0
libtpu: 0.0.40
codegen_flags: <defaults>
</compile_context>

<pallas_src>
import jax
import jax.numpy as jnp
import numpy as np
from jax.experimental import pallas as pl
from jax.experimental.pallas import tpu as pltpu

LANE = 128      # TPU lane width; only the *final* output is padded to this
HIDDEN = 512    # fc1 width
C1, C2, C3 = 32, 64, 64   # conv channel widths (un-padded, per the spec)


# ----------------------------------------------------------------------------
# Geometry helpers
# ----------------------------------------------------------------------------
def conv_out_hw(h, w, k, s):
    return (h - k) // s + 1, (w - k) // s + 1


# ----------------------------------------------------------------------------
# Wrapper-side im2col for conv1 only (operates on the kernel's external input;
# the resulting (N*H1*W1, 8*8*Cin) patch matrix is the single activation DMA).
# Column order is ((i*KW + j)*Cin + c), matching w1.reshape(KH*KW*Cin, Cout).
# ----------------------------------------------------------------------------
def im2col(x_nhwc, kh, kw, stride):
    N, H, W, C = x_nhwc.shape
    Ho = (H - kh) // stride + 1
    Wo = (W - kw) // stride + 1
    cols = []
    for i in range(kh):
        for j in range(kw):
            cols.append(
                x_nhwc[:, i:i + stride * (Ho - 1) + 1:stride,
                       j:j + stride * (Wo - 1) + 1:stride, :])
    patches = jnp.concatenate(cols, axis=-1)            # (N, Ho, Wo, kh*kw*C)
    return patches.reshape(N * Ho * Wo, kh * kw * C), (N, Ho, Wo)


# ----------------------------------------------------------------------------
# In-kernel im2col: gather a (n*h_out*w_out, kh*kw*chans) patch matrix from a
# VMEM-resident (n*h_in*w_in, chans) activation slab.  Only static strided row
# reads (pl.ds) and static column-block writes; taps are packed densely
# (column offset = tap*chans), so no zero-padded lanes are moved.
# ----------------------------------------------------------------------------
def _gather_patches(src, dst, n, h_in, w_in, kh, kw, stride, h_out, w_out, chans):
    for i in range(kh):
        for j in range(kw):
            c0 = (i * kw + j) * chans                    # densely packed taps
            for b in range(n):
                for oh in range(h_out):
                    s0 = b * h_in * w_in + (stride * oh + i) * w_in + j
                    d0 = (b * h_out + oh) * w_out
                    if stride > 1:
                        rows = src[pl.ds(s0, w_out, stride=stride), :]
                    else:
                        rows = src[pl.ds(s0, w_out), :]
                    dst[pl.ds(d0, w_out), pl.ds(c0, chans)] = rows


# ----------------------------------------------------------------------------
# Fused DQN forward: builds the single Pallas kernel for a fixed geometry.
# ----------------------------------------------------------------------------
def build_dqn_forward(input_shape, num_actions, batch):
    c_in, H, W = input_shape
    h1, wd1 = conv_out_hw(H, W, 8, 4)
    h2, wd2 = conv_out_hw(h1, wd1, 4, 2)
    h3, wd3 = conv_out_hw(h2, wd2, 3, 1)
    p1, p2, p3 = h1 * wd1, h2 * wd2, h3 * wd3
    n = batch
    assert min(h1, wd1, h2, wd2, h3, wd3) >= 1, "input too small for the conv stack"
    assert num_actions <= LANE

    K2 = 16 * C1          # conv2 patch width (4*4 taps, 32 ch each)
    K3 = 9 * C2           # conv3 patch width (3*3 taps, 64 ch each)
    KF = p3 * C3          # fc1 input width

    # bias layout inside the packed (1, 1024) f32 vector (offsets 128-aligned)
    OFF_B1, OFF_B2, OFF_B3 = 0, 128, 256
    OFF_BF1, OFF_BF2 = 384, 896

    def kernel(cols1_ref, w1_ref, b_ref, w2_hbm, w3_hbm, wf1_hbm, wf2_hbm,
               out_ref, *scratch):
        if p3 > 1:
            (act1, cols2, act2, cols3, act3, fcin,
             w2_v, w3_v, wf1_v, wf2_v, sem) = scratch
        else:
            (act1, cols2, act2, cols3, act3,
             w2_v, w3_v, wf1_v, wf2_v, sem) = scratch
            fcin = None

        # --- start ALL weight DMAs up front; each is waited right before use
        cp_w2 = pltpu.make_async_copy(w2_hbm, w2_v, sem.at[0]);   cp_w2.start()
        cp_w3 = pltpu.make_async_copy(w3_hbm, w3_v, sem.at[1]);   cp_w3.start()
        cp_wf1 = pltpu.make_async_copy(wf1_hbm, wf1_v, sem.at[2]); cp_wf1.start()
        cp_wf2 = pltpu.make_async_copy(wf2_hbm, wf2_v, sem.at[3]); cp_wf2.start()

        # fused matmul + bias + optional ReLU; bf16 MXU operands, f32 accum.
        def dense(x, w, boff, bwid, relu):
            acc = jnp.dot(x.astype(jnp.bfloat16), w[...],
                          preferred_element_type=jnp.float32)
            acc = acc + b_ref[:, boff:boff + bwid]       # (1, bwid) broadcast
            return jnp.maximum(acc, 0.0) if relu else acc

        # conv1 (patch matrix pre-built by the wrapper): (n*p1, 64*cin) -> 32 ch
        act1[...] = dense(cols1_ref[...], w1_ref, OFF_B1, C1, True)

        # conv2: in-kernel im2col from VMEM act1 (hides the w2 DMA), 1 matmul
        _gather_patches(act1, cols2, n, h1, wd1, 4, 4, 2, h2, wd2, C1)
        cp_w2.wait()
        act2[...] = dense(cols2[...], w2_v, OFF_B2, C2, True)

        # conv3
        _gather_patches(act2, cols3, n, h2, wd2, 3, 3, 1, h3, wd3, C2)
        cp_w3.wait()
        act3[...] = dense(cols3[...], w3_v, OFF_B3, C3, True)

        # flatten (n*p3, C3) -> (n, p3*C3); skipped entirely when p3 == 1
        # (the PyTorch (C,H,W) flatten order is folded into the wf1 packing).
        if p3 > 1:
            _gather_patches(act3, fcin, n, p3, 1, p3, 1, 1, 1, 1, C3)
            x_fc = fcin[...]
        else:
            x_fc = act3[...]

        cp_wf1.wait()
        hid = dense(x_fc, wf1_v, OFF_BF1, HIDDEN, True)
        cp_wf2.wait()
        out_ref[...] = dense(hid, wf2_v, OFF_BF2, LANE, False)   # lane-dense

    vmem = pltpu.MemorySpace.VMEM
    scratch_shapes = [
        pltpu.VMEM((n * p1, C1), jnp.float32),       # act1
        pltpu.VMEM((n * p2, K2), jnp.float32),       # conv2 patches
        pltpu.VMEM((n * p2, C2), jnp.float32),       # act2
        pltpu.VMEM((n * p3, K3), jnp.float32),       # conv3 patches
        pltpu.VMEM((n * p3, C3), jnp.float32),       # act3
    ]
    if p3 > 1:
        scratch_shapes.append(pltpu.VMEM((n, KF), jnp.float32))   # fc1 input
    scratch_shapes += [
        pltpu.VMEM((K2, C2), jnp.bfloat16),          # w2 landing buffer
        pltpu.VMEM((K3, C3), jnp.bfloat16),          # w3 landing buffer
        pltpu.VMEM((KF, HIDDEN), jnp.bfloat16),      # wf1 landing buffer
        pltpu.VMEM((HIDDEN, LANE), jnp.bfloat16),    # wf2 landing buffer
        pltpu.SemaphoreType.DMA((4,)),
    ]

    fused = pl.pallas_call(
        kernel,
        out_shape=jax.ShapeDtypeStruct((n, LANE), jnp.float32),
        in_specs=[pl.BlockSpec(memory_space=vmem)] * 3      # cols1, w1, biases
                 + [pl.BlockSpec(memory_space=pl.ANY)] * 4,  # w2, w3, wf1, wf2
        out_specs=pl.BlockSpec(memory_space=vmem),
        scratch_shapes=scratch_shapes,
    )

    def forward(packed, x_nchw):
        x = jnp.transpose(x_nchw, (0, 2, 3, 1))              # NCHW -> NHWC
        cols1, _ = im2col(x, 8, 8, 4)                        # (n*p1, 64*c_in)
        q = fused(cols1.astype(jnp.bfloat16), packed["w1"], packed["b"],
                  packed["w2"], packed["w3"], packed["wf1"], packed["wf2"])
        return q[:, :num_actions]

    return forward


# ----------------------------------------------------------------------------
# One-time parameter packing: flatten HWIO conv weights to the densely-packed
# patch-matrix row order (no channel padding), fold the PyTorch (C,H,W)
# flatten permutation into wf1, pad only fc2 / the output to 128 lanes,
# concatenate biases, cast weights to bf16.
# ----------------------------------------------------------------------------
def pack_params(params, input_shape, num_actions):
    _, H, W = input_shape
    h1, wd1 = conv_out_hw(H, W, 8, 4)
    h2, wd2 = conv_out_hw(h1, wd1, 4, 2)
    h3, wd3 = conv_out_hw(h2, wd2, 3, 1)
    p3 = h3 * wd3
    bf16 = jnp.bfloat16

    # conv weights HWIO -> (KH*KW*Cin, Cout); row order matches the gathers.
    w1 = params["w1"].reshape(-1, C1)                    # (64*c_in, 32)
    w2 = params["w2"].reshape(-1, C2)                    # (16*32,   64)
    w3 = params["w3"].reshape(-1, C3)                    # ( 9*64,   64)

    # fc1: PyTorch flattens NCHW (row = c*p3 + p); kernel order is (p, c).
    wf1 = params["wf1"].reshape(C3, p3, HIDDEN).transpose(1, 0, 2)
    wf1 = wf1.reshape(p3 * C3, HIDDEN)

    # fc2: pad num_actions -> 128 lanes (lane-dense output store)
    wf2 = jnp.pad(params["wf2"], ((0, 0), (0, LANE - num_actions)))

    def place(v, width):
        return jnp.pad(v, (0, width - v.shape[0]))

    biases = jnp.concatenate([
        place(params["b1"], 128), place(params["b2"], 128),
        place(params["b3"], 128), params["bf1"],
        place(params["bf2"], 128)]).reshape(1, -1).astype(jnp.float32)

    return {"w1": w1.astype(bf16), "w2": w2.astype(bf16), "w3": w3.astype(bf16),
            "wf1": wf1.astype(bf16), "wf2": wf2.astype(bf16), "b": biases}


# ----------------------------------------------------------------------------
# DQN parameters (deterministic synthetic init) in the original layout.
# ----------------------------------------------------------------------------
def init_dqn_params(key, input_shape, num_actions):
    c_in, H, W = input_shape
    h1, wd1 = conv_out_hw(H, W, 8, 4)
    h2, wd2 = conv_out_hw(h1, wd1, 4, 2)
    h3, wd3 = conv_out_hw(h2, wd2, 3, 1)
    fc1_in = C3 * h3 * wd3                     # == DQN.feature_size(input_shape)

    ks = jax.random.split(key, 10)

    def conv_w(k, kh, kw, cin, cout):
        return jax.random.normal(k, (kh, kw, cin, cout), jnp.float32) / np.sqrt(kh * kw * cin)

    def lin_w(k, din, dout):
        return jax.random.normal(k, (din, dout), jnp.float32) / np.sqrt(din)

    return {
        "w1": conv_w(ks[0], 8, 8, c_in, C1), "b1": 0.01 * jax.random.normal(ks[1], (C1,), jnp.float32),
        "w2": conv_w(ks[2], 4, 4, C1, C2),   "b2": 0.01 * jax.random.normal(ks[3], (C2,), jnp.float32),
        "w3": conv_w(ks[4], 3, 3, C2, C3),   "b3": 0.01 * jax.random.normal(ks[5], (C3,), jnp.float32),
        "wf1": lin_w(ks[6], fc1_in, HIDDEN), "bf1": 0.01 * jax.random.normal(ks[7], (HIDDEN,), jnp.float32),
        "wf2": lin_w(ks[8], HIDDEN, num_actions),
        "bf2": 0.01 * jax.random.normal(ks[9], (num_actions,), jnp.float32),
    }


# Pure-JAX f32 reference (no Pallas) for the semantic correctness check.
def dqn_forward_ref(params, x_nchw):
    x = jnp.transpose(x_nchw, (0, 2, 3, 1))

    def conv(x, w, b, s):
        y = jax.lax.conv_general_dilated(
            x, w, (s, s), "VALID",
            dimension_numbers=("NHWC", "HWIO", "NHWC"),
            precision=jax.lax.Precision.HIGHEST)
        return jax.nn.relu(y + b)

    x = conv(x, params["w1"], params["b1"], 4)
    x = conv(x, params["w2"], params["b2"], 2)
    x = conv(x, params["w3"], params["b3"], 1)
    x = jnp.transpose(x, (0, 3, 1, 2)).reshape(x.shape[0], -1)
    x = jax.nn.relu(x @ params["wf1"] + params["bf1"])
    return x @ params["wf2"] + params["bf2"]


# Pure-JAX reference mirroring the kernel's bf16-operand / f32-accum data path
# (tight tolerance check, catches packing / ordering bugs per the review).
def dqn_forward_bf16_ref(params, x_nchw):
    bf16 = jnp.bfloat16

    def mm(a, b):
        return jnp.dot(a.astype(bf16), b.astype(bf16),
                       preferred_element_type=jnp.float32)

    x = jnp.transpose(x_nchw, (0, 2, 3, 1))

    def conv(x, w, b, k, s):
        cols, (N, Ho, Wo) = im2col(x, k, k, s)
        y = jax.nn.relu(mm(cols, w.reshape(-1, w.shape[-1])) + b)
        return y.reshape(N, Ho, Wo, -1)

    x = conv(x, params["w1"], params["b1"], 8, 4)
    x = conv(x, params["w2"], params["b2"], 4, 2)
    x = conv(x, params["w3"], params["b3"], 3, 1)
    x = jnp.transpose(x, (0, 3, 1, 2)).reshape(x.shape[0], -1)
    x = jax.nn.relu(mm(x, params["wf1"]) + params["bf1"])
    return mm(x, params["wf2"]) + params["bf2"]


if __name__ == "__main__":
    # Minimum spatial size that survives k8/s4 -> k4/s2 -> k3/s1 is 36.
    input_shape = (4, 36, 36)
    batch, num_actions = 2, 6

    key = jax.random.PRNGKey(0)
    pkey, xkey = jax.random.split(key)
    params = init_dqn_params(pkey, input_shape, num_actions)
    x = jax.random.normal(xkey, (batch,) + input_shape, jnp.float32)

    packed = pack_params(params, input_shape, num_actions)   # one-time packing
    forward = jax.jit(build_dqn_forward(input_shape, num_actions, batch))

    q_values = jax.block_until_ready(forward(packed, x))
    assert q_values.shape == (batch, num_actions), q_values.shape

    # Tight check vs the bf16-operand emulated reference (same data path;
    # only f32 accumulation-order differences remain).
    q_bf16 = jax.block_until_ready(dqn_forward_bf16_ref(params, x))
    np.testing.assert_allclose(np.asarray(q_values), np.asarray(q_bf16),
                               rtol=5e-3, atol=5e-3)

    # Loose check vs the full-f32 HIGHEST-precision reference: bf16 MXU
    # operands give ~1e-2 worst-case deviation, so 3e-2 tolerance.
    q_ref = jax.block_until_ready(dqn_forward_ref(params, x))
    np.testing.assert_allclose(np.asarray(q_values), np.asarray(q_ref),
                               rtol=3e-2, atol=3e-2)
    print("KERNEL_OK")
</pallas_src>

<mosaic_0001>
module attributes {stable_mosaic.version = 11 : i64} {
  func.func @kernel(%arg0: memref<128x256xbf16, #tpu.memory_space<vmem>>, %arg1: memref<256x32xbf16, #tpu.memory_space<vmem>>, %arg2: memref<1x1024xf32, #tpu.memory_space<vmem>>, %arg3: memref<512x64xbf16, #tpu.memory_space<any>>, %arg4: memref<576x64xbf16, #tpu.memory_space<any>>, %arg5: memref<64x512xbf16, #tpu.memory_space<any>>, %arg6: memref<512x128xbf16, #tpu.memory_space<any>>, %arg7: memref<2x128xf32, #tpu.memory_space<vmem>>, %arg8: memref<128x32xf32, #tpu.memory_space<vmem>>, %arg9: memref<18x512xf32, #tpu.memory_space<vmem>>, %arg10: memref<18x64xf32, #tpu.memory_space<vmem>>, %arg11: memref<2x576xf32, #tpu.memory_space<vmem>>, %arg12: memref<2x64xf32, #tpu.memory_space<vmem>>, %arg13: memref<512x64xbf16, #tpu.memory_space<vmem>>, %arg14: memref<576x64xbf16, #tpu.memory_space<vmem>>, %arg15: memref<64x512xbf16, #tpu.memory_space<vmem>>, %arg16: memref<512x128xbf16, #tpu.memory_space<vmem>>, %arg17: memref<4x!tpu.dma_semaphore, #tpu.memory_space<semaphore_mem>>) attributes {dimension_semantics = [], scalar_prefetch = 0 : i64, scratch_operands = 10 : i64, tpu.core_type = #tpu.core_type<tc>} {
    %c0_i32 = arith.constant 0 : i32
    %0 = tpu.memref_slice %arg17[%c0_i32] : memref<4x!tpu.dma_semaphore, #tpu.memory_space<semaphore_mem>> -> memref<1x!tpu.dma_semaphore, #tpu.memory_space<semaphore_mem>>
    %1 = tpu.memref_squeeze %0 : memref<1x!tpu.dma_semaphore, #tpu.memory_space<semaphore_mem>> -> memref<!tpu.dma_semaphore, #tpu.memory_space<semaphore_mem>>
    tpu.enqueue_dma source(%arg3 : memref<512x64xbf16, #tpu.memory_space<any>>) target(%arg13 : memref<512x64xbf16, #tpu.memory_space<vmem>>) target_semaphore(%1 : memref<!tpu.dma_semaphore, #tpu.memory_space<semaphore_mem>>)
    %c1_i32 = arith.constant 1 : i32
    %2 = tpu.memref_slice %arg17[%c1_i32] : memref<4x!tpu.dma_semaphore, #tpu.memory_space<semaphore_mem>> -> memref<1x!tpu.dma_semaphore, #tpu.memory_space<semaphore_mem>>
    %3 = tpu.memref_squeeze %2 : memref<1x!tpu.dma_semaphore, #tpu.memory_space<semaphore_mem>> -> memref<!tpu.dma_semaphore, #tpu.memory_space<semaphore_mem>>
    tpu.enqueue_dma source(%arg4 : memref<576x64xbf16, #tpu.memory_space<any>>) target(%arg14 : memref<576x64xbf16, #tpu.memory_space<vmem>>) target_semaphore(%3 : memref<!tpu.dma_semaphore, #tpu.memory_space<semaphore_mem>>)
    %c2_i32 = arith.constant 2 : i32
    %4 = tpu.memref_slice %arg17[%c2_i32] : memref<4x!tpu.dma_semaphore, #tpu.memory_space<semaphore_mem>> -> memref<1x!tpu.dma_semaphore, #tpu.memory_space<semaphore_mem>>
    %5 = tpu.memref_squeeze %4 : memref<1x!tpu.dma_semaphore, #tpu.memory_space<semaphore_mem>> -> memref<!tpu.dma_semaphore, #tpu.memory_space<semaphore_mem>>
    tpu.enqueue_dma source(%arg5 : memref<64x512xbf16, #tpu.memory_space<any>>) target(%arg15 : memref<64x512xbf16, #tpu.memory_space<vmem>>) target_semaphore(%5 : memref<!tpu.dma_semaphore, #tpu.memory_space<semaphore_mem>>)
    %c3_i32 = arith.constant 3 : i32
    %6 = tpu.memref_slice %arg17[%c3_i32] : memref<4x!tpu.dma_semaphore, #tpu.memory_space<semaphore_mem>> -> memref<1x!tpu.dma_semaphore, #tpu.memory_space<semaphore_mem>>
    %7 = tpu.memref_squeeze %6 : memref<1x!tpu.dma_semaphore, #tpu.memory_space<semaphore_mem>> -> memref<!tpu.dma_semaphore, #tpu.memory_space<semaphore_mem>>
    tpu.enqueue_dma source(%arg6 : memref<512x128xbf16, #tpu.memory_space<any>>) target(%arg16 : memref<512x128xbf16, #tpu.memory_space<vmem>>) target_semaphore(%7 : memref<!tpu.dma_semaphore, #tpu.memory_space<semaphore_mem>>)
    %c0 = arith.constant 0 : index
    %c0_0 = arith.constant 0 : index
    %8 = vector.load %arg0[%c0, %c0_0] : memref<128x256xbf16, #tpu.memory_space<vmem>>, vector<128x256xbf16>
    %c0_1 = arith.constant 0 : index
    %c0_2 = arith.constant 0 : index
    %9 = vector.load %arg1[%c0_1, %c0_2] : memref<256x32xbf16, #tpu.memory_space<vmem>>, vector<256x32xbf16>
    %cst = arith.constant dense<0.000000e+00> : vector<128x32xf32>
    %10 = tpu.matmul %8, %9, %cst {dimension_numbers = #tpu.dot_dimension_numbers<[1], [0], [0], [1], [0, 0, 1, 1], [], []>} : vector<128x256xbf16>, vector<256x32xbf16>, vector<128x32xf32> -> vector<128x32xf32>
    %c0_3 = arith.constant 0 : index
    %c0_4 = arith.constant 0 : index
    %11 = vector.load %arg2[%c0_3, %c0_4] : memref<1x1024xf32, #tpu.memory_space<vmem>>, vector<1x32xf32>
    %12 = vector.broadcast %11 : vector<1x32xf32> to vector<128x32xf32>
    %13 = arith.addf %10, %12 : vector<128x32xf32>
    %cst_5 = arith.constant 0.000000e+00 : f32
    %14 = vector.broadcast %cst_5 : f32 to vector<128x32xf32>
    %15 = arith.maximumf %13, %14 : vector<128x32xf32>
    %c0_6 = arith.constant 0 : index
    %c0_7 = arith.constant 0 : index
    %16 = vector.load %arg8[%c0_6, %c0_7] : memref<128x32xf32, #tpu.memory_space<vmem>>, vector<128x32xf32>
    tpu.vector_store %arg8[%c0_6, %c0_7], %15 {strides = array<i32>} : memref<128x32xf32, #tpu.memory_space<vmem>>, vector<128x32xf32>,
    %c0_8 = arith.constant 0 : index
    %c0_9 = arith.constant 0 : index
    %17 = tpu.strided_load %arg8[%c0_8, %c0_9] {strides = array<i32: 2, 1>} : memref<128x32xf32, #tpu.memory_space<vmem>>, vector<3x32xf32>
    %c0_10 = arith.constant 0 : index
    %c0_11 = arith.constant 0 : index
    %18 = vector.load %arg9[%c0_10, %c0_11] : memref<18x512xf32, #tpu.memory_space<vmem>>, vector<3x32xf32>
    tpu.vector_store %arg9[%c0_10, %c0_11], %17 {strides = array<i32>} : memref<18x512xf32, #tpu.memory_space<vmem>>, vector<3x32xf32>,
    %c16 = arith.constant 16 : index
    %c0_12 = arith.constant 0 : index
    %19 = tpu.strided_load %arg8[%c16, %c0_12] {strides = array<i32: 2, 1>} : memref<128x32xf32, #tpu.memory_space<vmem>>, vector<3x32xf32>
    %c3 = arith.constant 3 : index
    %c0_13 = arith.constant 0 : index
    %20 = vector.load %arg9[%c3, %c0_13] : memref<18x512xf32, #tpu.memory_space<vmem>>, vector<3x32xf32>
    tpu.vector_store %arg9[%c3, %c0_13], %19 {strides = array<i32>} : memref<18x512xf32, #tpu.memory_space<vmem>>, vector<3x32xf32>,
    %c32 = arith.constant 32 : index
    %c0_14 = arith.constant 0 : index
    %21 = tpu.strided_load %arg8[%c32, %c0_14] {strides = array<i32: 2, 1>} : memref<128x32xf32, #tpu.memory_space<vmem>>, vector<3x32xf32>
    %c6 = arith.constant 6 : index
    %c0_15 = arith.constant 0 : index
    %22 = vector.load %arg9[%c6, %c0_15] : memref<18x512xf32, #tpu.memory_space<vmem>>, vector<3x32xf32>
    tpu.vector_store %arg9[%c6, %c0_15], %21 {strides = array<i32>} : memref<18x512xf32, #tpu.memory_space<vmem>>, vector<3x32xf32>,
    %c64 = arith.constant 64 : index
    %c0_16 = arith.constant 0 : index
    %23 = tpu.strided_load %arg8[%c64, %c0_16] {strides = array<i32: 2, 1>} : memref<128x32xf32, #tpu.memory_space<vmem>>, vector<3x32xf32>
    %c9 = arith.constant 9 : index
    %c0_17 = arith.constant 0 : index
    %24 = vector.load %arg9[%c9, %c0_17] : memref<18x512xf32, #tpu.memory_space<vmem>>, vector<3x32xf32>
    tpu.vector_store %arg9[%c9, %c0_17], %23 {strides = array<i32>} : memref<18x512xf32, #tpu.memory_space<vmem>>, vector<3x32xf32>,
    %c80 = arith.constant 80 : index
    %c0_18 = arith.constant 0 : index
    %25 = tpu.strided_load %arg8[%c80, %c0_18] {strides = array<i32: 2, 1>} : memref<128x32xf32, #tpu.memory_space<vmem>>, vector<3x32xf32>
    %c12 = arith.constant 12 : index
    %c0_19 = arith.constant 0 : index
    %26 = vector.load %arg9[%c12, %c0_19] : memref<18x512xf32, #tpu.memory_space<vmem>>, vector<3x32xf32>
    tpu.vector_store %arg9[%c12, %c0_19], %25 {strides = array<i32>} : memref<18x512xf32, #tpu.memory_space<vmem>>, vector<3x32xf32>,
    %c96 = arith.constant 96 : index
    %c0_20 = arith.constant 0 : index
    %27 = tpu.strided_load %arg8[%c96, %c0_20] {strides = array<i32: 2, 1>} : memref<128x32xf32, #tpu.memory_space<vmem>>, vector<3x32xf32>
    %c15 = arith.constant 15 : index
    %c0_21 = arith.constant 0 : index
    %28 = vector.load %arg9[%c15, %c0_21] : memref<18x512xf32, #tpu.memory_space<vmem>>, vector<3x32xf32>
    tpu.vector_store %arg9[%c15, %c0_21], %27 {strides = array<i32>} : memref<18x512xf32, #tpu.memory_space<vmem>>, vector<3x32xf32>,
    %c1 = arith.constant 1 : index
    %c0_22 = arith.constant 0 : index
    %29 = tpu.strided_load %arg8[%c1, %c0_22] {strides = array<i32: 2, 1>} : memref<128x32xf32, #tpu.memory_space<vmem>>, vector<3x32xf32>
    %c0_23 = arith.constant 0 : index
    %c32_24 = arith.constant 32 : index
    %30 = vector.load %arg9[%c0_23, %c32_24] : memref<18x512xf32, #tpu.memory_space<vmem>>, vector<3x32xf32>
    tpu.vector_store %arg9[%c0_23, %c32_24], %29 {strides = array<i32>} : memref<18x512xf32, #tpu.memory_space<vmem>>, vector<3x32xf32>,
    %c17 = arith.constant 17 : index
    %c0_25 = arith.constant 0 : index
    %31 = tpu.strided_load %arg8[%c17, %c0_25] {strides = array<i32: 2, 1>} : memref<128x32xf32, #tpu.memory_space<vmem>>, vector<3x32xf32>
    %c3_26 = arith.constant 3 : index
    %c32_27 = arith.constant 32 : index
    %32 = vector.load %arg9[%c3_26, %c32_27] : memref<18x512xf32, #tpu.memory_space<vmem>>, vector<3x32xf32>
    tpu.vector_store %arg9[%c3_26, %c32_27], %31 {strides = array<i32>} : memref<18x512xf32, #tpu.memory_space<vmem>>, vector<3x32xf32>,
    %c33 = arith.constant 33 : index
    %c0_28 = arith.constant 0 : index
    %33 = tpu.strided_load %arg8[%c33, %c0_28] {strides = array<i32: 2, 1>} : memref<128x32xf32, #tpu.memory_space<vmem>>, vector<3x32xf32>
    %c6_29 = arith.constant 6 : index
    %c32_30 = arith.constant 32 : index
    %34 = vector.load %arg9[%c6_29, %c32_30] : memref<18x512xf32, #tpu.memory_space<vmem>>, vector<3x32xf32>
    tpu.vector_store %arg9[%c6_29, %c32_30], %33 {strides = array<i32>} : memref<18x512xf32, #tpu.memory_space<vmem>>, vector<3x32xf32>,
    %c65 = arith.constant 65 : index
    %c0_31 = arith.constant 0 : index
    %35 = tpu.strided_load %arg8[%c65, %c0_31] {strides = array<i32: 2, 1>} : memref<128x32xf32, #tpu.memory_space<vmem>>, vector<3x32xf32>
    %c9_32 = arith.constant 9 : index
    %c32_33 = arith.constant 32 : index
    %36 = vector.load %arg9[%c9_32, %c32_33] : memref<18x512xf32, #tpu.memory_space<vmem>>, vector<3x32xf32>
    tpu.vector_store %arg9[%c9_32, %c32_33], %35 {strides = array<i32>} : memref<18x512xf32, #tpu.memory_space<vmem>>, vector<3x32xf32>,
    %c81 = arith.constant 81 : index
    %c0_34 = arith.constant 0 : index
    %37 = tpu.strided_load %arg8[%c81, %c0_34] {strides = array<i32: 2, 1>} : memref<128x32xf32, #tpu.memory_space<vmem>>, vector<3x32xf32>
    %c12_35 = arith.constant 12 : index
    %c32_36 = arith.constant 32 : index
    %38 = vector.load %arg9[%c12_35, %c32_36] : memref<18x512xf32, #tpu.memory_space<vmem>>, vector<3x32xf32>
    tpu.vector_store %arg9[%c12_35, %c32_36], %37 {strides = array<i32>} : memref<18x512xf32, #tpu.memory_space<vmem>>, vector<3x32xf32>,
    %c97 = arith.constant 97 : index
    %c0_37 = arith.constant 0 : index
    %39 = tpu.strided_load %arg8[%c97, %c0_37] {strides = array<i32: 2, 1>} : memref<128x32xf32, #tpu.memory_space<vmem>>, vector<3x32xf32>
    %c15_38 = arith.constant 15 : index
    %c32_39 = arith.constant 32 : index
    %40 = vector.load %arg9[%c15_38, %c32_39] : memref<18x512xf32, #tpu.memory_space<vmem>>, vector<3x32xf32>
    tpu.vector_store %arg9[%c15_38, %c32_39], %39 {strides = array<i32>} : memref<18x512xf32, #tpu.memory_space<vmem>>, vector<3x32xf32>,
    %c2 = arith.constant 2 : index
    %c0_40 = arith.constant 0 : index
    %41 = tpu.strided_load %arg8[%c2, %c0_40] {strides = array<i32: 2, 1>} : memref<128x32xf32, #tpu.memory_space<vmem>>, vector<3x32xf32>
    %c0_41 = arith.constant 0 : index
    %c64_42 = arith.constant 64 : index
    %42 = vector.load %arg9[%c0_41, %c64_42] : memref<18x512xf32, #tpu.memory_space<vmem>>, vector<3x32xf32>
    tpu.vector_store %arg9[%c0_41, %c64_42], %41 {strides = array<i32>} : memref<18x512xf32, #tpu.memory_space<vmem>>, vector<3x32xf32>,
    %c18 = arith.constant 18 : index
    %c0_43 = arith.constant 0 : index
    %43 = tpu.strided_load %arg8[%c18, %c0_43] {strides = array<i32: 2, 1>} : memref<128x32xf32, #tpu.memory_space<vmem>>, vector<3x32xf32>
    %c3_44 = arith.constant 3 : index
    %c64_45 = arith.constant 64 : index
    %44 = vector.load %arg9[%c3_44, %c64_45] : memref<18x512xf32, #tpu.memory_space<vmem>>, vector<3x32xf32>
    tpu.vector_store %arg9[%c3_44, %c64_45], %43 {strides = array<i32>} : memref<18x512xf32, #tpu.memory_space<vmem>>, vector<3x32xf32>,
    %c34 = arith.constant 34 : index
    %c0_46 = arith.constant 0 : index
    %45 = tpu.strided_load %arg8[%c34, %c0_46] {strides = array<i32: 2, 1>} : memref<128x32xf32, #tpu.memory_space<vmem>>, vector<3x32xf32>
    %c6_47 = arith.constant 6 : index
    %c64_48 = arith.constant 64 : index
    %46 = vector.load %arg9[%c6_47, %c64_48] : memref<18x512xf32, #tpu.memory_space<vmem>>, vector<3x32xf32>
    tpu.vector_store %arg9[%c6_47, %c64_48], %45 {strides = array<i32>} : memref<18x512xf32, #tpu.memory_space<vmem>>, vector<3x32xf32>,
    %c66 = arith.constant 66 : index
    %c0_49 = arith.constant 0 : index
    %47 = tpu.strided_load %arg8[%c66, %c0_49] {strides = array<i32: 2, 1>} : memref<128x32xf32, #tpu.memory_space<vmem>>, vector<3x32xf32>
    %c9_50 = arith.constant 9 : index
    %c64_51 = arith.constant 64 : index
    %48 = vector.load %arg9[%c9_50, %c64_51] : memref<18x512xf32, #tpu.memory_space<vmem>>, vector<3x32xf32>
    tpu.vector_store %arg9[%c9_50, %c64_51], %47 {strides = array<i32>} : memref<18x512xf32, #tpu.memory_space<vmem>>, vector<3x32xf32>,
    %c82 = arith.constant 82 : index
    %c0_52 = arith.constant 0 : index
    %49 = tpu.strided_load %arg8[%c82, %c0_52] {strides = array<i32: 2, 1>} : memref<128x32xf32, #tpu.memory_space<vmem>>, vector<3x32xf32>
    %c12_53 = arith.constant 12 : index
    %c64_54 = arith.constant 64 : index
    %50 = vector.load %arg9[%c12_53, %c64_54] : memref<18x512xf32, #tpu.memory_space<vmem>>, vector<3x32xf32>
    tpu.vector_store %arg9[%c12_53, %c64_54], %49 {strides = array<i32>} : memref<18x512xf32, #tpu.memory_space<vmem>>, vector<3x32xf32>,
    %c98 = arith.constant 98 : index
    %c0_55 = arith.constant 0 : index
    %51 = tpu.strided_load %arg8[%c98, %c0_55] {strides = array<i32: 2, 1>} : memref<128x32xf32, #tpu.memory_space<vmem>>, vector<3x32xf32>
    %c15_56 = arith.constant 15 : index
    %c64_57 = arith.constant 64 : index
    %52 = vector.load %arg9[%c15_56, %c64_57] : memref<18x512xf32, #tpu.memory_space<vmem>>, vector<3x32xf32>
    tpu.vector_store %arg9[%c15_56, %c64_57], %51 {strides = array<i32>} : memref<18x512xf32, #tpu.memory_space<vmem>>, vector<3x32xf32>,
    %c3_58 = arith.constant 3 : index
    %c0_59 = arith.constant 0 : index
    %53 = tpu.strided_load %arg8[%c3_58, %c0_59] {strides = array<i32: 2, 1>} : memref<128x32xf32, #tpu.memory_space<vmem>>, vector<3x32xf32>
    %c0_60 = arith.constant 0 : index
    %c96_61 = arith.constant 96 : index
    %54 = vector.load %arg9[%c0_60, %c96_61] : memref<18x512xf32, #tpu.memory_space<vmem>>, vector<3x32xf32>
    tpu.vector_store %arg9[%c0_60, %c96_61], %53 {strides = array<i32>} : memref<18x512xf32, #tpu.memory_space<vmem>>, vector<3x32xf32>,
    %c19 = arith.constant 19 : index
    %c0_62 = arith.constant 0 : index
    %55 = tpu.strided_load %arg8[%c19, %c0_62] {strides = array<i32: 2, 1>} : memref<128x32xf32, #tpu.memory_space<vmem>>, vector<3x32xf32>
    %c3_63 = arith.constant 3 : index
    %c96_64 = arith.constant 96 : index
    %56 = vector.load %arg9[%c3_63, %c96_64] : memref<18x512xf32, #tpu.memory_space<vmem>>, vector<3x32xf32>
    tpu.vector_store %arg9[%c3_63, %c96_64], %55 {strides = array<i32>} : memref<18x512xf32, #tpu.memory_space<vmem>>, vector<3x32xf32>,
    %c35 = arith.constant 35 : index
    %c0_65 = arith.constant 0 : index
    %57 = tpu.strided_load %arg8[%c35, %c0_65] {strides = array<i32: 2, 1>} : memref<128x32xf32, #tpu.memory_space<vmem>>, vector<3x32xf32>
    %c6_66 = arith.constant 6 : index
    %c96_67 = arith.constant 96 : index
    %58 = vector.load %arg9[%c6_66, %c96_67] : memref<18x512xf32, #tpu.memory_space<vmem>>, vector<3x32xf32>
    tpu.vector_store %arg9[%c6_66, %c96_67], %57 {strides = array<i32>} : memref<18x512xf32, #tpu.memory_space<vmem>>, vector<3x32xf32>,
    %c67 = arith.constant 67 : index
    %c0_68 = arith.constant 0 : index
    %59 = tpu.strided_load %arg8[%c67, %c0_68] {strides = array<i32: 2, 1>} : memref<128x32xf32, #tpu.memory_space<vmem>>, vector<3x32xf32>
    %c9_69 = arith.constant 9 : index
    %c96_70 = arith.constant 96 : index
    %60 = vector.load %arg9[%c9_69, %c96_70] : memref<18x512xf32, #tpu.memory_space<vmem>>, vector<3x32xf32>
    tpu.vector_store %arg9[%c9_69, %c96_70], %59 {strides = array<i32>} : memref<18x512xf32, #tpu.memory_space<vmem>>, vector<3x32xf32>,
    %c83 = arith.constant 83 : index
    %c0_71 = arith.constant 0 : index
    %61 = tpu.strided_load %arg8[%c83, %c0_71] {strides = array<i32: 2, 1>} : memref<128x32xf32, #tpu.memory_space<vmem>>, vector<3x32xf32>
    %c12_72 = arith.constant 12 : index
    %c96_73 = arith.constant 96 : index
    %62 = vector.load %arg9[%c12_72, %c96_73] : memref<18x512xf32, #tpu.memory_space<vmem>>, vector<3x32xf32>
    tpu.vector_store %arg9[%c12_72, %c96_73], %61 {strides = array<i32>} : memref<18x512xf32, #tpu.memory_space<vmem>>, vector<3x32xf32>,
    %c99 = arith.constant 99 : index
    %c0_74 = arith.constant 0 : index
    %63 = tpu.strided_load %arg8[%c99, %c0_74] {strides = array<i32: 2, 1>} : memref<128x32xf32, #tpu.memory_space<vmem>>, vector<3x32xf32>
    %c15_75 = arith.constant 15 : index
    %c96_76 = arith.constant 96 : index
    %64 = vector.load %arg9[%c15_75, %c96_76] : memref<18x512xf32, #tpu.memory_space<vmem>>, vector<3x32xf32>
    tpu.vector_store %arg9[%c15_75, %c96_76], %63 {strides = array<i32>} : memref<18x512xf32, #tpu.memory_space<vmem>>, vector<3x32xf32>,
    %c8 = arith.constant 8 : index
    %c0_77 = arith.constant 0 : index
    %65 = tpu.strided_load %arg8[%c8, %c0_77] {strides = array<i32: 2, 1>} : memref<128x32xf32, #tpu.memory_space<vmem>>, vector<3x32xf32>
    %c0_78 = arith.constant 0 : index
    %c128 = arith.constant 128 : index
    %66 = vector.load %arg9[%c0_78, %c128] : memref<18x512xf32, #tpu.memory_space<vmem>>, vector<3x32xf32>
    tpu.vector_store %arg9[%c0_78, %c128], %65 {strides = array<i32>} : memref<18x512xf32, #tpu.memory_space<vmem>>, vector<3x32xf32>,
    %c24 = arith.constant 24 : index
    %c0_79 = arith.constant 0 : index
    %67 = tpu.strided_load %arg8[%c24, %c0_79] {strides = array<i32: 2, 1>} : memref<128x32xf32, #tpu.memory_space<vmem>>, vector<3x32xf32>
    %c3_80 = arith.constant 3 : index
    %c128_81 = arith.constant 128 : index
    %68 = vector.load %arg9[%c3_80, %c128_81] : memref<18x512xf32, #tpu.memory_space<vmem>>, vector<3x32xf32>
    tpu.vector_store %arg9[%c3_80, %c128_81], %67 {strides = array<i32>} : memref<18x512xf32, #tpu.memory_space<vmem>>, vector<3x32xf32>,
    %c40 = arith.constant 40 : index
    %c0_82 = arith.constant 0 : index
    %69 = tpu.strided_load %arg8[%c40, %c0_82] {strides = array<i32: 2, 1>} : memref<128x32xf32, #tpu.memory_space<vmem>>, vector<3x32xf32>
    %c6_83 = arith.constant 6 : index
    %c128_84 = arith.constant 128 : index
    %70 = vector.load %arg9[%c6_83, %c128_84] : memref<18x512xf32, #tpu.memory_space<vmem>>, vector<3x32xf32>
    tpu.vector_store %arg9[%c6_83, %c128_84], %69 {strides = array<i32>} : memref<18x512xf32, #tpu.memory_space<vmem>>, vector<3x32xf32>,
    %c72 = arith.constant 72 : index
    %c0_85 = arith.constant 0 : index
    %71 = tpu.strided_load %arg8[%c72, %c0_85] {strides = array<i32: 2, 1>} : memref<128x32xf32, #tpu.memory_space<vmem>>, vector<3x32xf32>
    %c9_86 = arith.constant 9 : index
    %c128_87 = arith.constant 128 : index
    %72 = vector.load %arg9[%c9_86, %c128_87] : memref<18x512xf32, #tpu.memory_space<vmem>>, vector<3x32xf32>
    tpu.vector_store %arg9[%c9_86, %c128_87], %71 {strides = array<i32>} : memref<18x512xf32, #tpu.memory_space<vmem>>, vector<3x32xf32>,
    %c88 = arith.constant 88 : index
    %c0_88 = arith.constant 0 : index
    %73 = tpu.strided_load %arg8[%c88, %c0_88] {strides = array<i32: 2, 1>} : memref<128x32xf32, #tpu.memory_space<vmem>>, vector<3x32xf32>
    %c12_89 = arith.constant 12 : index
    %c128_90 = arith.constant 128 : index
    %74 = vector.load %arg9[%c12_89, %c128_90] : memref<18x512xf32, #tpu.memory_space<vmem>>, vector<3x32xf32>
    tpu.vector_store %arg9[%c12_89, %c128_90], %73 {strides = array<i32>} : memref<18x512xf32, #tpu.memory_space<vmem>>, vector<3x32xf32>,
    %c104 = arith.constant 104 : index
    %c0_91 = arith.constant 0 : index
    %75 = tpu.strided_load %arg8[%c104, %c0_91] {strides = array<i32: 2, 1>} : memref<128x32xf32, #tpu.memory_space<vmem>>, vector<3x32xf32>
    %c15_92 = arith.constant 15 : index
    %c128_93 = arith.constant 128 : index
    %76 = vector.load %arg9[%c15_92, %c128_93] : memref<18x512xf32, #tpu.memory_space<vmem>>, vector<3x32xf32>
    tpu.vector_store %arg9[%c15_92, %c128_93], %75 {strides = array<i32>} : memref<18x512xf32, #tpu.memory_space<vmem>>, vector<3x32xf32>,
    %c9_94 = arith.constant 9 : index
    %c0_95 = arith.constant 0 : index
    %77 = tpu.strided_load %arg8[%c9_94, %c0_95] {strides = array<i32: 2, 1>} : memref<128x32xf32, #tpu.memory_space<vmem>>, vector<3x32xf32>
    %c0_96 = arith.constant 0 : index
    %c160 = arith.constant 160 : index
    %78 = vector.load %arg9[%c0_96, %c160] : memref<18x512xf32, #tpu.memory_space<vmem>>, vector<3x32xf32>
    tpu.vector_store %arg9[%c0_96, %c160], %77 {strides = array<i32>} : memref<18x512xf32, #tpu.memory_space<vmem>>, vector<3x32xf32>,
    %c25 = arith.constant 25 : index
    %c0_97 = arith.constant 0 : index
    %79 = tpu.strided_load %arg8[%c25, %c0_97] {strides = array<i32: 2, 1>} : memref<128x32xf32, #tpu.memory_space<vmem>>, vector<3x32xf32>
    %c3_98 = arith.constant 3 : index
    %c160_99 = arith.constant 160 : index
    %80 = vector.load %arg9[%c3_98, %c160_99] : memref<18x512xf32, #tpu.memory_space<vmem>>, vector<3x32xf32>
    tpu.vector_store %arg9[%c3_98, %c160_99], %79 {strides = array<i32>} : memref<18x512xf32, #tpu.memory_space<vmem>>, vector<3x32xf32>,
    %c41 = arith.constant 41 : index
    %c0_100 = arith.constant 0 : index
    %81 = tpu.strided_load %arg8[%c41, %c0_100] {strides = array<i32: 2, 1>} : memref<128x32xf32, #tpu.memory_space<vmem>>, vector<3x32xf32>
    %c6_101 = arith.constant 6 : index
    %c160_102 = arith.constant 160 : index
    %82 = vector.load %arg9[%c6_101, %c160_102] : memref<18x512xf32, #tpu.memory_space<vmem>>, vector<3x32xf32>
    tpu.vector_store %arg9[%c6_101, %c160_102], %81 {strides = array<i32>} : memref<18x512xf32, #tpu.memory_space<vmem>>, vector<3x32xf32>,
    %c73 = arith.constant 73 : index
    %c0_103 = arith.constant 0 : index
    %83 = tpu.strided_load %arg8[%c73, %c0_103] {strides = array<i32: 2, 1>} : memref<128x32xf32, #tpu.memory_space<vmem>>, vector<3x32xf32>
    %c9_104 = arith.constant 9 : index
    %c160_105 = arith.constant 160 : index
    %84 = vector.load %arg9[%c9_104, %c160_105] : memref<18x512xf32, #tpu.memory_space<vmem>>, vector<3x32xf32>
    tpu.vector_store %arg9[%c9_104, %c160_105], %83 {strides = array<i32>} : memref<18x512xf32, #tpu.memory_space<vmem>>, vector<3x32xf32>,
    %c89 = arith.constant 89 : index
    %c0_106 = arith.constant 0 : index
    %85 = tpu.strided_load %arg8[%c89, %c0_106] {strides = array<i32: 2, 1>} : memref<128x32xf32, #tpu.memory_space<vmem>>, vector<3x32xf32>
    %c12_107 = arith.constant 12 : index
    %c160_108 = arith.constant 160 : index
    %86 = vector.load %arg9[%c12_107, %c160_108] : memref<18x512xf32, #tpu.memory_space<vmem>>, vector<3x32xf32>
    tpu.vector_store %arg9[%c12_107, %c160_108], %85 {strides = array<i32>} : memref<18x512xf32, #tpu.memory_space<vmem>>, vector<3x32xf32>,
    %c105 = arith.constant 105 : index
    %c0_109 = arith.constant 0 : index
    %87 = tpu.strided_load %arg8[%c105, %c0_109] {strides = array<i32: 2, 1>} : memref<128x32xf32, #tpu.memory_space<vmem>>, vector<3x32xf32>
    %c15_110 = arith.constant 15 : index
    %c160_111 = arith.constant 160 : index
    %88 = vector.load %arg9[%c15_110, %c160_111] : memref<18x512xf32, #tpu.memory_space<vmem>>, vector<3x32xf32>
    tpu.vector_store %arg9[%c15_110, %c160_111], %87 {strides = array<i32>} : memref<18x512xf32, #tpu.memory_space<vmem>>, vector<3x32xf32>,
    %c10 = arith.constant 10 : index
    %c0_112 = arith.constant 0 : index
    %89 = tpu.strided_load %arg8[%c10, %c0_112] {strides = array<i32: 2, 1>} : memref<128x32xf32, #tpu.memory_space<vmem>>, vector<3x32xf32>
    %c0_113 = arith.constant 0 : index
    %c192 = arith.constant 192 : index
    %90 = vector.load %arg9[%c0_113, %c192] : memref<18x512xf32, #tpu.memory_space<vmem>>, vector<3x32xf32>
    tpu.vector_store %arg9[%c0_113, %c192], %89 {strides = array<i32>} : memref<18x512xf32, #tpu.memory_space<vmem>>, vector<3x32xf32>,
    %c26 = arith.constant 26 : index
    %c0_114 = arith.constant 0 : index
    %91 = tpu.strided_load %arg8[%c26, %c0_114] {strides = array<i32: 2, 1>} : memref<128x32xf32, #tpu.memory_space<vmem>>, vector<3x32xf32>
    %c3_115 = arith.constant 3 : index
    %c192_116 = arith.constant 192 : index
    %92 = vector.load %arg9[%c3_115, %c192_116] : memref<18x512xf32, #tpu.memory_space<vmem>>, vector<3x32xf32>
    tpu.vector_store %arg9[%c3_115, %c192_116], %91 {strides = array<i32>} : memref<18x512xf32, #tpu.memory_space<vmem>>, vector<3x32xf32>,
    %c42 = arith.constant 42 : index
    %c0_117 = arith.constant 0 : index
    %93 = tpu.strided_load %arg8[%c42, %c0_117] {strides = array<i32: 2, 1>} : memref<128x32xf32, #tpu.memory_space<vmem>>, vector<3x32xf32>
    %c6_118 = arith.constant 6 : index
    %c192_119 = arith.constant 192 : index
    %94 = vector.load %arg9[%c6_118, %c192_119] : memref<18x512xf32, #tpu.memory_space<vmem>>, vector<3x32xf32>
    tpu.vector_store %arg9[%c6_118, %c192_119], %93 {strides = array<i32>} : memref<18x512xf32, #tpu.memory_space<vmem>>, vector<3x32xf32>,
    %c74 = arith.constant 74 : index
    %c0_120 = arith.constant 0 : index
    %95 = tpu.strided_load %arg8[%c74, %c0_120] {strides = array<i32: 2, 1>} : memref<128x32xf32, #tpu.memory_space<vmem>>, vector<3x32xf32>
    %c9_121 = arith.constant 9 : index
    %c192_122 = arith.constant 192 : index
    %96 = vector.load %arg9[%c9_121, %c192_122] : memref<18x512xf32, #tpu.memory_space<vmem>>, vector<3x32xf32>
    tpu.vector_store %arg9[%c9_121, %c192_122], %95 {strides = array<i32>} : memref<18x512xf32, #tpu.memory_space<vmem>>, vector<3x32xf32>,
    %c90 = arith.constant 90 : index
    %c0_123 = arith.constant 0 : index
    %97 = tpu.strided_load %arg8[%c90, %c0_123] {strides = array<i32: 2, 1>} : memref<128x32xf32, #tpu.memory_space<vmem>>, vector<3x32xf32>
    %c12_124 = arith.constant 12 : index
    %c192_125 = arith.constant 192 : index
    %98 = vector.load %arg9[%c12_124, %c192_125] : memref<18x512xf32, #tpu.memory_space<vmem>>, vector<3x32xf32>
    tpu.vector_store %arg9[%c12_124, %c192_125], %97 {strides = array<i32>} : memref<18x512xf32, #tpu.memory_space<vmem>>, vector<3x32xf32>,
    %c106 = arith.constant 106 : index
    %c0_126 = arith.constant 0 : index
    %99 = tpu.strided_load %arg8[%c106, %c0_126] {strides = array<i32: 2, 1>} : memref<128x32xf32, #tpu.memory_space<vmem>>, vector<3x32xf32>
    %c15_127 = arith.constant 15 : index
    %c192_128 = arith.constant 192 : index
    %100 = vector.load %arg9[%c15_127, %c192_128] : memref<18x512xf32, #tpu.memory_space<vmem>>, vector<3x32xf32>
    tpu.vector_store %arg9[%c15_127, %c192_128], %99 {strides = array<i32>} : memref<18x512xf32, #tpu.memory_space<vmem>>, vector<3x32xf32>,
    %c11 = arith.constant 11 : index
    %c0_129 = arith.constant 0 : index
    %101 = tpu.strided_load %arg8[%c11, %c0_129] {strides = array<i32: 2, 1>} : memref<128x32xf32, #tpu.memory_space<vmem>>, vector<3x32xf32>
    %c0_130 = arith.constant 0 : index
    %c224 = arith.constant 224 : index
    %102 = vector.load %arg9[%c0_130, %c224] : memref<18x512xf32, #tpu.memory_space<vmem>>, vector<3x32xf32>
    tpu.vector_store %arg9[%c0_130, %c224], %101 {strides = array<i32>} : memref<18x512xf32, #tpu.memory_space<vmem>>, vector<3x32xf32>,
    %c27 = arith.constant 27 : index
    %c0_131 = arith.constant 0 : index
    %103 = tpu.strided_load %arg8[%c27, %c0_131] {strides = array<i32: 2, 1>} : memref<128x32xf32, #tpu.memory_space<vmem>>, vector<3x32xf32>
    %c3_132 = arith.constant 3 : index
    %c224_133 = arith.constant 224 : index
    %104 = vector.load %arg9[%c3_132, %c224_133] : memref<18x512xf32, #tpu.memory_space<vmem>>, vector<3x32xf32>
    tpu.vector_store %arg9[%c3_132, %c224_133], %103 {strides = array<i32>} : memref<18x512xf32, #tpu.memory_space<vmem>>, vector<3x32xf32>,
    %c43 = arith.constant 43 : index
    %c0_134 = arith.constant 0 : index
    %105 = tpu.strided_load %arg8[%c43, %c0_134] {strides = array<i32: 2, 1>} : memref<128x32xf32, #tpu.memory_space<vmem>>, vector<3x32xf32>
    %c6_135 = arith.constant 6 : index
    %c224_136 = arith.constant 224 : index
    %106 = vector.load %arg9[%c6_135, %c224_136] : memref<18x512xf32, #tpu.memory_space<vmem>>, vector<3x32xf32>
    tpu.vector_store %arg9[%c6_135, %c224_136], %105 {strides = array<i32>} : memref<18x512xf32, #tpu.memory_space<vmem>>, vector<3x32xf32>,
    %c75 = arith.constant 75 : index
    %c0_137 = arith.constant 0 : index
    %107 = tpu.strided_load %arg8[%c75, %c0_137] {strides = array<i32: 2, 1>} : memref<128x32xf32, #tpu.memory_space<vmem>>, vector<3x32xf32>
    %c9_138 = arith.constant 9 : index
    %c224_139 = arith.constant 224 : index
    %108 = vector.load %arg9[%c9_138, %c224_139] : memref<18x512xf32, #tpu.memory_space<vmem>>, vector<3x32xf32>
    tpu.vector_store %arg9[%c9_138, %c224_139], %107 {strides = array<i32>} : memref<18x512xf32, #tpu.memory_space<vmem>>, vector<3x32xf32>,
    %c91 = arith.constant 91 : index
    %c0_140 = arith.constant 0 : index
    %109 = tpu.strided_load %arg8[%c91, %c0_140] {strides = array<i32: 2, 1>} : memref<128x32xf32, #tpu.memory_space<vmem>>, vector<3x32xf32>
    %c12_141 = arith.constant 12 : index
    %c224_142 = arith.constant 224 : index
    %110 = vector.load %arg9[%c12_141, %c224_142] : memref<18x512xf32, #tpu.memory_space<vmem>>, vector<3x32xf32>
    tpu.vector_store %arg9[%c12_141, %c224_142], %109 {strides = array<i32>} : memref<18x512xf32, #tpu.memory_space<vmem>>, vector<3x32xf32>,
    %c107 = arith.constant 107 : index
    %c0_143 = arith.constant 0 : index
    %111 = tpu.strided_load %arg8[%c107, %c0_143] {strides = array<i32: 2, 1>} : memref<128x32xf32, #tpu.memory_space<vmem>>, vector<3x32xf32>
    %c15_144 = arith.constant 15 : index
    %c224_145 = arith.constant 224 : index
    %112 = vector.load %arg9[%c15_144, %c224_145] : memref<18x512xf32, #tpu.memory_space<vmem>>, vector<3x32xf32>
    tpu.vector_store %arg9[%c15_144, %c224_145], %111 {strides = array<i32>} : memref<18x512xf32, #tpu.memory_space<vmem>>, vector<3x32xf32>,
    %c16_146 = arith.constant 16 : index
    %c0_147 = arith.constant 0 : index
    %113 = tpu.strided_load %arg8[%c16_146, %c0_147] {strides = array<i32: 2, 1>} : memref<128x32xf32, #tpu.memory_space<vmem>>, vector<3x32xf32>
    %c0_148 = arith.constant 0 : index
    %c256 = arith.constant 256 : index
    %114 = vector.load %arg9[%c0_148, %c256] : memref<18x512xf32, #tpu.memory_space<vmem>>, vector<3x32xf32>
    tpu.vector_store %arg9[%c0_148, %c256], %113 {strides = array<i32>} : memref<18x512xf32, #tpu.memory_space<vmem>>, vector<3x32xf32>,
    %c32_149 = arith.constant 32 : index
    %c0_150 = arith.constant 0 : index
    %115 = tpu.strided_load %arg8[%c32_149, %c0_150] {strides = array<i32: 2, 1>} : memref<128x32xf32, #tpu.memory_space<vmem>>, vector<3x32xf32>
    %c3_151 = arith.constant 3 : index
    %c256_152 = arith.constant 256 : index
    %116 = vector.load %arg9[%c3_151, %c256_152] : memref<18x512xf32, #tpu.memory_space<vmem>>, vector<3x32xf32>
    tpu.vector_store %arg9[%c3_151, %c256_152], %115 {strides = array<i32>} : memref<18x512xf32, #tpu.memory_space<vmem>>, vector<3x32xf32>,
    %c48 = arith.constant 48 : index
    %c0_153 = arith.constant 0 : index
    %117 = tpu.strided_load %arg8[%c48, %c0_153] {strides = array<i32: 2, 1>} : memref<128x32xf32, #tpu.memory_space<vmem>>, vector<3x32xf32>
    %c6_154 = arith.constant 6 : index
    %c256_155 = arith.constant 256 : index
    %118 = vector.load %arg9[%c6_154, %c256_155] : memref<18x512xf32, #tpu.memory_space<vmem>>, vector<3x32xf32>
    tpu.vector_store %arg9[%c6_154, %c256_155], %117 {strides = array<i32>} : memref<18x512xf32, #tpu.memory_space<vmem>>, vector<3x32xf32>,
    %c80_156 = arith.constant 80 : index
    %c0_157 = arith.constant 0 : index
    %119 = tpu.strided_load %arg8[%c80_156, %c0_157] {strides = array<i32: 2, 1>} : memref<128x32xf32, #tpu.memory_space<vmem>>, vector<3x32xf32>
    %c9_158 = arith.constant 9 : index
    %c256_159 = arith.constant 256 : index
    %120 = vector.load %arg9[%c9_158, %c256_159] : memref<18x512xf32, #tpu.memory_space<vmem>>, vector<3x32xf32>
    tpu.vector_store %arg9[%c9_158, %c256_159], %119 {strides = array<i32>} : memref<18x512xf32, #tpu.memory_space<vmem>>, vector<3x32xf32>,
    %c96_160 = arith.constant 96 : index
    %c0_161 = arith.constant 0 : index
    %121 = tpu.strided_load %arg8[%c96_160, %c0_161] {strides = array<i32: 2, 1>} : memref<128x32xf32, #tpu.memory_space<vmem>>, vector<3x32xf32>
    %c12_162 = arith.constant 12 : index
    %c256_163 = arith.constant 256 : index
    %122 = vector.load %arg9[%c12_162, %c256_163] : memref<18x512xf32, #tpu.memory_space<vmem>>, vector<3x32xf32>
    tpu.vector_store %arg9[%c12_162, %c256_163], %121 {strides = array<i32>} : memref<18x512xf32, #tpu.memory_space<vmem>>, vector<3x32xf32>,
    %c112 = arith.constant 112 : index
    %c0_164 = arith.constant 0 : index
    %123 = tpu.strided_load %arg8[%c112, %c0_164] {strides = array<i32: 2, 1>} : memref<128x32xf32, #tpu.memory_space<vmem>>, vector<3x32xf32>
    %c15_165 = arith.constant 15 : index
    %c256_166 = arith.constant 256 : index
    %124 = vector.load %arg9[%c15_165, %c256_166] : memref<18x512xf32, #tpu.memory_space<vmem>>, vector<3x32xf32>
    tpu.vector_store %arg9[%c15_165, %c256_166], %123 {strides = array<i32>} : memref<18x512xf32, #tpu.memory_space<vmem>>, vector<3x32xf32>,
    %c17_167 = arith.constant 17 : index
    %c0_168 = arith.constant 0 : index
    %125 = tpu.strided_load %arg8[%c17_167, %c0_168] {strides = array<i32: 2, 1>} : memref<128x32xf32, #tpu.memory_space<vmem>>, vector<3x32xf32>
    %c0_169 = arith.constant 0 : index
    %c288 = arith.constant 288 : index
    %126 = vector.load %arg9[%c0_169, %c288] : memref<18x512xf32, #tpu.memory_space<vmem>>, vector<3x32xf32>
    tpu.vector_store %arg9[%c0_169, %c288], %125 {strides = array<i32>} : memref<18x512xf32, #tpu.memory_space<vmem>>, vector<3x32xf32>,
    %c33_170 = arith.constant 33 : index
    %c0_171 = arith.constant 0 : index
    %127 = tpu.strided_load %arg8[%c33_170, %c0_171] {strides = array<i32: 2, 1>} : memref<128x32xf32, #tpu.memory_space<vmem>>, vector<3x32xf32>
    %c3_172 = arith.constant 3 : index
    %c288_173 = arith.constant 288 : index
    %128 = vector.load %arg9[%c3_172, %c288_173] : memref<18x512xf32, #tpu.memory_space<vmem>>, vector<3x32xf32>
    tpu.vector_store %arg9[%c3_172, %c288_173], %127 {strides = array<i32>} : memref<18x512xf32, #tpu.memory_space<vmem>>, vector<3x32xf32>,
    %c49 = arith.constant 49 : index
    %c0_174 = arith.constant 0 : index
    %129 = tpu.strided_load %arg8[%c49, %c0_174] {strides = array<i32: 2, 1>} : memref<128x32xf32, #tpu.memory_space<vmem>>, vector<3x32xf32>
    %c6_175 = arith.constant 6 : index
    %c288_176 = arith.constant 288 : index
    %130 = vector.load %arg9[%c6_175, %c288_176] : memref<18x512xf32, #tpu.memory_space<vmem>>, vector<3x32xf32>
    tpu.vector_store %arg9[%c6_175, %c288_176], %129 {strides = array<i32>} : memref<18x512xf32, #tpu.memory_space<vmem>>, vector<3x32xf32>,
    %c81_177 = arith.constant 81 : index
    %c0_178 = arith.constant 0 : index
    %131 = tpu.strided_load %arg8[%c81_177, %c0_178] {strides = array<i32: 2, 1>} : memref<128x32xf32, #tpu.memory_space<vmem>>, vector<3x32xf32>
    %c9_179 = arith.constant 9 : index
    %c288_180 = arith.constant 288 : index
    %132 = vector.load %arg9[%c9_179, %c288_180] : memref<18x512xf32, #tpu.memory_space<vmem>>, vector<3x32xf32>
    tpu.vector_store %arg9[%c9_179, %c288_180], %131 {strides = array<i32>} : memref<18x512xf32, #tpu.memory_space<vmem>>, vector<3x32xf32>,
    %c97_181 = arith.constant 97 : index
    %c0_182 = arith.constant 0 : index
    %133 = tpu.strided_load %arg8[%c97_181, %c0_182] {strides = array<i32: 2, 1>} : memref<128x32xf32, #tpu.memory_space<vmem>>, vector<3x32xf32>
    %c12_183 = arith.constant 12 : index
    %c288_184 = arith.constant 288 : index
    %134 = vector.load %arg9[%c12_183, %c288_184] : memref<18x512xf32, #tpu.memory_space<vmem>>, vector<3x32xf32>
    tpu.vector_store %arg9[%c12_183, %c288_184], %133 {strides = array<i32>} : memref<18x512xf32, #tpu.memory_space<vmem>>, vector<3x32xf32>,
    %c113 = arith.constant 113 : index
    %c0_185 = arith.constant 0 : index
    %135 = tpu.strided_load %arg8[%c113, %c0_185] {strides = array<i32: 2, 1>} : memref<128x32xf32, #tpu.memory_space<vmem>>, vector<3x32xf32>
    %c15_186 = arith.constant 15 : index
    %c288_187 = arith.constant 288 : index
    %136 = vector.load %arg9[%c15_186, %c288_187] : memref<18x512xf32, #tpu.memory_space<vmem>>, vector<3x32xf32>
    tpu.vector_store %arg9[%c15_186, %c288_187], %135 {strides = array<i32>} : memref<18x512xf32, #tpu.memory_space<vmem>>, vector<3x32xf32>,
    %c18_188 = arith.constant 18 : index
    %c0_189 = arith.constant 0 : index
    %137 = tpu.strided_load %arg8[%c18_188, %c0_189] {strides = array<i32: 2, 1>} : memref<128x32xf32, #tpu.memory_space<vmem>>, vector<3x32xf32>
    %c0_190 = arith.constant 0 : index
    %c320 = arith.constant 320 : index
    %138 = vector.load %arg9[%c0_190, %c320] : memref<18x512xf32, #tpu.memory_space<vmem>>, vector<3x32xf32>
    tpu.vector_store %arg9[%c0_190, %c320], %137 {strides = array<i32>} : memref<18x512xf32, #tpu.memory_space<vmem>>, vector<3x32xf32>,
    %c34_191 = arith.constant 34 : index
    %c0_192 = arith.constant 0 : index
    %139 = tpu.strided_load %arg8[%c34_191, %c0_192] {strides = array<i32: 2, 1>} : memref<128x32xf32, #tpu.memory_space<vmem>>, vector<3x32xf32>
    %c3_193 = arith.constant 3 : index
    %c320_194 = arith.constant 320 : index
    %140 = vector.load %arg9[%c3_193, %c320_194] : memref<18x512xf32, #tpu.memory_space<vmem>>, vector<3x32xf32>
    tpu.vector_store %arg9[%c3_193, %c320_194], %139 {strides = array<i32>} : memref<18x512xf32, #tpu.memory_space<vmem>>, vector<3x32xf32>,
    %c50 = arith.constant 50 : index
    %c0_195 = arith.constant 0 : index
    %141 = tpu.strided_load %arg8[%c50, %c0_195] {strides = array<i32: 2, 1>} : memref<128x32xf32, #tpu.memory_space<vmem>>, vector<3x32xf32>
    %c6_196 = arith.constant 6 : index
    %c320_197 = arith.constant 320 : index
    %142 = vector.load %arg9[%c6_196, %c320_197] : memref<18x512xf32, #tpu.memory_space<vmem>>, vector<3x32xf32>
    tpu.vector_store %arg9[%c6_196, %c320_197], %141 {strides = array<i32>} : memref<18x512xf32, #tpu.memory_space<vmem>>, vector<3x32xf32>,
    %c82_198 = arith.constant 82 : index
    %c0_199 = arith.constant 0 : index
    %143 = tpu.strided_load %arg8[%c82_198, %c0_199] {strides = array<i32: 2, 1>} : memref<128x32xf32, #tpu.memory_space<vmem>>, vector<3x32xf32>
    %c9_200 = arith.constant 9 : index
    %c320_201 = arith.constant 320 : index
    %144 = vector.load %arg9[%c9_200, %c320_201] : memref<18x512xf32, #tpu.memory_space<vmem>>, vector<3x32xf32>
    tpu.vector_store %arg9[%c9_200, %c320_201], %143 {strides = array<i32>} : memref<18x512xf32, #tpu.memory_space<vmem>>, vector<3x32xf32>,
    %c98_202 = arith.constant 98 : index
    %c0_203 = arith.constant 0 : index
    %145 = tpu.strided_load %arg8[%c98_202, %c0_203] {strides = array<i32: 2, 1>} : memref<128x32xf32, #tpu.memory_space<vmem>>, vector<3x32xf32>
    %c12_204 = arith.constant 12 : index
    %c320_205 = arith.constant 320 : index
    %146 = vector.load %arg9[%c12_204, %c320_205] : memref<18x512xf32, #tpu.memory_space<vmem>>, vector<3x32xf32>
    tpu.vector_store %arg9[%c12_204, %c320_205], %145 {strides = array<i32>} : memref<18x512xf32, #tpu.memory_space<vmem>>, vector<3x32xf32>,
    %c114 = arith.constant 114 : index
    %c0_206 = arith.constant 0 : index
    %147 = tpu.strided_load %arg8[%c114, %c0_206] {strides = array<i32: 2, 1>} : memref<128x32xf32, #tpu.memory_space<vmem>>, vector<3x32xf32>
    %c15_207 = arith.constant 15 : index
    %c320_208 = arith.constant 320 : index
    %148 = vector.load %arg9[%c15_207, %c320_208] : memref<18x512xf32, #tpu.memory_space<vmem>>, vector<3x32xf32>
    tpu.vector_store %arg9[%c15_207, %c320_208], %147 {strides = array<i32>} : memref<18x512xf32, #tpu.memory_space<vmem>>, vector<3x32xf32>,
    %c19_209 = arith.constant 19 : index
    %c0_210 = arith.constant 0 : index
    %149 = tpu.strided_load %arg8[%c19_209, %c0_210] {strides = array<i32: 2, 1>} : memref<128x32xf32, #tpu.memory_space<vmem>>, vector<3x32xf32>
    %c0_211 = arith.constant 0 : index
    %c352 = arith.constant 352 : index
    %150 = vector.load %arg9[%c0_211, %c352] : memref<18x512xf32, #tpu.memory_space<vmem>>, vector<3x32xf32>
    tpu.vector_store %arg9[%c0_211, %c352], %149 {strides = array<i32>} : memref<18x512xf32, #tpu.memory_space<vmem>>, vector<3x32xf32>,
    %c35_212 = arith.constant 35 : index
    %c0_213 = arith.constant 0 : index
    %151 = tpu.strided_load %arg8[%c35_212, %c0_213] {strides = array<i32: 2, 1>} : memref<128x32xf32, #tpu.memory_space<vmem>>, vector<3x32xf32>
    %c3_214 = arith.constant 3 : index
    %c352_215 = arith.constant 352 : index
    %152 = vector.load %arg9[%c3_214, %c352_215] : memref<18x512xf32, #tpu.memory_space<vmem>>, vector<3x32xf32>
    tpu.vector_store %arg9[%c3_214, %c352_215], %151 {strides = array<i32>} : memref<18x512xf32, #tpu.memory_space<vmem>>, vector<3x32xf32>,
    %c51 = arith.constant 51 : index
    %c0_216 = arith.constant 0 : index
    %153 = tpu.strided_load %arg8[%c51, %c0_216] {strides = array<i32: 2, 1>} : memref<128x32xf32, #tpu.memory_space<vmem>>, vector<3x32xf32>
    %c6_217 = arith.constant 6 : index
    %c352_218 = arith.constant 352 : index
    %154 = vector.load %arg9[%c6_217, %c352_218] : memref<18x512xf32, #tpu.memory_space<vmem>>, vector<3x32xf32>
    tpu.vector_store %arg9[%c6_217, %c352_218], %153 {strides = array<i32>} : memref<18x512xf32, #tpu.memory_space<vmem>>, vector<3x32xf32>,
    %c83_219 = arith.constant 83 : index
    %c0_220 = arith.constant 0 : index
    %155 = tpu.strided_load %arg8[%c83_219, %c0_220] {strides = array<i32: 2, 1>} : memref<128x32xf32, #tpu.memory_space<vmem>>, vector<3x32xf32>
    %c9_221 = arith.constant 9 : index
    %c352_222 = arith.constant 352 : index
    %156 = vector.load %arg9[%c9_221, %c352_222] : memref<18x512xf32, #tpu.memory_space<vmem>>, vector<3x32xf32>
    tpu.vector_store %arg9[%c9_221, %c352_222], %155 {strides = array<i32>} : memref<18x512xf32, #tpu.memory_space<vmem>>, vector<3x32xf32>,
    %c99_223 = arith.constant 99 : index
    %c0_224 = arith.constant 0 : index
    %157 = tpu.strided_load %arg8[%c99_223, %c0_224] {strides = array<i32: 2, 1>} : memref<128x32xf32, #tpu.memory_space<vmem>>, vector<3x32xf32>
    %c12_225 = arith.constant 12 : index
    %c352_226 = arith.constant 352 : index
    %158 = vector.load %arg9[%c12_225, %c352_226] : memref<18x512xf32, #tpu.memory_space<vmem>>, vector<3x32xf32>
    tpu.vector_store %arg9[%c12_225, %c352_226], %157 {strides = array<i32>} : memref<18x512xf32, #tpu.memory_space<vmem>>, vector<3x32xf32>,
    %c115 = arith.constant 115 : index
    %c0_227 = arith.constant 0 : index
    %159 = tpu.strided_load %arg8[%c115, %c0_227] {strides = array<i32: 2, 1>} : memref<128x32xf32, #tpu.memory_space<vmem>>, vector<3x32xf32>
    %c15_228 = arith.constant 15 : index
    %c352_229 = arith.constant 352 : index
    %160 = vector.load %arg9[%c15_228, %c352_229] : memref<18x512xf32, #tpu.memory_space<vmem>>, vector<3x32xf32>
    tpu.vector_store %arg9[%c15_228, %c352_229], %159 {strides = array<i32>} : memref<18x512xf32, #tpu.memory_space<vmem>>, vector<3x32xf32>,
    %c24_230 = arith.constant 24 : index
    %c0_231 = arith.constant 0 : index
    %161 = tpu.strided_load %arg8[%c24_230, %c0_231] {strides = array<i32: 2, 1>} : memref<128x32xf32, #tpu.memory_space<vmem>>, vector<3x32xf32>
    %c0_232 = arith.constant 0 : index
    %c384 = arith.constant 384 : index
    %162 = vector.load %arg9[%c0_232, %c384] : memref<18x512xf32, #tpu.memory_space<vmem>>, vector<3x32xf32>
    tpu.vector_store %arg9[%c0_232, %c384], %161 {strides = array<i32>} : memref<18x512xf32, #tpu.memory_space<vmem>>, vector<3x32xf32>,
    %c40_233 = arith.constant 40 : index
    %c0_234 = arith.constant 0 : index
    %163 = tpu.strided_load %arg8[%c40_233, %c0_234] {strides = array<i32: 2, 1>} : memref<128x32xf32, #tpu.memory_space<vmem>>, vector<3x32xf32>
    %c3_235 = arith.constant 3 : index
    %c384_236 = arith.constant 384 : index
    %164 = vector.load %arg9[%c3_235, %c384_236] : memref<18x512xf32, #tpu.memory_space<vmem>>, vector<3x32xf32>
    tpu.vector_store %arg9[%c3_235, %c384_236], %163 {strides = array<i32>} : memref<18x512xf32, #tpu.memory_space<vmem>>, vector<3x32xf32>,
    %c56 = arith.constant 56 : index
    %c0_237 = arith.constant 0 : index
    %165 = tpu.strided_load %arg8[%c56, %c0_237] {strides = array<i32: 2, 1>} : memref<128x32xf32, #tpu.memory_space<vmem>>, vector<3x32xf32>
    %c6_238 = arith.constant 6 : index
    %c384_239 = arith.constant 384 : index
    %166 = vector.load %arg9[%c6_238, %c384_239] : memref<18x512xf32, #tpu.memory_space<vmem>>, vector<3x32xf32>
    tpu.vector_store %arg9[%c6_238, %c384_239], %165 {strides = array<i32>} : memref<18x512xf32, #tpu.memory_space<vmem>>, vector<3x32xf32>,
    %c88_240 = arith.constant 88 : index
    %c0_241 = arith.constant 0 : index
    %167 = tpu.strided_load %arg8[%c88_240, %c0_241] {strides = array<i32: 2, 1>} : memref<128x32xf32, #tpu.memory_space<vmem>>, vector<3x32xf32>
    %c9_242 = arith.constant 9 : index
    %c384_243 = arith.constant 384 : index
    %168 = vector.load %arg9[%c9_242, %c384_243] : memref<18x512xf32, #tpu.memory_space<vmem>>, vector<3x32xf32>
    tpu.vector_store %arg9[%c9_242, %c384_243], %167 {strides = array<i32>} : memref<18x512xf32, #tpu.memory_space<vmem>>, vector<3x32xf32>,
    %c104_244 = arith.constant 104 : index
    %c0_245 = arith.constant 0 : index
    %169 = tpu.strided_load %arg8[%c104_244, %c0_245] {strides = array<i32: 2, 1>} : memref<128x32xf32, #tpu.memory_space<vmem>>, vector<3x32xf32>
    %c12_246 = arith.constant 12 : index
    %c384_247 = arith.constant 384 : index
    %170 = vector.load %arg9[%c12_246, %c384_247] : memref<18x512xf32, #tpu.memory_space<vmem>>, vector<3x32xf32>
    tpu.vector_store %arg9[%c12_246, %c384_247], %169 {strides = array<i32>} : memref<18x512xf32, #tpu.memory_space<vmem>>, vector<3x32xf32>,
    %c120 = arith.constant 120 : index
    %c0_248 = arith.constant 0 : index
    %171 = tpu.strided_load %arg8[%c120, %c0_248] {strides = array<i32: 2, 1>} : memref<128x32xf32, #tpu.memory_space<vmem>>, vector<3x32xf32>
    %c15_249 = arith.constant 15 : index
    %c384_250 = arith.constant 384 : index
    %172 = vector.load %arg9[%c15_249, %c384_250] : memref<18x512xf32, #tpu.memory_space<vmem>>, vector<3x32xf32>
    tpu.vector_store %arg9[%c15_249, %c384_250], %171 {strides = array<i32>} : memref<18x512xf32, #tpu.memory_space<vmem>>, vector<3x32xf32>,
    %c25_251 = arith.constant 25 : index
    %c0_252 = arith.constant 0 : index
    %173 = tpu.strided_load %arg8[%c25_251, %c0_252] {strides = array<i32: 2, 1>} : memref<128x32xf32, #tpu.memory_space<vmem>>, vector<3x32xf32>
    %c0_253 = arith.constant 0 : index
    %c416 = arith.constant 416 : index
    %174 = vector.load %arg9[%c0_253, %c416] : memref<18x512xf32, #tpu.memory_space<vmem>>, vector<3x32xf32>
    tpu.vector_store %arg9[%c0_253, %c416], %173 {strides = array<i32>} : memref<18x512xf32, #tpu.memory_space<vmem>>, vector<3x32xf32>,
    %c41_254 = arith.constant 41 : index
    %c0_255 = arith.constant 0 : index
    %175 = tpu.strided_load %arg8[%c41_254, %c0_255] {strides = array<i32: 2, 1>} : memref<128x32xf32, #tpu.memory_space<vmem>>, vector<3x32xf32>
    %c3_256 = arith.constant 3 : index
    %c416_257 = arith.constant 416 : index
    %176 = vector.load %arg9[%c3_256, %c416_257] : memref<18x512xf32, #tpu.memory_space<vmem>>, vector<3x32xf32>
    tpu.vector_store %arg9[%c3_256, %c416_257], %175 {strides = array<i32>} : memref<18x512xf32, #tpu.memory_space<vmem>>, vector<3x32xf32>,
    %c57 = arith.constant 57 : index
    %c0_258 = arith.constant 0 : index
    %177 = tpu.strided_load %arg8[%c57, %c0_258] {strides = array<i32: 2, 1>} : memref<128x32xf32, #tpu.memory_space<vmem>>, vector<3x32xf32>
    %c6_259 = arith.constant 6 : index
    %c416_260 = arith.constant 416 : index
    %178 = vector.load %arg9[%c6_259, %c416_260] : memref<18x512xf32, #tpu.memory_space<vmem>>, vector<3x32xf32>
    tpu.vector_store %arg9[%c6_259, %c416_260], %177 {strides = array<i32>} : memref<18x512xf32, #tpu.memory_space<vmem>>, vector<3x32xf32>,
    %c89_261 = arith.constant 89 : index
    %c0_262 = arith.constant 0 : index
    %179 = tpu.strided_load %arg8[%c89_261, %c0_262] {strides = array<i32: 2, 1>} : memref<128x32xf32, #tpu.memory_space<vmem>>, vector<3x32xf32>
    %c9_263 = arith.constant 9 : index
    %c416_264 = arith.constant 416 : index
    %180 = vector.load %arg9[%c9_263, %c416_264] : memref<18x512xf32, #tpu.memory_space<vmem>>, vector<3x32xf32>
    tpu.vector_store %arg9[%c9_263, %c416_264], %179 {strides = array<i32>} : memref<18x512xf32, #tpu.memory_space<vmem>>, vector<3x32xf32>,
    %c105_265 = arith.constant 105 : index
    %c0_266 = arith.constant 0 : index
    %181 = tpu.strided_load %arg8[%c105_265, %c0_266] {strides = array<i32: 2, 1>} : memref<128x32xf32, #tpu.memory_space<vmem>>, vector<3x32xf32>
    %c12_267 = arith.constant 12 : index
    %c416_268 = arith.constant 416 : index
    %182 = vector.load %arg9[%c12_267, %c416_268] : memref<18x512xf32, #tpu.memory_space<vmem>>, vector<3x32xf32>
    tpu.vector_store %arg9[%c12_267, %c416_268], %181 {strides = array<i32>} : memref<18x512xf32, #tpu.memory_space<vmem>>, vector<3x32xf32>,
    %c121 = arith.constant 121 : index
    %c0_269 = arith.constant 0 : index
    %183 = tpu.strided_load %arg8[%c121, %c0_269] {strides = array<i32: 2, 1>} : memref<128x32xf32, #tpu.memory_space<vmem>>, vector<3x32xf32>
    %c15_270 = arith.constant 15 : index
    %c416_271 = arith.constant 416 : index
    %184 = vector.load %arg9[%c15_270, %c416_271] : memref<18x512xf32, #tpu.memory_space<vmem>>, vector<3x32xf32>
    tpu.vector_store %arg9[%c15_270, %c416_271], %183 {strides = array<i32>} : memref<18x512xf32, #tpu.memory_space<vmem>>, vector<3x32xf32>,
    %c26_272 = arith.constant 26 : index
    %c0_273 = arith.constant 0 : index
    %185 = tpu.strided_load %arg8[%c26_272, %c0_273] {strides = array<i32: 2, 1>} : memref<128x32xf32, #tpu.memory_space<vmem>>, vector<3x32xf32>
    %c0_274 = arith.constant 0 : index
    %c448 = arith.constant 448 : index
    %186 = vector.load %arg9[%c0_274, %c448] : memref<18x512xf32, #tpu.memory_space<vmem>>, vector<3x32xf32>
    tpu.vector_store %arg9[%c0_274, %c448], %185 {strides = array<i32>} : memref<18x512xf32, #tpu.memory_space<vmem>>, vector<3x32xf32>,
    %c42_275 = arith.constant 42 : index
    %c0_276 = arith.constant 0 : index
    %187 = tpu.strided_load %arg8[%c42_275, %c0_276] {strides = array<i32: 2, 1>} : memref<128x32xf32, #tpu.memory_space<vmem>>, vector<3x32xf32>
    %c3_277 = arith.constant 3 : index
    %c448_278 = arith.constant 448 : index
    %188 = vector.load %arg9[%c3_277, %c448_278] : memref<18x512xf32, #tpu.memory_space<vmem>>, vector<3x32xf32>
    tpu.vector_store %arg9[%c3_277, %c448_278], %187 {strides = array<i32>} : memref<18x512xf32, #tpu.memory_space<vmem>>, vector<3x32xf32>,
    %c58 = arith.constant 58 : index
    %c0_279 = arith.constant 0 : index
    %189 = tpu.strided_load %arg8[%c58, %c0_279] {strides = array<i32: 2, 1>} : memref<128x32xf32, #tpu.memory_space<vmem>>, vector<3x32xf32>
    %c6_280 = arith.constant 6 : index
    %c448_281 = arith.constant 448 : index
    %190 = vector.load %arg9[%c6_280, %c448_281] : memref<18x512xf32, #tpu.memory_space<vmem>>, vector<3x32xf32>
    tpu.vector_store %arg9[%c6_280, %c448_281], %189 {strides = array<i32>} : memref<18x512xf32, #tpu.memory_space<vmem>>, vector<3x32xf32>,
    %c90_282 = arith.constant 90 : index
    %c0_283 = arith.constant 0 : index
    %191 = tpu.strided_load %arg8[%c90_282, %c0_283] {strides = array<i32: 2, 1>} : memref<128x32xf32, #tpu.memory_space<vmem>>, vector<3x32xf32>
    %c9_284 = arith.constant 9 : index
    %c448_285 = arith.constant 448 : index
    %192 = vector.load %arg9[%c9_284, %c448_285] : memref<18x512xf32, #tpu.memory_space<vmem>>, vector<3x32xf32>
    tpu.vector_store %arg9[%c9_284, %c448_285], %191 {strides = array<i32>} : memref<18x512xf32, #tpu.memory_space<vmem>>, vector<3x32xf32>,
    %c106_286 = arith.constant 106 : index
    %c0_287 = arith.constant 0 : index
    %193 = tpu.strided_load %arg8[%c106_286, %c0_287] {strides = array<i32: 2, 1>} : memref<128x32xf32, #tpu.memory_space<vmem>>, vector<3x32xf32>
    %c12_288 = arith.constant 12 : index
    %c448_289 = arith.constant 448 : index
    %194 = vector.load %arg9[%c12_288, %c448_289] : memref<18x512xf32, #tpu.memory_space<vmem>>, vector<3x32xf32>
    tpu.vector_store %arg9[%c12_288, %c448_289], %193 {strides = array<i32>} : memref<18x512xf32, #tpu.memory_space<vmem>>, vector<3x32xf32>,
    %c122 = arith.constant 122 : index
    %c0_290 = arith.constant 0 : index
    %195 = tpu.strided_load %arg8[%c122, %c0_290] {strides = array<i32: 2, 1>} : memref<128x32xf32, #tpu.memory_space<vmem>>, vector<3x32xf32>
    %c15_291 = arith.constant 15 : index
    %c448_292 = arith.constant 448 : index
    %196 = vector.load %arg9[%c15_291, %c448_292] : memref<18x512xf32, #tpu.memory_space<vmem>>, vector<3x32xf32>
    tpu.vector_store %arg9[%c15_291, %c448_292], %195 {strides = array<i32>} : memref<18x512xf32, #tpu.memory_space<vmem>>, vector<3x32xf32>,
    %c27_293 = arith.constant 27 : index
    %c0_294 = arith.constant 0 : index
    %197 = tpu.strided_load %arg8[%c27_293, %c0_294] {strides = array<i32: 2, 1>} : memref<128x32xf32, #tpu.memory_space<vmem>>, vector<3x32xf32>
    %c0_295 = arith.constant 0 : index
    %c480 = arith.constant 480 : index
    %198 = vector.load %arg9[%c0_295, %c480] : memref<18x512xf32, #tpu.memory_space<vmem>>, vector<3x32xf32>
    tpu.vector_store %arg9[%c0_295, %c480], %197 {strides = array<i32>} : memref<18x512xf32, #tpu.memory_space<vmem>>, vector<3x32xf32>,
    %c43_296 = arith.constant 43 : index
    %c0_297 = arith.constant 0 : index
    %199 = tpu.strided_load %arg8[%c43_296, %c0_297] {strides = array<i32: 2, 1>} : memref<128x32xf32, #tpu.memory_space<vmem>>, vector<3x32xf32>
    %c3_298 = arith.constant 3 : index
    %c480_299 = arith.constant 480 : index
    %200 = vector.load %arg9[%c3_298, %c480_299] : memref<18x512xf32, #tpu.memory_space<vmem>>, vector<3x32xf32>
    tpu.vector_store %arg9[%c3_298, %c480_299], %199 {strides = array<i32>} : memref<18x512xf32, #tpu.memory_space<vmem>>, vector<3x32xf32>,
    %c59 = arith.constant 59 : index
    %c0_300 = arith.constant 0 : index
    %201 = tpu.strided_load %arg8[%c59, %c0_300] {strides = array<i32: 2, 1>} : memref<128x32xf32, #tpu.memory_space<vmem>>, vector<3x32xf32>
    %c6_301 = arith.constant 6 : index
    %c480_302 = arith.constant 480 : index
    %202 = vector.load %arg9[%c6_301, %c480_302] : memref<18x512xf32, #tpu.memory_space<vmem>>, vector<3x32xf32>
    tpu.vector_store %arg9[%c6_301, %c480_302], %201 {strides = array<i32>} : memref<18x512xf32, #tpu.memory_space<vmem>>, vector<3x32xf32>,
    %c91_303 = arith.constant 91 : index
    %c0_304 = arith.constant 0 : index
    %203 = tpu.strided_load %arg8[%c91_303, %c0_304] {strides = array<i32: 2, 1>} : memref<128x32xf32, #tpu.memory_space<vmem>>, vector<3x32xf32>
    %c9_305 = arith.constant 9 : index
    %c480_306 = arith.constant 480 : index
    %204 = vector.load %arg9[%c9_305, %c480_306] : memref<18x512xf32, #tpu.memory_space<vmem>>, vector<3x32xf32>
    tpu.vector_store %arg9[%c9_305, %c480_306], %203 {strides = array<i32>} : memref<18x512xf32, #tpu.memory_space<vmem>>, vector<3x32xf32>,
    %c107_307 = arith.constant 107 : index
    %c0_308 = arith.constant 0 : index
    %205 = tpu.strided_load %arg8[%c107_307, %c0_308] {strides = array<i32: 2, 1>} : memref<128x32xf32, #tpu.memory_space<vmem>>, vector<3x32xf32>
    %c12_309 = arith.constant 12 : index
    %c480_310 = arith.constant 480 : index
    %206 = vector.load %arg9[%c12_309, %c480_310] : memref<18x512xf32, #tpu.memory_space<vmem>>, vector<3x32xf32>
    tpu.vector_store %arg9[%c12_309, %c480_310], %205 {strides = array<i32>} : memref<18x512xf32, #tpu.memory_space<vmem>>, vector<3x32xf32>,
    %c123 = arith.constant 123 : index
    %c0_311 = arith.constant 0 : index
    %207 = tpu.strided_load %arg8[%c123, %c0_311] {strides = array<i32: 2, 1>} : memref<128x32xf32, #tpu.memory_space<vmem>>, vector<3x32xf32>
    %c15_312 = arith.constant 15 : index
    %c480_313 = arith.constant 480 : index
    %208 = vector.load %arg9[%c15_312, %c480_313] : memref<18x512xf32, #tpu.memory_space<vmem>>, vector<3x32xf32>
    tpu.vector_store %arg9[%c15_312, %c480_313], %207 {strides = array<i32>} : memref<18x512xf32, #tpu.memory_space<vmem>>, vector<3x32xf32>,
    %c0_i32_314 = arith.constant 0 : i32
    %209 = tpu.memref_slice %arg17[%c0_i32_314] : memref<4x!tpu.dma_semaphore, #tpu.memory_space<semaphore_mem>> -> memref<1x!tpu.dma_semaphore, #tpu.memory_space<semaphore_mem>>
    %210 = tpu.memref_squeeze %209 : memref<1x!tpu.dma_semaphore, #tpu.memory_space<semaphore_mem>> -> memref<!tpu.dma_semaphore, #tpu.memory_space<semaphore_mem>>
    tpu.wait_dma2 semaphore(%210 : memref<!tpu.dma_semaphore, #tpu.memory_space<semaphore_mem>>) src(%arg3 : memref<512x64xbf16, #tpu.memory_space<any>>) dst(%arg13 : memref<512x64xbf16, #tpu.memory_space<vmem>>)
    %c0_315 = arith.constant 0 : index
    %c0_316 = arith.constant 0 : index
    %211 = vector.load %arg9[%c0_315, %c0_316] : memref<18x512xf32, #tpu.memory_space<vmem>>, vector<18x512xf32>
    %212 = arith.truncf %211 : vector<18x512xf32> to vector<18x512xbf16>
    %c0_317 = arith.constant 0 : index
    %c0_318 = arith.constant 0 : index
    %213 = vector.load %arg13[%c0_317, %c0_318] : memref<512x64xbf16, #tpu.memory_space<vmem>>, vector<512x64xbf16>
    %cst_319 = arith.constant dense<0.000000e+00> : vector<18x64xf32>
    %214 = tpu.matmul %212, %213, %cst_319 {dimension_numbers = #tpu.dot_dimension_numbers<[1], [0], [0], [1], [0, 0, 1, 1], [], []>} : vector<18x512xbf16>, vector<512x64xbf16>, vector<18x64xf32> -> vector<18x64xf32>
    %c0_320 = arith.constant 0 : index
    %c128_321 = arith.constant 128 : index
    %215 = vector.load %arg2[%c0_320, %c128_321] : memref<1x1024xf32, #tpu.memory_space<vmem>>, vector<1x64xf32>
    %216 = vector.broadcast %215 : vector<1x64xf32> to vector<18x64xf32>
    %217 = arith.addf %214, %216 : vector<18x64xf32>
    %cst_322 = arith.constant 0.000000e+00 : f32
    %218 = vector.broadcast %cst_322 : f32 to vector<18x64xf32>
    %219 = arith.maximumf %217, %218 : vector<18x64xf32>
    %c0_323 = arith.constant 0 : index
    %c0_324 = arith.constant 0 : index
    %220 = vector.load %arg10[%c0_323, %c0_324] : memref<18x64xf32, #tpu.memory_space<vmem>>, vector<18x64xf32>
    tpu.vector_store %arg10[%c0_323, %c0_324], %219 {strides = array<i32>} : memref<18x64xf32, #tpu.memory_space<vmem>>, vector<18x64xf32>,
    %c0_325 = arith.constant 0 : index
    %c0_326 = arith.constant 0 : index
    %221 = vector.load %arg10[%c0_325, %c0_326] : memref<18x64xf32, #tpu.memory_space<vmem>>, vector<1x64xf32>
    %c0_327 = arith.constant 0 : index
    %c0_328 = arith.constant 0 : index
    %222 = vector.load %arg11[%c0_327, %c0_328] : memref<2x576xf32, #tpu.memory_space<vmem>>, vector<1x64xf32>
    tpu.vector_store %arg11[%c0_327, %c0_328], %221 {strides = array<i32>} : memref<2x576xf32, #tpu.memory_space<vmem>>, vector<1x64xf32>,
    %c9_329 = arith.constant 9 : index
    %c0_330 = arith.constant 0 : index
    %223 = vector.load %arg10[%c9_329, %c0_330] : memref<18x64xf32, #tpu.memory_space<vmem>>, vector<1x64xf32>
    %c1_331 = arith.constant 1 : index
    %c0_332 = arith.constant 0 : index
    %224 = vector.load %arg11[%c1_331, %c0_332] : memref<2x576xf32, #tpu.memory_space<vmem>>, vector<1x64xf32>
    tpu.vector_store %arg11[%c1_331, %c0_332], %223 {strides = array<i32>} : memref<2x576xf32, #tpu.memory_space<vmem>>, vector<1x64xf32>,
    %c1_333 = arith.constant 1 : index
    %c0_334 = arith.constant 0 : index
    %225 = vector.load %arg10[%c1_333, %c0_334] : memref<18x64xf32, #tpu.memory_space<vmem>>, vector<1x64xf32>
    %c0_335 = arith.constant 0 : index
    %c64_336 = arith.constant 64 : index
    %226 = vector.load %arg11[%c0_335, %c64_336] : memref<2x576xf32, #tpu.memory_space<vmem>>, vector<1x64xf32>
    tpu.vector_store %arg11[%c0_335, %c64_336], %225 {strides = array<i32>} : memref<2x576xf32, #tpu.memory_space<vmem>>, vector<1x64xf32>,
    %c10_337 = arith.constant 10 : index
    %c0_338 = arith.constant 0 : index
    %227 = vector.load %arg10[%c10_337, %c0_338] : memref<18x64xf32, #tpu.memory_space<vmem>>, vector<1x64xf32>
    %c1_339 = arith.constant 1 : index
    %c64_340 = arith.constant 64 : index
    %228 = vector.load %arg11[%c1_339, %c64_340] : memref<2x576xf32, #tpu.memory_space<vmem>>, vector<1x64xf32>
    tpu.vector_store %arg11[%c1_339, %c64_340], %227 {strides = array<i32>} : memref<2x576xf32, #tpu.memory_space<vmem>>, vector<1x64xf32>,
    %c2_341 = arith.constant 2 : index
    %c0_342 = arith.constant 0 : index
    %229 = vector.load %arg10[%c2_341, %c0_342] : memref<18x64xf32, #tpu.memory_space<vmem>>, vector<1x64xf32>
    %c0_343 = arith.constant 0 : index
    %c128_344 = arith.constant 128 : index
    %230 = vector.load %arg11[%c0_343, %c128_344] : memref<2x576xf32, #tpu.memory_space<vmem>>, vector<1x64xf32>
    tpu.vector_store %arg11[%c0_343, %c128_344], %229 {strides = array<i32>} : memref<2x576xf32, #tpu.memory_space<vmem>>, vector<1x64xf32>,
    %c11_345 = arith.constant 11 : index
    %c0_346 = arith.constant 0 : index
    %231 = vector.load %arg10[%c11_345, %c0_346] : memref<18x64xf32, #tpu.memory_space<vmem>>, vector<1x64xf32>
    %c1_347 = arith.constant 1 : index
    %c128_348 = arith.constant 128 : index
    %232 = vector.load %arg11[%c1_347, %c128_348] : memref<2x576xf32, #tpu.memory_space<vmem>>, vector<1x64xf32>
    tpu.vector_store %arg11[%c1_347, %c128_348], %231 {strides = array<i32>} : memref<2x576xf32, #tpu.memory_space<vmem>>, vector<1x64xf32>,
    %c3_349 = arith.constant 3 : index
    %c0_350 = arith.constant 0 : index
    %233 = vector.load %arg10[%c3_349, %c0_350] : memref<18x64xf32, #tpu.memory_space<vmem>>, vector<1x64xf32>
    %c0_351 = arith.constant 0 : index
    %c192_352 = arith.constant 192 : index
    %234 = vector.load %arg11[%c0_351, %c192_352] : memref<2x576xf32, #tpu.memory_space<vmem>>, vector<1x64xf32>
    tpu.vector_store %arg11[%c0_351, %c192_352], %233 {strides = array<i32>} : memref<2x576xf32, #tpu.memory_space<vmem>>, vector<1x64xf32>,
    %c12_353 = arith.constant 12 : index
    %c0_354 = arith.constant 0 : index
    %235 = vector.load %arg10[%c12_353, %c0_354] : memref<18x64xf32, #tpu.memory_space<vmem>>, vector<1x64xf32>
    %c1_355 = arith.constant 1 : index
    %c192_356 = arith.constant 192 : index
    %236 = vector.load %arg11[%c1_355, %c192_356] : memref<2x576xf32, #tpu.memory_space<vmem>>, vector<1x64xf32>
    tpu.vector_store %arg11[%c1_355, %c192_356], %235 {strides = array<i32>} : memref<2x576xf32, #tpu.memory_space<vmem>>, vector<1x64xf32>,
    %c4 = arith.constant 4 : index
    %c0_357 = arith.constant 0 : index
    %237 = vector.load %arg10[%c4, %c0_357] : memref<18x64xf32, #tpu.memory_space<vmem>>, vector<1x64xf32>
    %c0_358 = arith.constant 0 : index
    %c256_359 = arith.constant 256 : index
    %238 = vector.load %arg11[%c0_358, %c256_359] : memref<2x576xf32, #tpu.memory_space<vmem>>, vector<1x64xf32>
    tpu.vector_store %arg11[%c0_358, %c256_359], %237 {strides = array<i32>} : memref<2x576xf32, #tpu.memory_space<vmem>>, vector<1x64xf32>,
    %c13 = arith.constant 13 : index
    %c0_360 = arith.constant 0 : index
    %239 = vector.load %arg10[%c13, %c0_360] : memref<18x64xf32, #tpu.memory_space<vmem>>, vector<1x64xf32>
    %c1_361 = arith.constant 1 : index
    %c256_362 = arith.constant 256 : index
    %240 = vector.load %arg11[%c1_361, %c256_362] : memref<2x576xf32, #tpu.memory_space<vmem>>, vector<1x64xf32>
    tpu.vector_store %arg11[%c1_361, %c256_362], %239 {strides = array<i32>} : memref<2x576xf32, #tpu.memory_space<vmem>>, vector<1x64xf32>,
    %c5 = arith.constant 5 : index
    %c0_363 = arith.constant 0 : index
    %241 = vector.load %arg10[%c5, %c0_363] : memref<18x64xf32, #tpu.memory_space<vmem>>, vector<1x64xf32>
    %c0_364 = arith.constant 0 : index
    %c320_365 = arith.constant 320 : index
    %242 = vector.load %arg11[%c0_364, %c320_365] : memref<2x576xf32, #tpu.memory_space<vmem>>, vector<1x64xf32>
    tpu.vector_store %arg11[%c0_364, %c320_365], %241 {strides = array<i32>} : memref<2x576xf32, #tpu.memory_space<vmem>>, vector<1x64xf32>,
    %c14 = arith.constant 14 : index
    %c0_366 = arith.constant 0 : index
    %243 = vector.load %arg10[%c14, %c0_366] : memref<18x64xf32, #tpu.memory_space<vmem>>, vector<1x64xf32>
    %c1_367 = arith.constant 1 : index
    %c320_368 = arith.constant 320 : index
    %244 = vector.load %arg11[%c1_367, %c320_368] : memref<2x576xf32, #tpu.memory_space<vmem>>, vector<1x64xf32>
    tpu.vector_store %arg11[%c1_367, %c320_368], %243 {strides = array<i32>} : memref<2x576xf32, #tpu.memory_space<vmem>>, vector<1x64xf32>,
    %c6_369 = arith.constant 6 : index
    %c0_370 = arith.constant 0 : index
    %245 = vector.load %arg10[%c6_369, %c0_370] : memref<18x64xf32, #tpu.memory_space<vmem>>, vector<1x64xf32>
    %c0_371 = arith.constant 0 : index
    %c384_372 = arith.constant 384 : index
    %246 = vector.load %arg11[%c0_371, %c384_372] : memref<2x576xf32, #tpu.memory_space<vmem>>, vector<1x64xf32>
    tpu.vector_store %arg11[%c0_371, %c384_372], %245 {strides = array<i32>} : memref<2x576xf32, #tpu.memory_space<vmem>>, vector<1x64xf32>,
    %c15_373 = arith.constant 15 : index
    %c0_374 = arith.constant 0 : index
    %247 = vector.load %arg10[%c15_373, %c0_374] : memref<18x64xf32, #tpu.memory_space<vmem>>, vector<1x64xf32>
    %c1_375 = arith.constant 1 : index
    %c384_376 = arith.constant 384 : index
    %248 = vector.load %arg11[%c1_375, %c384_376] : memref<2x576xf32, #tpu.memory_space<vmem>>, vector<1x64xf32>
    tpu.vector_store %arg11[%c1_375, %c384_376], %247 {strides = array<i32>} : memref<2x576xf32, #tpu.memory_space<vmem>>, vector<1x64xf32>,
    %c7 = arith.constant 7 : index
    %c0_377 = arith.constant 0 : index
    %249 = vector.load %arg10[%c7, %c0_377] : memref<18x64xf32, #tpu.memory_space<vmem>>, vector<1x64xf32>
    %c0_378 = arith.constant 0 : index
    %c448_379 = arith.constant 448 : index
    %250 = vector.load %arg11[%c0_378, %c448_379] : memref<2x576xf32, #tpu.memory_space<vmem>>, vector<1x64xf32>
    tpu.vector_store %arg11[%c0_378, %c448_379], %249 {strides = array<i32>} : memref<2x576xf32, #tpu.memory_space<vmem>>, vector<1x64xf32>,
    %c16_380 = arith.constant 16 : index
    %c0_381 = arith.constant 0 : index
    %251 = vector.load %arg10[%c16_380, %c0_381] : memref<18x64xf32, #tpu.memory_space<vmem>>, vector<1x64xf32>
    %c1_382 = arith.constant 1 : index
    %c448_383 = arith.constant 448 : index
    %252 = vector.load %arg11[%c1_382, %c448_383] : memref<2x576xf32, #tpu.memory_space<vmem>>, vector<1x64xf32>
    tpu.vector_store %arg11[%c1_382, %c448_383], %251 {strides = array<i32>} : memref<2x576xf32, #tpu.memory_space<vmem>>, vector<1x64xf32>,
    %c8_384 = arith.constant 8 : index
    %c0_385 = arith.constant 0 : index
    %253 = vector.load %arg10[%c8_384, %c0_385] : memref<18x64xf32, #tpu.memory_space<vmem>>, vector<1x64xf32>
    %c0_386 = arith.constant 0 : index
    %c512 = arith.constant 512 : index
    %254 = vector.load %arg11[%c0_386, %c512] : memref<2x576xf32, #tpu.memory_space<vmem>>, vector<1x64xf32>
    tpu.vector_store %arg11[%c0_386, %c512], %253 {strides = array<i32>} : memref<2x576xf32, #tpu.memory_space<vmem>>, vector<1x64xf32>,
    %c17_387 = arith.constant 17 : index
    %c0_388 = arith.constant 0 : index
    %255 = vector.load %arg10[%c17_387, %c0_388] : memref<18x64xf32, #tpu.memory_space<vmem>>, vector<1x64xf32>
    %c1_389 = arith.constant 1 : index
    %c512_390 = arith.constant 512 : index
    %256 = vector.load %arg11[%c1_389, %c512_390] : memref<2x576xf32, #tpu.memory_space<vmem>>, vector<1x64xf32>
    tpu.vector_store %arg11[%c1_389, %c512_390], %255 {strides = array<i32>} : memref<2x576xf32, #tpu.memory_space<vmem>>, vector<1x64xf32>,
    %c1_i32_391 = arith.constant 1 : i32
    %257 = tpu.memref_slice %arg17[%c1_i32_391] : memref<4x!tpu.dma_semaphore, #tpu.memory_space<semaphore_mem>> -> memref<1x!tpu.dma_semaphore, #tpu.memory_space<semaphore_mem>>
    %258 = tpu.memref_squeeze %257 : memref<1x!tpu.dma_semaphore, #tpu.memory_space<semaphore_mem>> -> memref<!tpu.dma_semaphore, #tpu.memory_space<semaphore_mem>>
    tpu.wait_dma2 semaphore(%258 : memref<!tpu.dma_semaphore, #tpu.memory_space<semaphore_mem>>) src(%arg4 : memref<576x64xbf16, #tpu.memory_space<any>>) dst(%arg14 : memref<576x64xbf16, #tpu.memory_space<vmem>>)
    %c0_392 = arith.constant 0 : index
    %c0_393 = arith.constant 0 : index
    %259 = vector.load %arg11[%c0_392, %c0_393] : memref<2x576xf32, #tpu.memory_space<vmem>>, vector<2x576xf32>
    %260 = arith.truncf %259 : vector<2x576xf32> to vector<2x576xbf16>
    %c0_394 = arith.constant 0 : index
    %c0_395 = arith.constant 0 : index
    %261 = vector.load %arg14[%c0_394, %c0_395] : memref<576x64xbf16, #tpu.memory_space<vmem>>, vector<576x64xbf16>
    %cst_396 = arith.constant dense<0.000000e+00> : vector<2x64xf32>
    %262 = tpu.matmul %260, %261, %cst_396 {dimension_numbers = #tpu.dot_dimension_numbers<[1], [0], [0], [1], [0, 0, 1, 1], [], []>} : vector<2x576xbf16>, vector<576x64xbf16>, vector<2x64xf32> -> vector<2x64xf32>
    %c0_397 = arith.constant 0 : index
    %c256_398 = arith.constant 256 : index
    %263 = vector.load %arg2[%c0_397, %c256_398] : memref<1x1024xf32, #tpu.memory_space<vmem>>, vector<1x64xf32>
    %264 = vector.broadcast %263 : vector<1x64xf32> to vector<2x64xf32>
    %265 = arith.addf %262, %264 : vector<2x64xf32>
    %cst_399 = arith.constant 0.000000e+00 : f32
    %266 = vector.broadcast %cst_399 : f32 to vector<2x64xf32>
    %267 = arith.maximumf %265, %266 : vector<2x64xf32>
    %c0_400 = arith.constant 0 : index
    %c0_401 = arith.constant 0 : index
    %268 = vector.load %arg12[%c0_400, %c0_401] : memref<2x64xf32, #tpu.memory_space<vmem>>, vector<2x64xf32>
    tpu.vector_store %arg12[%c0_400, %c0_401], %267 {strides = array<i32>} : memref<2x64xf32, #tpu.memory_space<vmem>>, vector<2x64xf32>,
    %c0_402 = arith.constant 0 : index
    %c0_403 = arith.constant 0 : index
    %269 = vector.load %arg12[%c0_402, %c0_403] : memref<2x64xf32, #tpu.memory_space<vmem>>, vector<2x64xf32>
    %c2_i32_404 = arith.constant 2 : i32
    %270 = tpu.memref_slice %arg17[%c2_i32_404] : memref<4x!tpu.dma_semaphore, #tpu.memory_space<semaphore_mem>> -> memref<1x!tpu.dma_semaphore, #tpu.memory_space<semaphore_mem>>
    %271 = tpu.memref_squeeze %270 : memref<1x!tpu.dma_semaphore, #tpu.memory_space<semaphore_mem>> -> memref<!tpu.dma_semaphore, #tpu.memory_space<semaphore_mem>>
    tpu.wait_dma2 semaphore(%271 : memref<!tpu.dma_semaphore, #tpu.memory_space<semaphore_mem>>) src(%arg5 : memref<64x512xbf16, #tpu.memory_space<any>>) dst(%arg15 : memref<64x512xbf16, #tpu.memory_space<vmem>>)
    %272 = arith.truncf %269 : vector<2x64xf32> to vector<2x64xbf16>
    %c0_405 = arith.constant 0 : index
    %c0_406 = arith.constant 0 : index
    %273 = vector.load %arg15[%c0_405, %c0_406] : memref<64x512xbf16, #tpu.memory_space<vmem>>, vector<64x512xbf16>
    %cst_407 = arith.constant dense<0.000000e+00> : vector<2x512xf32>
    %274 = tpu.matmul %272, %273, %cst_407 {dimension_numbers = #tpu.dot_dimension_numbers<[1], [0], [0], [1], [0, 0, 1, 1], [], []>} : vector<2x64xbf16>, vector<64x512xbf16>, vector<2x512xf32> -> vector<2x512xf32>
    %c0_408 = arith.constant 0 : index
    %c384_409 = arith.constant 384 : index
    %275 = vector.load %arg2[%c0_408, %c384_409] : memref<1x1024xf32, #tpu.memory_space<vmem>>, vector<1x512xf32>
    %276 = vector.broadcast %275 : vector<1x512xf32> to vector<2x512xf32>
    %277 = arith.addf %274, %276 : vector<2x512xf32>
    %cst_410 = arith.constant 0.000000e+00 : f32
    %278 = vector.broadcast %cst_410 : f32 to vector<2x512xf32>
    %279 = arith.maximumf %277, %278 : vector<2x512xf32>
    %c3_i32_411 = arith.constant 3 : i32
    %280 = tpu.memref_slice %arg17[%c3_i32_411] : memref<4x!tpu.dma_semaphore, #tpu.memory_space<semaphore_mem>> -> memref<1x!tpu.dma_semaphore, #tpu.memory_space<semaphore_mem>>
    %281 = tpu.memref_squeeze %280 : memref<1x!tpu.dma_semaphore, #tpu.memory_space<semaphore_mem>> -> memref<!tpu.dma_semaphore, #tpu.memory_space<semaphore_mem>>
    tpu.wait_dma2 semaphore(%281 : memref<!tpu.dma_semaphore, #tpu.memory_space<semaphore_mem>>) src(%arg6 : memref<512x128xbf16, #tpu.memory_space<any>>) dst(%arg16 : memref<512x128xbf16, #tpu.memory_space<vmem>>)
    %282 = arith.truncf %279 : vector<2x512xf32> to vector<2x512xbf16>
    %c0_412 = arith.constant 0 : index
    %c0_413 = arith.constant 0 : index
    %283 = vector.load %arg16[%c0_412, %c0_413] : memref<512x128xbf16, #tpu.memory_space<vmem>>, vector<512x128xbf16>
    %cst_414 = arith.constant dense<0.000000e+00> : vector<2x128xf32>
    %284 = tpu.matmul %282, %283, %cst_414 {dimension_numbers = #tpu.dot_dimension_numbers<[1], [0], [0], [1], [0, 0, 1, 1], [], []>} : vector<2x512xbf16>, vector<512x128xbf16>, vector<2x128xf32> -> vector<2x128xf32>
    %c0_415 = arith.constant 0 : index
    %c896 = arith.constant 896 : index
    %285 = vector.load %arg2[%c0_415, %c896] : memref<1x1024xf32, #tpu.memory_space<vmem>>, vector<1x128xf32>
    %286 = vector.broadcast %285 : vector<1x128xf32> to vector<2x128xf32>
    %287 = arith.addf %284, %286 : vector<2x128xf32>
    %c0_416 = arith.constant 0 : index
    %c0_417 = arith.constant 0 : index
    %288 = vector.load %arg7[%c0_416, %c0_417] : memref<2x128xf32, #tpu.memory_space<vmem>>, vector<2x128xf32>
    tpu.vector_store %arg7[%c0_416, %c0_417], %287 {strides = array<i32>} : memref<2x128xf32, #tpu.memory_space<vmem>>, vector<2x128xf32>,
    return
  }
}

</mosaic_0001>

<llo_original>
// kernel: forward.1
$region0: #{forward.1}
  #allocation0 [shape = 'u32[]', space=smem, size = 0x4, offset = 0x4, fixed_abs, tag = 'smem constant byte address 0x4 - core index']
  #allocation1 [shape = 'u32[144,128]{1,0:T(1,128)}', space=vmem, size = 0x12000, scoped, tag = 'internal scratch']
  #allocation2 [shape = 'f32[128,32]{1,0:T(8,128)}', space=vmem, size = 0x10000, scoped, tag = 'scratch operand']
  #allocation3 [shape = 'f32[18,512]{1,0:T(8,128)}', space=vmem, size = 0xc000, scoped, tag = 'scratch operand']
  #allocation4 [shape = 'f32[18,64]{1,0:T(8,128)}', space=vmem, size = 0x3000, scoped, tag = 'scratch operand']
  #allocation5 [shape = 'f32[2,576]{1,0:T(2,128)}', space=vmem, size = 0x1400, scoped, tag = 'scratch operand']
  #allocation6 [shape = 'f32[2,64]{1,0:T(2,128)}', space=vmem, size = 0x400, scoped, tag = 'scratch operand']
  #allocation7 [shape = 'bf16[512,64]{1,0:T(16,128)(2,1)}', space=vmem, size = 0x20000, scoped, tag = 'scratch operand']
  #allocation8 [shape = 'bf16[576,64]{1,0:T(16,128)(2,1)}', space=vmem, size = 0x24000, scoped, tag = 'scratch operand']
  #allocation9 [shape = 'bf16[64,512]{1,0:T(16,128)(2,1)}', space=vmem, size = 0x10000, scoped, tag = 'scratch operand']
  #allocation10 [shape = 'bf16[512,128]{1,0:T(16,128)(2,1)}', space=vmem, size = 0x20000, scoped, tag = 'scratch operand']
  #allocation11 [shape = 's32[4]{0}', space=sflag, size = 0x10, scoped, tag = 'scratch operand']
  #allocation14 [shape = 's32[]', space=sflag, size = 0x4, offset = 0, fixed_abs, tag = 'sflag constant byte address 0x0 - dummy sync flag']
  #allocation15 [shape = 's32[]', space=sflag, size = 0x4, offset = 0, fixed_abs, tag = 'sflag constant byte address 0x0 - dummy sync flag']
  #allocation16 [shape = 's32[]', space=sflag, size = 0x4, offset = 0, fixed_abs, tag = 'sflag constant byte address 0x0 - dummy sync flag']
  #allocation17 [shape = 's32[]', space=sflag, size = 0x4, offset = 0, fixed_abs, tag = 'sflag constant byte address 0x0 - dummy sync flag']
  %s0 = inlined_call_operand.vmem [shape: bf16[128,256], index: 0, kind: input, shape index: {}]
  %s1 = inlined_call_operand.vmem [shape: bf16[256,32], index: 1, kind: input, shape index: {}]
  %s2 = inlined_call_operand.vmem [shape: f32[1,1024], index: 2, kind: input, shape index: {}]
  %s3 = inlined_call_operand.vmem [shape: bf16[512,64], index: 3, kind: input, shape index: {}]
  %s4 = inlined_call_operand.vmem [shape: bf16[576,64], index: 4, kind: input, shape index: {}]
  %s5 = inlined_call_operand.vmem [shape: bf16[64,512], index: 5, kind: input, shape index: {}]
  %s6 = inlined_call_operand.vmem [shape: bf16[512,128], index: 6, kind: input, shape index: {}]
  %s7 = inlined_call_operand.hbm [shape: f32[2,128], index: 7, kind: output, shape index: {}]
  %s8 = sld [smem:[#allocation0]]
  $region161: #{forward.1} parent=0
    _
  %s10 = ssub.s32 1, %s8
  %s11 = scalar_select 0, %s10, %s8
  $region1: #{forward.1} parent=0
    #allocation12 [shape = 'u8[1024]{0}', space=vmem, size = 0x400, scoped, tag = 'output window, operand 0, single buffered']
    #allocation13 [shape = 's32[1]{0}', space=sflag, size = 0x4, scoped, tag = 'scoped memory for forward.1']
    %12 = vsyncpa [#allocation13], 0
    // Predicated region
    $region2: #{forward.1} parent=1 // pred_check
      _
    $region3: #{forward.1} parent=1 // pred_check_branch
      %14 = sbr.rel (0) target = $region5
    $region4: #{forward.1} parent=1 // pred_region
      _
    $region5: #{forward.1} parent=1 // pred_fallthru
      _
    // Predicated region
    $region6: #{forward.1} parent=1 // pred_check
      _
    $region7: #{forward.1} parent=1 // pred_check_branch
      %16 = sbr.rel (0) target = $region9
    $region8: #{forward.1} parent=1 // pred_region
      _
    $region9: #{forward.1} parent=1 // pred_fallthru
      _
    // Predicated region
    $region10: #{forward.1} parent=1 // pred_check
      _
    $region11: #{forward.1} parent=1 // pred_check_branch
      %18 = sbr.rel (0) target = $region13
    $region12: #{forward.1} parent=1 // pred_region
      _
    $region13: #{forward.1} parent=1 // pred_fallthru
      _
    %p21 = scmp.lt.u32.totalorder 256, 8
    %p22 = pneg %p21
    // Predicated region
    $region14: #{forward.1} parent=1 // pred_check
      _
    $region15: #{forward.1} parent=1 // pred_check_branch
      %24 = sbr.rel (%p21) target = $region17
    $region16: #{forward.1} parent=1 // pred_region
      %s39 = sand.u32 256, 7
      %p40 = scmp.eq.s32.totalorder %s39, 0
      // Predicated region
      $region29: #{forward.1} parent=16 // pred_check
        %p41 = pneg %p40
      $region30: #{forward.1} parent=16 // pred_check_branch
        %43 = sbr.rel (%p41) target = $region32
      $region31: #{forward.1} parent=16 // pred_region
        loop: start=0, step=1, limit=1
        $region33: #{forward.1} parent=31 // loop_pre_header
          _
        $region34: #{forward.1} parent=31 // loop_header
          %s45 = sphi 0, %s49
          %p46 = scmp.ge.s32.totalorder %s45, 1
          %s50 = sphi %s3, %s3
          %s51 = sphi [#allocation7], [#allocation7]
        $region35: #{forward.1} parent=31 // loop_header_branch
          %48 = sbr.rel (%p46) target = $region39
        $region36: #{forward.1} parent=31 // loop_body
          %v52 = vld [vmem:[%s50] sm:$0xff]
          %53 = vst [vmem:[%s51] sm:$0xff] %v52
          %v54 = vld [vmem:[%s50 + $0x8] sm:$0xff]
          %55 = vst [vmem:[%s51 + $0x8] sm:$0xff] %v54
          %v56 = vld [vmem:[%s50 + $0x10] sm:$0xff]
          %57 = vst [vmem:[%s51 + $0x10] sm:$0xff] %v56
          %v58 = vld [vmem:[%s50 + $0x18] sm:$0xff]
          %59 = vst [vmem:[%s51 + $0x18] sm:$0xff] %v58
          %v60 = vld [vmem:[%s50 + $0x20] sm:$0xff]
          %61 = vst [vmem:[%s51 + $0x20] sm:$0xff] %v60
          %v62 = vld [vmem:[%s50 + $0x28] sm:$0xff]
          %63 = vst [vmem:[%s51 + $0x28] sm:$0xff] %v62
          %v64 = vld [vmem:[%s50 + $0x30] sm:$0xff]
          %65 = vst [vmem:[%s51 + $0x30] sm:$0xff] %v64
          %v66 = vld [vmem:[%s50 + $0x38] sm:$0xff]
          %67 = vst [vmem:[%s51 + $0x38] sm:$0xff] %v66
          %v68 = vld [vmem:[%s50 + $0x40] sm:$0xff]
          %69 = vst [vmem:[%s51 + $0x40] sm:$0xff] %v68
          %v70 = vld [vmem:[%s50 + $0x48] sm:$0xff]
          %71 = vst [vmem:[%s51 + $0x48] sm:$0xff] %v70
          %v72 = vld [vmem:[%s50 + $0x50] sm:$0xff]
          %73 = vst [vmem:[%s51 + $0x50] sm:$0xff] %v72
          %v74 = vld [vmem:[%s50 + $0x58] sm:$0xff]
          %75 = vst [vmem:[%s51 + $0x58] sm:$0xff] %v74
          %v76 = vld [vmem:[%s50 + $0x60] sm:$0xff]
          %77 = vst [vmem:[%s51 + $0x60] sm:$0xff] %v76
          %v78 = vld [vmem:[%s50 + $0x68] sm:$0xff]
          %79 = vst [vmem:[%s51 + $0x68] sm:$0xff] %v78
          %v80 = vld [vmem:[%s50 + $0x70] sm:$0xff]
          %81 = vst [vmem:[%s51 + $0x70] sm:$0xff] %v80
          %v82 = vld [vmem:[%s50 + $0x78] sm:$0xff]
          %83 = vst [vmem:[%s51 + $0x78] sm:$0xff] %v82
          %v84 = vld [vmem:[%s50 + $0x80] sm:$0xff]
          %85 = vst [vmem:[%s51 + $0x80] sm:$0xff] %v84
          %v86 = vld [vmem:[%s50 + $0x88] sm:$0xff]
          %87 = vst [vmem:[%s51 + $0x88] sm:$0xff] %v86
          %v88 = vld [vmem:[%s50 + $0x90] sm:$0xff]
          %89 = vst [vmem:[%s51 + $0x90] sm:$0xff] %v88
          %v90 = vld [vmem:[%s50 + $0x98] sm:$0xff]
          %91 = vst [vmem:[%s51 + $0x98] sm:$0xff] %v90
          %v92 = vld [vmem:[%s50 + $0xa0] sm:$0xff]
          %93 = vst [vmem:[%s51 + $0xa0] sm:$0xff] %v92
          %v94 = vld [vmem:[%s50 + $0xa8] sm:$0xff]
          %95 = vst [vmem:[%s51 + $0xa8] sm:$0xff] %v94
          %v96 = vld [vmem:[%s50 + $0xb0] sm:$0xff]
          %97 = vst [vmem:[%s51 + $0xb0] sm:$0xff] %v96
          %v98 = vld [vmem:[%s50 + $0xb8] sm:$0xff]
          %99 = vst [vmem:[%s51 + $0xb8] sm:$0xff] %v98
          %v100 = vld [vmem:[%s50 + $0xc0] sm:$0xff]
          %101 = vst [vmem:[%s51 + $0xc0] sm:$0xff] %v100
          %v102 = vld [vmem:[%s50 + $0xc8] sm:$0xff]
          %103 = vst [vmem:[%s51 + $0xc8] sm:$0xff] %v102
          %v104 = vld [vmem:[%s50 + $0xd0] sm:$0xff]
          %105 = vst [vmem:[%s51 + $0xd0] sm:$0xff] %v104
          %v106 = vld [vmem:[%s50 + $0xd8] sm:$0xff]
          %107 = vst [vmem:[%s51 + $0xd8] sm:$0xff] %v106
          %v108 = vld [vmem:[%s50 + $0xe0] sm:$0xff]
          %109 = vst [vmem:[%s51 + $0xe0] sm:$0xff] %v108
          %v110 = vld [vmem:[%s50 + $0xe8] sm:$0xff]
          %111 = vst [vmem:[%s51 + $0xe8] sm:$0xff] %v110
          %v112 = vld [vmem:[%s50 + $0xf0] sm:$0xff]
          %113 = vst [vmem:[%s51 + $0xf0] sm:$0xff] %v112
          %v114 = vld [vmem:[%s50 + $0xf8] sm:$0xff]
          %115 = vst [vmem:[%s51 + $0xf8] sm:$0xff] %v114
        $region37: #{forward.1} parent=31 // loop_footer
          %s49 = sadd.s32 1, %s45
        $region38: #{forward.1} parent=31 // loop_footer_branch
          %44 = sbr.rel target = $region34
        $region39: #{forward.1} parent=31 // loop_exit
          _
      $region32: #{forward.1} parent=16 // pred_fallthru
        _
      %p116 = pneg %p40
      // Predicated region
      $region40: #{forward.1} parent=16 // pred_check
        _
      $region41: #{forward.1} parent=16 // pred_check_branch
        %118 = sbr.rel (%p40) target = $region43
      $region42: #{forward.1} parent=16 // pred_region
        %s119 = sand.u32 256, 7
      $region43: #{forward.1} parent=16 // pred_fallthru
        _
    $region17: #{forward.1} parent=1 // pred_fallthru
      _
    // Predicated region
    $region18: #{forward.1} parent=1 // pred_check
      %p25 = pneg %p21
    $region19: #{forward.1} parent=1 // pred_check_branch
      %27 = sbr.rel (%p25) target = $region21
    $region20: #{forward.1} parent=1 // pred_region
      %s28 = sshllo.u32 0, 256
      loop: start=0, step=1, limit=1
      $region22: #{forward.1} parent=20 // loop_pre_header
        _
      $region23: #{forward.1} parent=20 // loop_header
        %s30 = sphi 0, %s34
        %p31 = scmp.ge.s32.totalorder %s30, 1
        %s35 = sphi %s3, %s3
        %s36 = sphi [#allocation7], [#allocation7]
      $region24: #{forward.1} parent=20 // loop_header_branch
        %33 = sbr.rel (%p31) target = $region28
      $region25: #{forward.1} parent=20 // loop_body
        %v37 = vld [vmem:[%s35] sm:%s28]
        %38 = vst [vmem:[%s36] sm:%s28] %v37
      $region26: #{forward.1} parent=20 // loop_footer
        %s34 = sadd.s32 1, %s30
      $region27: #{forward.1} parent=20 // loop_footer_branch
        %29 = sbr.rel target = $region23
      $region28: #{forward.1} parent=20 // loop_exit
        _
    $region21: #{forward.1} parent=1 // pred_fallthru
      _
    // Predicated region
    $region44: #{forward.1} parent=1 // pred_check
      _
    $region45: #{forward.1} parent=1 // pred_check_branch
      %122 = sbr.rel (0) target = $region47
    $region46: #{forward.1} parent=1 // pred_region
      %123 = vsyncadd [#allocation11], 4096
    $region47: #{forward.1} parent=1 // pred_fallthru
      _
    %s124 = scalar_lea.sflag [#allocation11], 1
    %p126 = scmp.lt.u32.totalorder 288, 8
    %p127 = pneg %p126
    // Predicated region
    $region48: #{forward.1} parent=1 // pred_check
      _
    $region49: #{forward.1} parent=1 // pred_check_branch
      %129 = sbr.rel (%p126) target = $region51
    $region50: #{forward.1} parent=1 // pred_region
      %s144 = sand.u32 288, 7
      %p145 = scmp.eq.s32.totalorder %s144, 0
      // Predicated region
      $region63: #{forward.1} parent=50 // pred_check
        %p146 = pneg %p145
      $region64: #{forward.1} parent=50 // pred_check_branch
        %148 = sbr.rel (%p146) target = $region66
      $region65: #{forward.1} parent=50 // pred_region
        loop: start=0, step=1, limit=1
        $region67: #{forward.1} parent=65 // loop_pre_header
          _
        $region68: #{forward.1} parent=65 // loop_header
          %s150 = sphi 0, %s154
          %p151 = scmp.ge.s32.totalorder %s150, 1
          %s155 = sphi %s4, %s4
          %s156 = sphi [#allocation8], [#allocation8]
        $region69: #{forward.1} parent=65 // loop_header_branch
          %153 = sbr.rel (%p151) target = $region73
        $region70: #{forward.1} parent=65 // loop_body
          %v157 = vld [vmem:[%s155] sm:$0xff]
          %158 = vst [vmem:[%s156] sm:$0xff] %v157
          %v159 = vld [vmem:[%s155 + $0x8] sm:$0xff]
          %160 = vst [vmem:[%s156 + $0x8] sm:$0xff] %v159
          %v161 = vld [vmem:[%s155 + $0x10] sm:$0xff]
          %162 = vst [vmem:[%s156 + $0x10] sm:$0xff] %v161
          %v163 = vld [vmem:[%s155 + $0x18] sm:$0xff]
          %164 = vst [vmem:[%s156 + $0x18] sm:$0xff] %v163
          %v165 = vld [vmem:[%s155 + $0x20] sm:$0xff]
          %166 = vst [vmem:[%s156 + $0x20] sm:$0xff] %v165
          %v167 = vld [vmem:[%s155 + $0x28] sm:$0xff]
          %168 = vst [vmem:[%s156 + $0x28] sm:$0xff] %v167
          %v169 = vld [vmem:[%s155 + $0x30] sm:$0xff]
          %170 = vst [vmem:[%s156 + $0x30] sm:$0xff] %v169
          %v171 = vld [vmem:[%s155 + $0x38] sm:$0xff]
          %172 = vst [vmem:[%s156 + $0x38] sm:$0xff] %v171
          %v173 = vld [vmem:[%s155 + $0x40] sm:$0xff]
          %174 = vst [vmem:[%s156 + $0x40] sm:$0xff] %v173
          %v175 = vld [vmem:[%s155 + $0x48] sm:$0xff]
          %176 = vst [vmem:[%s156 + $0x48] sm:$0xff] %v175
          %v177 = vld [vmem:[%s155 + $0x50] sm:$0xff]
          %178 = vst [vmem:[%s156 + $0x50] sm:$0xff] %v177
          %v179 = vld [vmem:[%s155 + $0x58] sm:$0xff]
          %180 = vst [vmem:[%s156 + $0x58] sm:$0xff] %v179
          %v181 = vld [vmem:[%s155 + $0x60] sm:$0xff]
          %182 = vst [vmem:[%s156 + $0x60] sm:$0xff] %v181
          %v183 = vld [vmem:[%s155 + $0x68] sm:$0xff]
          %184 = vst [vmem:[%s156 + $0x68] sm:$0xff] %v183
          %v185 = vld [vmem:[%s155 + $0x70] sm:$0xff]
          %186 = vst [vmem:[%s156 + $0x70] sm:$0xff] %v185
          %v187 = vld [vmem:[%s155 + $0x78] sm:$0xff]
          %188 = vst [vmem:[%s156 + $0x78] sm:$0xff] %v187
          %v189 = vld [vmem:[%s155 + $0x80] sm:$0xff]
          %190 = vst [vmem:[%s156 + $0x80] sm:$0xff] %v189
          %v191 = vld [vmem:[%s155 + $0x88] sm:$0xff]
          %192 = vst [vmem:[%s156 + $0x88] sm:$0xff] %v191
          %v193 = vld [vmem:[%s155 + $0x90] sm:$0xff]
          %194 = vst [vmem:[%s156 + $0x90] sm:$0xff] %v193
          %v195 = vld [vmem:[%s155 + $0x98] sm:$0xff]
          %196 = vst [vmem:[%s156 + $0x98] sm:$0xff] %v195
          %v197 = vld [vmem:[%s155 + $0xa0] sm:$0xff]
          %198 = vst [vmem:[%s156 + $0xa0] sm:$0xff] %v197
          %v199 = vld [vmem:[%s155 + $0xa8] sm:$0xff]
          %200 = vst [vmem:[%s156 + $0xa8] sm:$0xff] %v199
          %v201 = vld [vmem:[%s155 + $0xb0] sm:$0xff]
          %202 = vst [vmem:[%s156 + $0xb0] sm:$0xff] %v201
          %v203 = vld [vmem:[%s155 + $0xb8] sm:$0xff]
          %204 = vst [vmem:[%s156 + $0xb8] sm:$0xff] %v203
          %v205 = vld [vmem:[%s155 + $0xc0] sm:$0xff]
          %206 = vst [vmem:[%s156 + $0xc0] sm:$0xff] %v205
          %v207 = vld [vmem:[%s155 + $0xc8] sm:$0xff]
          %208 = vst [vmem:[%s156 + $0xc8] sm:$0xff] %v207
          %v209 = vld [vmem:[%s155 + $0xd0] sm:$0xff]
          %210 = vst [vmem:[%s156 + $0xd0] sm:$0xff] %v209
          %v211 = vld [vmem:[%s155 + $0xd8] sm:$0xff]
          %212 = vst [vmem:[%s156 + $0xd8] sm:$0xff] %v211
          %v213 = vld [vmem:[%s155 + $0xe0] sm:$0xff]
          %214 = vst [vmem:[%s156 + $0xe0] sm:$0xff] %v213
          %v215 = vld [vmem:[%s155 + $0xe8] sm:$0xff]
          %216 = vst [vmem:[%s156 + $0xe8] sm:$0xff] %v215
          %v217 = vld [vmem:[%s155 + $0xf0] sm:$0xff]
          %218 = vst [vmem:[%s156 + $0xf0] sm:$0xff] %v217
          %v219 = vld [vmem:[%s155 + $0xf8] sm:$0xff]
          %220 = vst [vmem:[%s156 + $0xf8] sm:$0xff] %v219
          %v221 = vld [vmem:[%s155 + $0x100] sm:$0xff]
          %222 = vst [vmem:[%s156 + $0x100] sm:$0xff] %v221
          %v223 = vld [vmem:[%s155 + $0x108] sm:$0xff]
          %224 = vst [vmem:[%s156 + $0x108] sm:$0xff] %v223
          %v225 = vld [vmem:[%s155 + $0x110] sm:$0xff]
          %226 = vst [vmem:[%s156 + $0x110] sm:$0xff] %v225
          %v227 = vld [vmem:[%s155 + $0x118] sm:$0xff]
          %228 = vst [vmem:[%s156 + $0x118] sm:$0xff] %v227
        $region71: #{forward.1} parent=65 // loop_footer
          %s154 = sadd.s32 1, %s150
        $region72: #{forward.1} parent=65 // loop_footer_branch
          %149 = sbr.rel target = $region68
        $region73: #{forward.1} parent=65 // loop_exit
          _
      $region66: #{forward.1} parent=50 // pred_fallthru
        _
      %p229 = pneg %p145
      // Predicated region
      $region74: #{forward.1} parent=50 // pred_check
        _
      $region75: #{forward.1} parent=50 // pred_check_branch
        %231 = sbr.rel (%p145) target = $region77
      $region76: #{forward.1} parent=50 // pred_region
        %s232 = sand.u32 288, 7
      $region77: #{forward.1} parent=50 // pred_fallthru
        _
    $region51: #{forward.1} parent=1 // pred_fallthru
      _
    // Predicated region
    $region52: #{forward.1} parent=1 // pred_check
      %p130 = pneg %p126
    $region53: #{forward.1} parent=1 // pred_check_branch
      %132 = sbr.rel (%p130) target = $region55
    $region54: #{forward.1} parent=1 // pred_region
      %s133 = sshllo.u32 0, 288
      loop: start=0, step=1, limit=1
      $region56: #{forward.1} parent=54 // loop_pre_header
        _
      $region57: #{forward.1} parent=54 // loop_header
        %s135 = sphi 0, %s139
        %p136 = scmp.ge.s32.totalorder %s135, 1
        %s140 = sphi %s4, %s4
        %s141 = sphi [#allocation8], [#allocation8]
      $region58: #{forward.1} parent=54 // loop_header_branch
        %138 = sbr.rel (%p136) target = $region62
      $region59: #{forward.1} parent=54 // loop_body
        %v142 = vld [vmem:[%s140] sm:%s133]
        %143 = vst [vmem:[%s141] sm:%s133] %v142
      $region60: #{forward.1} parent=54 // loop_footer
        %s139 = sadd.s32 1, %s135
      $region61: #{forward.1} parent=54 // loop_footer_branch
        %134 = sbr.rel target = $region57
      $region62: #{forward.1} parent=54 // loop_exit
        _
    $region55: #{forward.1} parent=1 // pred_fallthru
      _
    // Predicated region
    $region78: #{forward.1} parent=1 // pred_check
      _
    $region79: #{forward.1} parent=1 // pred_check_branch
      %235 = sbr.rel (0) target = $region81
    $region80: #{forward.1} parent=1 // pred_region
      %236 = vsyncadd %s124, 4608
    $region81: #{forward.1} parent=1 // pred_fallthru
      _
    %s237 = scalar_lea.sflag [#allocation11], 2
    %p239 = scmp.lt.u32.totalorder 4, 8
    %p240 = pneg %p239
    // Predicated region
    $region82: #{forward.1} parent=1 // pred_check
      _
    $region83: #{forward.1} parent=1 // pred_check_branch
      %242 = sbr.rel (%p239) target = $region85
    $region84: #{forward.1} parent=1 // pred_region
      %s319 = sand.u32 4, 7
      %p320 = scmp.eq.s32.totalorder %s319, 0
      %p321 = pneg %p320
      // Predicated region
      $region97: #{forward.1} parent=84 // pred_check
        _
      $region98: #{forward.1} parent=84 // pred_check_branch
        %323 = sbr.rel (%p320) target = $region100
      $region99: #{forward.1} parent=84 // pred_region
        %s324 = sand.u32 4, 7
        %s325 = ssub.s32 4, %s324
        %s326 = scalar_lea.vmem %s5, %s325
        %s327 = ssub.s32 4, %s324
        %s328 = scalar_lea.vmem [#allocation9], %s327
        loop: start=0, step=1, limit=1
        $region101: #{forward.1} parent=99 // loop_pre_header
          _
        $region102: #{forward.1} parent=99 // loop_header
          %s330 = sphi 0, %s334
          %p331 = scmp.ge.s32.totalorder %s330, 1
          %s335 = sphi %s5, %s5
          %s336 = sphi [#allocation9], [#allocation9]
        $region103: #{forward.1} parent=99 // loop_header_branch
          %333 = sbr.rel (%p331) target = $region107
        $region104: #{forward.1} parent=99 // loop_body
          _
        $region105: #{forward.1} parent=99 // loop_footer
          %s334 = sadd.s32 1, %s330
        $region106: #{forward.1} parent=99 // loop_footer_branch
          %329 = sbr.rel target = $region102
        $region107: #{forward.1} parent=99 // loop_exit
          _
        %s337 = sshllo.u32 0, %s324
        loop: start=0, step=1, limit=1
        $region108: #{forward.1} parent=99 // loop_pre_header
          _
        $region109: #{forward.1} parent=99 // loop_header
          %s339 = sphi 0, %s343
          %p340 = scmp.ge.s32.totalorder %s339, 1
          %s344 = sphi %s326, %s326
          %s345 = sphi %s328, %s328
        $region110: #{forward.1} parent=99 // loop_header_branch
          %342 = sbr.rel (%p340) target = $region114
        $region111: #{forward.1} parent=99 // loop_body
          %v346 = vld [vmem:[%s344] sm:%s337]
          %347 = vst [vmem:[%s345] sm:%s337] %v346
          %v348 = vld [vmem:[%s344 + $0x10] sm:%s337]
          %349 = vst [vmem:[%s345 + $0x4] sm:%s337] %v348
          %v350 = vld [vmem:[%s344 + $0x4] sm:%s337]
          %351 = vst [vmem:[%s345 + $0x8] sm:%s337] %v350
          %v352 = vld [vmem:[%s344 + $0x14] sm:%s337]
          %353 = vst [vmem:[%s345 + $0xc] sm:%s337] %v352
          %v354 = vld [vmem:[%s344 + $0x8] sm:%s337]
          %355 = vst [vmem:[%s345 + $0x10] sm:%s337] %v354
          %v356 = vld [vmem:[%s344 + $0x18] sm:%s337]
          %357 = vst [vmem:[%s345 + $0x14] sm:%s337] %v356
          %v358 = vld [vmem:[%s344 + $0xc] sm:%s337]
          %359 = vst [vmem:[%s345 + $0x18] sm:%s337] %v358
          %v360 = vld [vmem:[%s344 + $0x1c] sm:%s337]
          %361 = vst [vmem:[%s345 + $0x1c] sm:%s337] %v360
          %v362 = vld [vmem:[%s344 + $0x20] sm:%s337]
          %363 = vst [vmem:[%s345 + $0x20] sm:%s337] %v362
          %v364 = vld [vmem:[%s344 + $0x30] sm:%s337]
          %365 = vst [vmem:[%s345 + $0x24] sm:%s337] %v364
          %v366 = vld [vmem:[%s344 + $0x24] sm:%s337]
          %367 = vst [vmem:[%s345 + $0x28] sm:%s337] %v366
          %v368 = vld [vmem:[%s344 + $0x34] sm:%s337]
          %369 = vst [vmem:[%s345 + $0x2c] sm:%s337] %v368
          %v370 = vld [vmem:[%s344 + $0x28] sm:%s337]
          %371 = vst [vmem:[%s345 + $0x30] sm:%s337] %v370
          %v372 = vld [vmem:[%s344 + $0x38] sm:%s337]
          %373 = vst [vmem:[%s345 + $0x34] sm:%s337] %v372
          %v374 = vld [vmem:[%s344 + $0x2c] sm:%s337]
          %375 = vst [vmem:[%s345 + $0x38] sm:%s337] %v374
          %v376 = vld [vmem:[%s344 + $0x3c] sm:%s337]
          %377 = vst [vmem:[%s345 + $0x3c] sm:%s337] %v376
          %v378 = vld [vmem:[%s344 + $0x40] sm:%s337]
          %379 = vst [vmem:[%s345 + $0x40] sm:%s337] %v378
          %v380 = vld [vmem:[%s344 + $0x50] sm:%s337]
          %381 = vst [vmem:[%s345 + $0x44] sm:%s337] %v380
          %v382 = vld [vmem:[%s344 + $0x44] sm:%s337]
          %383 = vst [vmem:[%s345 + $0x48] sm:%s337] %v382
          %v384 = vld [vmem:[%s344 + $0x54] sm:%s337]
          %385 = vst [vmem:[%s345 + $0x4c] sm:%s337] %v384
          %v386 = vld [vmem:[%s344 + $0x48] sm:%s337]
          %387 = vst [vmem:[%s345 + $0x50] sm:%s337] %v386
          %v388 = vld [vmem:[%s344 + $0x58] sm:%s337]
          %389 = vst [vmem:[%s345 + $0x54] sm:%s337] %v388
          %v390 = vld [vmem:[%s344 + $0x4c] sm:%s337]
          %391 = vst [vmem:[%s345 + $0x58] sm:%s337] %v390
          %v392 = vld [vmem:[%s344 + $0x5c] sm:%s337]
          %393 = vst [vmem:[%s345 + $0x5c] sm:%s337] %v392
          %v394 = vld [vmem:[%s344 + $0x60] sm:%s337]
          %395 = vst [vmem:[%s345 + $0x60] sm:%s337] %v394
          %v396 = vld [vmem:[%s344 + $0x70] sm:%s337]
          %397 = vst [vmem:[%s345 + $0x64] sm:%s337] %v396
          %v398 = vld [vmem:[%s344 + $0x64] sm:%s337]
          %399 = vst [vmem:[%s345 + $0x68] sm:%s337] %v398
          %v400 = vld [vmem:[%s344 + $0x74] sm:%s337]
          %401 = vst [vmem:[%s345 + $0x6c] sm:%s337] %v400
          %v402 = vld [vmem:[%s344 + $0x68] sm:%s337]
          %403 = vst [vmem:[%s345 + $0x70] sm:%s337] %v402
          %v404 = vld [vmem:[%s344 + $0x78] sm:%s337]
          %405 = vst [vmem:[%s345 + $0x74] sm:%s337] %v404
          %v406 = vld [vmem:[%s344 + $0x6c] sm:%s337]
          %407 = vst [vmem:[%s345 + $0x78] sm:%s337] %v406
          %v408 = vld [vmem:[%s344 + $0x7c] sm:%s337]
          %409 = vst [vmem:[%s345 + $0x7c] sm:%s337] %v408
        $region112: #{forward.1} parent=99 // loop_footer
          %s343 = sadd.s32 1, %s339
        $region113: #{forward.1} parent=99 // loop_footer_branch
          %338 = sbr.rel target = $region109
        $region114: #{forward.1} parent=99 // loop_exit
          _
      $region100: #{forward.1} parent=84 // pred_fallthru
        _
    $region85: #{forward.1} parent=1 // pred_fallthru
      _
    // Predicated region
    $region86: #{forward.1} parent=1 // pred_check
      %p243 = pneg %p239
    $region87: #{forward.1} parent=1 // pred_check_branch
      %245 = sbr.rel (%p243) target = $region89
    $region88: #{forward.1} parent=1 // pred_region
      %s246 = sshllo.u32 0, 4
      loop: start=0, step=1, limit=1
      $region90: #{forward.1} parent=88 // loop_pre_header
        _
      $region91: #{forward.1} parent=88 // loop_header
        %s248 = sphi 0, %s252
        %p249 = scmp.ge.s32.totalorder %s248, 1
        %s253 = sphi %s5, %s5
        %s254 = sphi [#allocation9], [#allocation9]
      $region92: #{forward.1} parent=88 // loop_header_branch
        %251 = sbr.rel (%p249) target = $region96
      $region93: #{forward.1} parent=88 // loop_body
        %v255 = vld [vmem:[%s253] sm:%s246]
        %256 = vst [vmem:[%s254] sm:%s246] %v255
        %v257 = vld [vmem:[%s253 + $0x10] sm:%s246]
        %258 = vst [vmem:[%s254 + $0x4] sm:%s246] %v257
        %v259 = vld [vmem:[%s253 + $0x4] sm:%s246]
        %260 = vst [vmem:[%s254 + $0x8] sm:%s246] %v259
        %v261 = vld [vmem:[%s253 + $0x14] sm:%s246]
        %262 = vst [vmem:[%s254 + $0xc] sm:%s246] %v261
        %v263 = vld [vmem:[%s253 + $0x8] sm:%s246]
        %264 = vst [vmem:[%s254 + $0x10] sm:%s246] %v263
        %v265 = vld [vmem:[%s253 + $0x18] sm:%s246]
        %266 = vst [vmem:[%s254 + $0x14] sm:%s246] %v265
        %v267 = vld [vmem:[%s253 + $0xc] sm:%s246]
        %268 = vst [vmem:[%s254 + $0x18] sm:%s246] %v267
        %v269 = vld [vmem:[%s253 + $0x1c] sm:%s246]
        %270 = vst [vmem:[%s254 + $0x1c] sm:%s246] %v269
        %v271 = vld [vmem:[%s253 + $0x20] sm:%s246]
        %272 = vst [vmem:[%s254 + $0x20] sm:%s246] %v271
        %v273 = vld [vmem:[%s253 + $0x30] sm:%s246]
        %274 = vst [vmem:[%s254 + $0x24] sm:%s246] %v273
        %v275 = vld [vmem:[%s253 + $0x24] sm:%s246]
        %276 = vst [vmem:[%s254 + $0x28] sm:%s246] %v275
        %v277 = vld [vmem:[%s253 + $0x34] sm:%s246]
        %278 = vst [vmem:[%s254 + $0x2c] sm:%s246] %v277
        %v279 = vld [vmem:[%s253 + $0x28] sm:%s246]
        %280 = vst [vmem:[%s254 + $0x30] sm:%s246] %v279
        %v281 = vld [vmem:[%s253 + $0x38] sm:%s246]
        %282 = vst [vmem:[%s254 + $0x34] sm:%s246] %v281
        %v283 = vld [vmem:[%s253 + $0x2c] sm:%s246]
        %284 = vst [vmem:[%s254 + $0x38] sm:%s246] %v283
        %v285 = vld [vmem:[%s253 + $0x3c] sm:%s246]
        %286 = vst [vmem:[%s254 + $0x3c] sm:%s246] %v285
        %v287 = vld [vmem:[%s253 + $0x40] sm:%s246]
        %288 = vst [vmem:[%s254 + $0x40] sm:%s246] %v287
        %v289 = vld [vmem:[%s253 + $0x50] sm:%s246]
        %290 = vst [vmem:[%s254 + $0x44] sm:%s246] %v289
        %v291 = vld [vmem:[%s253 + $0x44] sm:%s246]
        %292 = vst [vmem:[%s254 + $0x48] sm:%s246] %v291
        %v293 = vld [vmem:[%s253 + $0x54] sm:%s246]
        %294 = vst [vmem:[%s254 + $0x4c] sm:%s246] %v293
        %v295 = vld [vmem:[%s253 + $0x48] sm:%s246]
        %296 = vst [vmem:[%s254 + $0x50] sm:%s246] %v295
        %v297 = vld [vmem:[%s253 + $0x58] sm:%s246]
        %298 = vst [vmem:[%s254 + $0x54] sm:%s246] %v297
        %v299 = vld [vmem:[%s253 + $0x4c] sm:%s246]
        %300 = vst [vmem:[%s254 + $0x58] sm:%s246] %v299
        %v301 = vld [vmem:[%s253 + $0x5c] sm:%s246]
        %302 = vst [vmem:[%s254 + $0x5c] sm:%s246] %v301
        %v303 = vld [vmem:[%s253 + $0x60] sm:%s246]
        %304 = vst [vmem:[%s254 + $0x60] sm:%s246] %v303
        %v305 = vld [vmem:[%s253 + $0x70] sm:%s246]
        %306 = vst [vmem:[%s254 + $0x64] sm:%s246] %v305
        %v307 = vld [vmem:[%s253 + $0x64] sm:%s246]
        %308 = vst [vmem:[%s254 + $0x68] sm:%s246] %v307
        %v309 = vld [vmem:[%s253 + $0x74] sm:%s246]
        %310 = vst [vmem:[%s254 + $0x6c] sm:%s246] %v309
        %v311 = vld [vmem:[%s253 + $0x68] sm:%s246]
        %312 = vst [vmem:[%s254 + $0x70] sm:%s246] %v311
        %v313 = vld [vmem:[%s253 + $0x78] sm:%s246]
        %314 = vst [vmem:[%s254 + $0x74] sm:%s246] %v313
        %v315 = vld [vmem:[%s253 + $0x6c] sm:%s246]
        %316 = vst [vmem:[%s254 + $0x78] sm:%s246] %v315
        %v317 = vld [vmem:[%s253 + $0x7c] sm:%s246]
        %318 = vst [vmem:[%s254 + $0x7c] sm:%s246] %v317
      $region94: #{forward.1} parent=88 // loop_footer
        %s252 = sadd.s32 1, %s248
      $region95: #{forward.1} parent=88 // loop_footer_branch
        %247 = sbr.rel target = $region91
      $region96: #{forward.1} parent=88 // loop_exit
        _
    $region89: #{forward.1} parent=1 // pred_fallthru
      _
    // Predicated region
    $region115: #{forward.1} parent=1 // pred_check
      _
    $region116: #{forward.1} parent=1 // pred_check_branch
      %412 = sbr.rel (0) target = $region118
    $region117: #{forward.1} parent=1 // pred_region
      %413 = vsyncadd %s237, 2048
    $region118: #{forward.1} parent=1 // pred_fallthru
      _
    %s414 = scalar_lea.sflag [#allocation11], 3
    %p416 = scmp.lt.u32.totalorder 256, 8
    %p417 = pneg %p416
    // Predicated region
    $region119: #{forward.1} parent=1 // pred_check
      _
    $region120: #{forward.1} parent=1 // pred_check_branch
      %419 = sbr.rel (%p416) target = $region122
    $region121: #{forward.1} parent=1 // pred_region
      %s434 = sand.u32 256, 7
      %p435 = scmp.eq.s32.totalorder %s434, 0
      // Predicated region
      $region134: #{forward.1} parent=121 // pred_check
        %p436 = pneg %p435
      $region135: #{forward.1} parent=121 // pred_check_branch
        %438 = sbr.rel (%p436) target = $region137
      $region136: #{forward.1} parent=121 // pred_region
        loop: start=0, step=1, limit=1
        $region138: #{forward.1} parent=136 // loop_pre_header
          _
        $region139: #{forward.1} parent=136 // loop_header
          %s440 = sphi 0, %s444
          %p441 = scmp.ge.s32.totalorder %s440, 1
          %s445 = sphi %s6, %s6
          %s446 = sphi [#allocation10], [#allocation10]
        $region140: #{forward.1} parent=136 // loop_header_branch
          %443 = sbr.rel (%p441) target = $region144
        $region141: #{forward.1} parent=136 // loop_body
          %v447 = vld [vmem:[%s445] sm:$0xff]
          %448 = vst [vmem:[%s446] sm:$0xff] %v447
          %v449 = vld [vmem:[%s445 + $0x8] sm:$0xff]
          %450 = vst [vmem:[%s446 + $0x8] sm:$0xff] %v449
          %v451 = vld [vmem:[%s445 + $0x10] sm:$0xff]
          %452 = vst [vmem:[%s446 + $0x10] sm:$0xff] %v451
          %v453 = vld [vmem:[%s445 + $0x18] sm:$0xff]
          %454 = vst [vmem:[%s446 + $0x18] sm:$0xff] %v453
          %v455 = vld [vmem:[%s445 + $0x20] sm:$0xff]
          %456 = vst [vmem:[%s446 + $0x20] sm:$0xff] %v455
          %v457 = vld [vmem:[%s445 + $0x28] sm:$0xff]
          %458 = vst [vmem:[%s446 + $0x28] sm:$0xff] %v457
          %v459 = vld [vmem:[%s445 + $0x30] sm:$0xff]
          %460 = vst [vmem:[%s446 + $0x30] sm:$0xff] %v459
          %v461 = vld [vmem:[%s445 + $0x38] sm:$0xff]
          %462 = vst [vmem:[%s446 + $0x38] sm:$0xff] %v461
          %v463 = vld [vmem:[%s445 + $0x40] sm:$0xff]
          %464 = vst [vmem:[%s446 + $0x40] sm:$0xff] %v463
          %v465 = vld [vmem:[%s445 + $0x48] sm:$0xff]
          %466 = vst [vmem:[%s446 + $0x48] sm:$0xff] %v465
          %v467 = vld [vmem:[%s445 + $0x50] sm:$0xff]
          %468 = vst [vmem:[%s446 + $0x50] sm:$0xff] %v467
          %v469 = vld [vmem:[%s445 + $0x58] sm:$0xff]
          %470 = vst [vmem:[%s446 + $0x58] sm:$0xff] %v469
          %v471 = vld [vmem:[%s445 + $0x60] sm:$0xff]
          %472 = vst [vmem:[%s446 + $0x60] sm:$0xff] %v471
          %v473 = vld [vmem:[%s445 + $0x68] sm:$0xff]
          %474 = vst [vmem:[%s446 + $0x68] sm:$0xff] %v473
          %v475 = vld [vmem:[%s445 + $0x70] sm:$0xff]
          %476 = vst [vmem:[%s446 + $0x70] sm:$0xff] %v475
          %v477 = vld [vmem:[%s445 + $0x78] sm:$0xff]
          %478 = vst [vmem:[%s446 + $0x78] sm:$0xff] %v477
          %v479 = vld [vmem:[%s445 + $0x80] sm:$0xff]
          %480 = vst [vmem:[%s446 + $0x80] sm:$0xff] %v479
          %v481 = vld [vmem:[%s445 + $0x88] sm:$0xff]
          %482 = vst [vmem:[%s446 + $0x88] sm:$0xff] %v481
          %v483 = vld [vmem:[%s445 + $0x90] sm:$0xff]
          %484 = vst [vmem:[%s446 + $0x90] sm:$0xff] %v483
          %v485 = vld [vmem:[%s445 + $0x98] sm:$0xff]
          %486 = vst [vmem:[%s446 + $0x98] sm:$0xff] %v485
          %v487 = vld [vmem:[%s445 + $0xa0] sm:$0xff]
          %488 = vst [vmem:[%s446 + $0xa0] sm:$0xff] %v487
          %v489 = vld [vmem:[%s445 + $0xa8] sm:$0xff]
          %490 = vst [vmem:[%s446 + $0xa8] sm:$0xff] %v489
          %v491 = vld [vmem:[%s445 + $0xb0] sm:$0xff]
          %492 = vst [vmem:[%s446 + $0xb0] sm:$0xff] %v491
          %v493 = vld [vmem:[%s445 + $0xb8] sm:$0xff]
          %494 = vst [vmem:[%s446 + $0xb8] sm:$0xff] %v493
          %v495 = vld [vmem:[%s445 + $0xc0] sm:$0xff]
          %496 = vst [vmem:[%s446 + $0xc0] sm:$0xff] %v495
          %v497 = vld [vmem:[%s445 + $0xc8] sm:$0xff]
          %498 = vst [vmem:[%s446 + $0xc8] sm:$0xff] %v497
          %v499 = vld [vmem:[%s445 + $0xd0] sm:$0xff]
          %500 = vst [vmem:[%s446 + $0xd0] sm:$0xff] %v499
          %v501 = vld [vmem:[%s445 + $0xd8] sm:$0xff]
          %502 = vst [vmem:[%s446 + $0xd8] sm:$0xff] %v501
          %v503 = vld [vmem:[%s445 + $0xe0] sm:$0xff]
          %504 = vst [vmem:[%s446 + $0xe0] sm:$0xff] %v503
          %v505 = vld [vmem:[%s445 + $0xe8] sm:$0xff]
          %506 = vst [vmem:[%s446 + $0xe8] sm:$0xff] %v505
          %v507 = vld [vmem:[%s445 + $0xf0] sm:$0xff]
          %508 = vst [vmem:[%s446 + $0xf0] sm:$0xff] %v507
          %v509 = vld [vmem:[%s445 + $0xf8] sm:$0xff]
          %510 = vst [vmem:[%s446 + $0xf8] sm:$0xff] %v509
        $region142: #{forward.1} parent=136 // loop_footer
          %s444 = sadd.s32 1, %s440
        $region143: #{forward.1} parent=136 // loop_footer_branch
          %439 = sbr.rel target = $region139
        $region144: #{forward.1} parent=136 // loop_exit
          _
      $region137: #{forward.1} parent=121 // pred_fallthru
        _
      %p511 = pneg %p435
      // Predicated region
      $region145: #{forward.1} parent=121 // pred_check
        _
      $region146: #{forward.1} parent=121 // pred_check_branch
        %513 = sbr.rel (%p435) target = $region148
      $region147: #{forward.1} parent=121 // pred_region
        %s514 = sand.u32 256, 7
      $region148: #{forward.1} parent=121 // pred_fallthru
        _
    $region122: #{forward.1} parent=1 // pred_fallthru
      _
    // Predicated region
    $region123: #{forward.1} parent=1 // pred_check
      %p420 = pneg %p416
    $region124: #{forward.1} parent=1 // pred_check_branch
      %422 = sbr.rel (%p420) target = $region126
    $region125: #{forward.1} parent=1 // pred_region
      %s423 = sshllo.u32 0, 256
      loop: start=0, step=1, limit=1
      $region127: #{forward.1} parent=125 // loop_pre_header
        _
      $region128: #{forward.1} parent=125 // loop_header
        %s425 = sphi 0, %s429
        %p426 = scmp.ge.s32.totalorder %s425, 1
        %s430 = sphi %s6, %s6
        %s431 = sphi [#allocation10], [#allocation10]
      $region129: #{forward.1} parent=125 // loop_header_branch
        %428 = sbr.rel (%p426) target = $region133
      $region130: #{forward.1} parent=125 // loop_body
        %v432 = vld [vmem:[%s430] sm:%s423]
        %433 = vst [vmem:[%s431] sm:%s423] %v432
      $region131: #{forward.1} parent=125 // loop_footer
        %s429 = sadd.s32 1, %s425
      $region132: #{forward.1} parent=125 // loop_footer_branch
        %424 = sbr.rel target = $region128
      $region133: #{forward.1} parent=125 // loop_exit
        _
    $region126: #{forward.1} parent=1 // pred_fallthru
      _
    // Predicated region
    $region149: #{forward.1} parent=1 // pred_check
      _
    $region150: #{forward.1} parent=1 // pred_check_branch
      %517 = sbr.rel (0) target = $region152
    $region151: #{forward.1} parent=1 // pred_region
      %518 = vsyncadd %s414, 4096
    $region152: #{forward.1} parent=1 // pred_fallthru
      _
    %v519 = vld [vmem:[%s0] sm:$0xff]
    %v520 = vld [vmem:[%s0 + $0x8] sm:$0xff]
    %v521 = vld [vmem:[%s0 + $0x10] sm:$0xff]
    %v522 = vld [vmem:[%s0 + $0x18] sm:$0xff]
    %v523 = vld [vmem:[%s0 + $0x20] sm:$0xff]
    %v524 = vld [vmem:[%s0 + $0x28] sm:$0xff]
    %v525 = vld [vmem:[%s0 + $0x30] sm:$0xff]
    %v526 = vld [vmem:[%s0 + $0x38] sm:$0xff]
    %v527 = vld [vmem:[%s0 + $0x40] sm:$0xff]
    %v528 = vld [vmem:[%s0 + $0x48] sm:$0xff]
    %v529 = vld [vmem:[%s0 + $0x50] sm:$0xff]
    %v530 = vld [vmem:[%s0 + $0x58] sm:$0xff]
    %v531 = vld [vmem:[%s0 + $0x60] sm:$0xff]
    %v532 = vld [vmem:[%s0 + $0x68] sm:$0xff]
    %v533 = vld [vmem:[%s0 + $0x70] sm:$0xff]
    %v534 = vld [vmem:[%s0 + $0x78] sm:$0xff]
    %v535 = vld [vmem:[%s1] sm:$0xf]
    %v536 = vld [vmem:[%s1 + $0x4] sm:$0xf]
    %v537 = vld [vmem:[%s1 + $0x8] sm:$0xf]
    %v538 = vld [vmem:[%s1 + $0xc] sm:$0xf]
    %v539 = vld [vmem:[%s1 + $0x10] sm:$0xf]
    %v540 = vld [vmem:[%s1 + $0x14] sm:$0xf]
    %v541 = vld [vmem:[%s1 + $0x18] sm:$0xf]
    %v542 = vld [vmem:[%s1 + $0x1c] sm:$0xf]
    %v543 = vld [vmem:[%s1 + $0x20] sm:$0xf]
    %v544 = vld [vmem:[%s1 + $0x24] sm:$0xf]
    %v545 = vld [vmem:[%s1 + $0x28] sm:$0xf]
    %v546 = vld [vmem:[%s1 + $0x2c] sm:$0xf]
    %v547 = vld [vmem:[%s1 + $0x30] sm:$0xf]
    %v548 = vld [vmem:[%s1 + $0x34] sm:$0xf]
    %v549 = vld [vmem:[%s1 + $0x38] sm:$0xf]
    %v550 = vld [vmem:[%s1 + $0x3c] sm:$0xf]
    %v551 = vld [vmem:[%s1 + $0x40] sm:$0xf]
    %v552 = vld [vmem:[%s1 + $0x44] sm:$0xf]
    %v553 = vld [vmem:[%s1 + $0x48] sm:$0xf]
    %v554 = vld [vmem:[%s1 + $0x4c] sm:$0xf]
    %v555 = vld [vmem:[%s1 + $0x50] sm:$0xf]
    %v556 = vld [vmem:[%s1 + $0x54] sm:$0xf]
    %v557 = vld [vmem:[%s1 + $0x58] sm:$0xf]
    %v558 = vld [vmem:[%s1 + $0x5c] sm:$0xf]
    %v559 = vld [vmem:[%s1 + $0x60] sm:$0xf]
    %v560 = vld [vmem:[%s1 + $0x64] sm:$0xf]
    %v561 = vld [vmem:[%s1 + $0x68] sm:$0xf]
    %v562 = vld [vmem:[%s1 + $0x6c] sm:$0xf]
    %v563 = vld [vmem:[%s1 + $0x70] sm:$0xf]
    %v564 = vld [vmem:[%s1 + $0x74] sm:$0xf]
    %v565 = vld [vmem:[%s1 + $0x78] sm:$0xf]
    %v566 = vld [vmem:[%s1 + $0x7c] sm:$0xf]
    %v567 = vld [vmem:[%s2] sm:$0x1]
    %v569 = vlaneseq
    %v570 = vshrl.u32 %v569, 7
    %v571 = vsub.s32 0, %v570
    %v572 = vrot.slane %v567, %v571
    %v590 = vunpack.c.l.b16 %v519
    %v591 = vunpack.c.h.b16 %v519
    %v592 = vunpack.c.l.b16 %v520
    %v593 = vunpack.c.h.b16 %v520
    %v594 = vunpack.c.l.b16 %v521
    %v595 = vunpack.c.h.b16 %v521
    %v596 = vunpack.c.l.b16 %v522
    %v597 = vunpack.c.h.b16 %v522
    %v598 = vunpack.c.l.b16 %v523
    %v599 = vunpack.c.h.b16 %v523
    %v600 = vunpack.c.l.b16 %v524
    %v601 = vunpack.c.h.b16 %v524
    %v602 = vunpack.c.l.b16 %v525
    %v603 = vunpack.c.h.b16 %v525
    %v604 = vunpack.c.l.b16 %v526
    %v605 = vunpack.c.h.b16 %v526
    %v606 = vunpack.c.l.b16 %v527
    %v607 = vunpack.c.h.b16 %v527
    %v608 = vunpack.c.l.b16 %v528
    %v609 = vunpack.c.h.b16 %v528
    %v610 = vunpack.c.l.b16 %v529
    %v611 = vunpack.c.h.b16 %v529
    %v612 = vunpack.c.l.b16 %v530
    %v613 = vunpack.c.h.b16 %v530
    %v614 = vunpack.c.l.b16 %v531
    %v615 = vunpack.c.h.b16 %v531
    %v616 = vunpack.c.l.b16 %v532
    %v617 = vunpack.c.h.b16 %v532
    %v618 = vunpack.c.l.b16 %v533
    %v619 = vunpack.c.h.b16 %v533
    %v620 = vunpack.c.l.b16 %v534
    %v621 = vunpack.c.h.b16 %v534
    %v622 = vpack.c.b16 %v592, %v590
    %v623 = vpack.c.b16 %v593, %v591
    %v624 = vpack.c.b16 %v596, %v594
    %v625 = vpack.c.b16 %v597, %v595
    %v626 = vpack.c.b16 %v600, %v598
    %v627 = vpack.c.b16 %v601, %v599
    %v628 = vpack.c.b16 %v604, %v602
    %v629 = vpack.c.b16 %v605, %v603
    %v630 = vpack.c.b16 %v608, %v606
    %v631 = vpack.c.b16 %v609, %v607
    %v632 = vpack.c.b16 %v612, %v610
    %v633 = vpack.c.b16 %v613, %v611
    %v634 = vpack.c.b16 %v616, %v614
    %v635 = vpack.c.b16 %v617, %v615
    %v636 = vpack.c.b16 %v620, %v618
    %v637 = vpack.c.b16 %v621, %v619
    %v686 = vunpack.c.l.b16 %v535
    %v687 = vunpack.c.l.b16 %v536
    %v688 = vunpack.c.l.b16 %v537
    %v689 = vunpack.c.l.b16 %v538
    %v690 = vunpack.c.l.b16 %v539
    %v691 = vunpack.c.l.b16 %v540
    %v692 = vunpack.c.l.b16 %v541
    %v693 = vunpack.c.l.b16 %v542
    %v694 = vunpack.c.l.b16 %v543
    %v695 = vunpack.c.l.b16 %v544
    %v696 = vunpack.c.l.b16 %v545
    %v697 = vunpack.c.l.b16 %v546
    %v698 = vunpack.c.l.b16 %v547
    %v699 = vunpack.c.l.b16 %v548
    %v700 = vunpack.c.l.b16 %v549
    %v701 = vunpack.c.l.b16 %v550
    %v702 = vunpack.c.l.b16 %v551
    %v703 = vunpack.c.l.b16 %v552
    %v704 = vunpack.c.l.b16 %v553
    %v705 = vunpack.c.l.b16 %v554
    %v706 = vunpack.c.l.b16 %v555
    %v707 = vunpack.c.l.b16 %v556
    %v708 = vunpack.c.l.b16 %v557
    %v709 = vunpack.c.l.b16 %v558
    %v710 = vunpack.c.l.b16 %v559
    %v711 = vunpack.c.l.b16 %v560
    %v712 = vunpack.c.l.b16 %v561
    %v713 = vunpack.c.l.b16 %v562
    %v714 = vunpack.c.l.b16 %v563
    %v715 = vunpack.c.l.b16 %v564
    %v716 = vunpack.c.l.b16 %v565
    %v717 = vunpack.c.l.b16 %v566
    %v718 = vpack.c.b16 %v687, %v686
    %v719 = vpack.c.b16 %v689, %v688
    %v720 = vpack.c.b16 %v691, %v690
    %v721 = vpack.c.b16 %v693, %v692
    %v722 = vpack.c.b16 %v695, %v694
    %v723 = vpack.c.b16 %v697, %v696
    %v724 = vpack.c.b16 %v699, %v698
    %v725 = vpack.c.b16 %v701, %v700
    %v726 = vpack.c.b16 %v703, %v702
    %v727 = vpack.c.b16 %v705, %v704
    %v728 = vpack.c.b16 %v707, %v706
    %v729 = vpack.c.b16 %v709, %v708
    %v730 = vpack.c.b16 %v711, %v710
    %v731 = vpack.c.b16 %v713, %v712
    %v732 = vpack.c.b16 %v715, %v714
    %v733 = vpack.c.b16 %v717, %v716
    %750 = vmatprep.subr.bf16.mxu0 0
    %751 = vmatpush1.bf16.msra.mxu0 %v718
    %752 = vmatprep.subr.bf16.mxu0 0
    %753 = vmatpush1.bf16.msra.mxu0 %v719
    %754 = vmatprep.subr.bf16.mxu0 0
    %755 = vmatpush1.bf16.msra.mxu0 %v720
    %756 = vmatprep.subr.bf16.mxu0 0
    %757 = vmatpush1.bf16.msra.mxu0 %v721
    %758 = vmatprep.subr.bf16.mxu0 0
    %759 = vmatpush1.bf16.msra.mxu0 %v722
    %760 = vmatprep.subr.bf16.mxu0 0
    %761 = vmatpush1.bf16.msra.mxu0 %v723
    %762 = vmatprep.subr.bf16.mxu0 0
    %763 = vmatpush1.bf16.msra.mxu0 %v724
    %764 = vmatprep.subr.bf16.mxu0 0
    %765 = vmatpush1.bf16.msra.mxu0 %v725
    %766 = vmatprep.subr.bf16.mxu0 0
    %767 = vmatpush1.bf16.msra.mxu0 %v726
    %768 = vmatprep.subr.bf16.mxu0 0
    %769 = vmatpush1.bf16.msra.mxu0 %v727
    %770 = vmatprep.subr.bf16.mxu0 0
    %771 = vmatpush1.bf16.msra.mxu0 %v728
    %772 = vmatprep.subr.bf16.mxu0 0
    %773 = vmatpush1.bf16.msra.mxu0 %v729
    %774 = vmatprep.subr.bf16.mxu0 0
    %775 = vmatpush1.bf16.msra.mxu0 %v730
    %776 = vmatprep.subr.bf16.mxu0 0
    %777 = vmatpush1.bf16.msra.mxu0 %v731
    %778 = vmatprep.subr.bf16.mxu0 0
    %779 = vmatpush1.bf16.msra.mxu0 %v732
    %780 = vmatprep.subr.bf16.mxu0 0
    %781 = vmatpush1.bf16.msra.mxu0 %v733
    %782 = vmatprep.mubr.bf16.mxu0 %v623
    %783 = vmatmul.mubr.bf16.gmra.mrb[0].mxu0 %v622
    %v784 = vpop.f32.mrb[0].mxu0
    %v785 = vadd.f32 %v572, %v784
    %v786 = vpop.f32.mrb[0].mxu0
    %v787 = vpop.f32.mrb[0].mxu0
    %v788 = vadd.f32 %v572, %v787
    %v789 = vpop.f32.mrb[0].mxu0
    %790 = vmatprep.mubr.bf16.mxu0 %v625
    %791 = vmatmul.mubr.bf16.gmra.mrb[0].mxu0 %v624
    %v792 = vpop.f32.mrb[0].mxu0
    %v793 = vadd.f32 %v572, %v792
    %v794 = vpop.f32.mrb[0].mxu0
    %v795 = vpop.f32.mrb[0].mxu0
    %v796 = vadd.f32 %v572, %v795
    %v797 = vpop.f32.mrb[0].mxu0
    %798 = vmatprep.mubr.bf16.mxu0 %v627
    %799 = vmatmul.mubr.bf16.gmra.mrb[0].mxu0 %v626
    %v800 = vpop.f32.mrb[0].mxu0
    %v801 = vadd.f32 %v572, %v800
    %v802 = vpop.f32.mrb[0].mxu0
    %v803 = vpop.f32.mrb[0].mxu0
    %v804 = vadd.f32 %v572, %v803
    %v805 = vpop.f32.mrb[0].mxu0
    %806 = vmatprep.mubr.bf16.mxu0 %v629
    %807 = vmatmul.mubr.bf16.gmra.mrb[0].mxu0 %v628
    %v808 = vpop.f32.mrb[0].mxu0
    %v809 = vadd.f32 %v572, %v808
    %v810 = vpop.f32.mrb[0].mxu0
    %v811 = vpop.f32.mrb[0].mxu0
    %v812 = vadd.f32 %v572, %v811
    %v813 = vpop.f32.mrb[0].mxu0
    %814 = vmatprep.mubr.bf16.mxu0 %v631
    %815 = vmatmul.mubr.bf16.gmra.mrb[0].mxu0 %v630
    %v816 = vpop.f32.mrb[0].mxu0
    %v817 = vadd.f32 %v572, %v816
    %v818 = vpop.f32.mrb[0].mxu0
    %v819 = vpop.f32.mrb[0].mxu0
    %v820 = vadd.f32 %v572, %v819
    %v821 = vpop.f32.mrb[0].mxu0
    %822 = vmatprep.mubr.bf16.mxu0 %v633
    %823 = vmatmul.mubr.bf16.gmra.mrb[0].mxu0 %v632
    %v824 = vpop.f32.mrb[0].mxu0
    %v825 = vadd.f32 %v572, %v824
    %v826 = vpop.f32.mrb[0].mxu0
    %v827 = vpop.f32.mrb[0].mxu0
    %v828 = vadd.f32 %v572, %v827
    %v829 = vpop.f32.mrb[0].mxu0
    %830 = vmatprep.mubr.bf16.mxu0 %v635
    %831 = vmatmul.mubr.bf16.gmra.mrb[0].mxu0 %v634
    %v832 = vpop.f32.mrb[0].mxu0
    %v833 = vadd.f32 %v572, %v832
    %v834 = vpop.f32.mrb[0].mxu0
    %v835 = vpop.f32.mrb[0].mxu0
    %v836 = vadd.f32 %v572, %v835
    %v837 = vpop.f32.mrb[0].mxu0
    %838 = vmatprep.mubr.bf16.mxu0 %v637
    %839 = vmatmul.mubr.bf16.gmra.mrb[0].mxu0 %v636
    %v840 = vpop.f32.mrb[0].mxu0
    %v841 = vadd.f32 %v572, %v840
    %v842 = vpop.f32.mrb[0].mxu0
    %v843 = vpop.f32.mrb[0].mxu0
    %v844 = vadd.f32 %v572, %v843
    %v845 = vpop.f32.mrb[0].mxu0
    %846 = vdwg.mxu0
    %v847 = vmax.f32 %v785, 0.0
    %v848 = vmax.f32 %v788, 0.0
    %v849 = vmax.f32 %v793, 0.0
    %v850 = vmax.f32 %v796, 0.0
    %v851 = vmax.f32 %v801, 0.0
    %v852 = vmax.f32 %v804, 0.0
    %v853 = vmax.f32 %v809, 0.0
    %v854 = vmax.f32 %v812, 0.0
    %v855 = vmax.f32 %v817, 0.0
    %v856 = vmax.f32 %v820, 0.0
    %v857 = vmax.f32 %v825, 0.0
    %v858 = vmax.f32 %v828, 0.0
    %v859 = vmax.f32 %v833, 0.0
    %v860 = vmax.f32 %v836, 0.0
    %v861 = vmax.f32 %v841, 0.0
    %v862 = vmax.f32 %v844, 0.0
    %vm863 = vcmask 261120
    %864 = vst.msk [vmem:[#allocation2] sm:$0xff] %vm863, %v847
    %865 = vst.msk [vmem:[#allocation2 + $0x8] sm:$0xff] %vm863, %v848
    %866 = vst.msk [vmem:[#allocation2 + $0x10] sm:$0xff] %vm863, %v849
    %867 = vst.msk [vmem:[#allocation2 + $0x18] sm:$0xff] %vm863, %v850
    %868 = vst.msk [vmem:[#allocation2 + $0x20] sm:$0xff] %vm863, %v851
    %869 = vst.msk [vmem:[#allocation2 + $0x28] sm:$0xff] %vm863, %v852
    %870 = vst.msk [vmem:[#allocation2 + $0x30] sm:$0xff] %vm863, %v853
    %871 = vst.msk [vmem:[#allocation2 + $0x38] sm:$0xff] %vm863, %v854
    %872 = vst.msk [vmem:[#allocation2 + $0x40] sm:$0xff] %vm863, %v855
    %873 = vst.msk [vmem:[#allocation2 + $0x48] sm:$0xff] %vm863, %v856
    %874 = vst.msk [vmem:[#allocation2 + $0x50] sm:$0xff] %vm863, %v857
    %875 = vst.msk [vmem:[#allocation2 + $0x58] sm:$0xff] %vm863, %v858
    %876 = vst.msk [vmem:[#allocation2 + $0x60] sm:$0xff] %vm863, %v859
    %877 = vst.msk [vmem:[#allocation2 + $0x68] sm:$0xff] %vm863, %v860
    %878 = vst.msk [vmem:[#allocation2 + $0x70] sm:$0xff] %vm863, %v861
    %879 = vst.msk [vmem:[#allocation2 + $0x78] sm:$0xff] %vm863, %v862
    %v880 = vld [vmem:[#allocation2] ss:$2 sm:$0x7]
    %vm881 = vcmask 256000
    %882 = vst.msk [vmem:[#allocation3] sm:$0x7] %vm881, %v880
    %s883 = scalar_lea.vmem [#allocation2], 16
    %v884 = vld [vmem:[%s883] ss:$2 sm:$0x7]
    %v886 = vrot.slane %v884, 5
    %vm888 = vcmask 259075
    %889 = vst.msk [vmem:[#allocation3] sm:$0x38] %vm888, %v886
    %s890 = scalar_lea.vmem [#allocation2], 32
    %v891 = vld [vmem:[%s890] ss:$2 sm:$0x7]
    %v893 = vrot.slane %v891, 2
    %vm895 = vcmask 261126
    %896 = vst.msk [vmem:[#allocation3] sm:$0xc0] %vm895, %v893
    %vm897 = vcmask 253952
    %898 = vst.msk [vmem:[#allocation3 + $0x20] sm:$0x1] %vm897, %v893
    %s899 = scalar_lea.vmem [#allocation2], 64
    %v900 = vld [vmem:[%s899] ss:$2 sm:$0x7]
    %v902 = vrot.slane %v900, 7
    %vm904 = vcmask 257025
    %905 = vst.msk [vmem:[#allocation3 + $0x20] sm:$0xe] %vm904, %v902
    %s906 = scalar_lea.vmem [#allocation2], 80
    %v907 = vld [vmem:[%s906] ss:$2 sm:$0x7]
    %v909 = vrot.slane %v907, 4
    %vm911 = vcmask 260100
    %912 = vst.msk [vmem:[#allocation3 + $0x20] sm:$0x70] %vm911, %v909
    %s913 = scalar_lea.vmem [#allocation2], 96
    %v914 = vld [vmem:[%s913] ss:$2 sm:$0x7]
    %v916 = vrot.slane %v914, 1
    %vm918 = vcmask 261127
    %919 = vst.msk [vmem:[#allocation3 + $0x20] sm:$0x80] %vm918, %v916
    %vm920 = vcmask 254976
    %921 = vst.msk [vmem:[#allocation3 + $0x40] sm:$0x3] %vm920, %v916
    %s922 = scalar_lea.vmem [#allocation2], 1
    %v923 = vld [vmem:[%s922] ss:$2 sm:$0x7]
    %925 = vrot.lane.b32.xlu0 %v923, 32
    %v926 = vpop.permute.xlu0 %925
    %vm928 = vcmask 518400
    %929 = vst.msk [vmem:[#allocation3] sm:$0x7] %vm928, %v926
    %s930 = scalar_lea.vmem [#allocation2], 17
    %v931 = vld [vmem:[%s930] ss:$2 sm:$0x7]
    %v933 = vrot.slane %v931, 5
    %934 = vrot.lane.b32.xlu0 %v933, 32
    %v935 = vpop.permute.xlu0 %934
    %vm937 = vcmask 521475
    %938 = vst.msk [vmem:[#allocation3] sm:$0x38] %vm937, %v935
    %s939 = scalar_lea.vmem [#allocation2], 33
    %v940 = vld [vmem:[%s939] ss:$2 sm:$0x7]
    %v942 = vrot.slane %v940, 2
    %943 = vrot.lane.b32.xlu0 %v942, 32
    %v944 = vpop.permute.xlu0 %943
    %vm946 = vcmask 523526
    %947 = vst.msk [vmem:[#allocation3] sm:$0xc0] %vm946, %v944
    %vm948 = vcmask 516352
    %949 = vst.msk [vmem:[#allocation3 + $0x20] sm:$0x1] %vm948, %v944
    %s950 = scalar_lea.vmem [#allocation2], 65
    %v951 = vld [vmem:[%s950] ss:$2 sm:$0x7]
    %v953 = vrot.slane %v951, 7
    %954 = vrot.lane.b32.xlu0 %v953, 32
    %v955 = vpop.permute.xlu0 %954
    %vm957 = vcmask 519425
    %958 = vst.msk [vmem:[#allocation3 + $0x20] sm:$0xe] %vm957, %v955
    %s959 = scalar_lea.vmem [#allocation2], 81
    %v960 = vld [vmem:[%s959] ss:$2 sm:$0x7]
    %v962 = vrot.slane %v960, 4
    %963 = vrot.lane.b32.xlu0 %v962, 32
    %v964 = vpop.permute.xlu0 %963
    %vm966 = vcmask 522500
    %967 = vst.msk [vmem:[#allocation3 + $0x20] sm:$0x70] %vm966, %v964
    %s968 = scalar_lea.vmem [#allocation2], 97
    %v969 = vld [vmem:[%s968] ss:$2 sm:$0x7]
    %v971 = vrot.slane %v969, 1
    %972 = vrot.lane.b32.xlu0 %v971, 32
    %v973 = vpop.permute.xlu0 %972
    %vm975 = vcmask 523527
    %976 = vst.msk [vmem:[#allocation3 + $0x20] sm:$0x80] %vm975, %v973
    %vm977 = vcmask 517376
    %978 = vst.msk [vmem:[#allocation3 + $0x40] sm:$0x3] %vm977, %v973
    %s979 = scalar_lea.vmem [#allocation2], 2
    %v980 = vld [vmem:[%s979] ss:$2 sm:$0x7]
    %982 = vrot.lane.b32.xlu0 %v980, 64
    %v983 = vpop.permute.xlu0 %982
    %vm985 = vcmask 780800
    %986 = vst.msk [vmem:[#allocation3] sm:$0x7] %vm985, %v983
    %s987 = scalar_lea.vmem [#allocation2], 18
    %v988 = vld [vmem:[%s987] ss:$2 sm:$0x7]
    %v990 = vrot.slane %v988, 5
    %991 = vrot.lane.b32.xlu0 %v990, 64
    %v992 = vpop.permute.xlu0 %991
    %vm994 = vcmask 783875
    %995 = vst.msk [vmem:[#allocation3] sm:$0x38] %vm994, %v992
    %s996 = scalar_lea.vmem [#allocation2], 34
    %v997 = vld [vmem:[%s996] ss:$2 sm:$0x7]
    %v999 = vrot.slane %v997, 2
    %1000 = vrot.lane.b32.xlu0 %v999, 64
    %v1001 = vpop.permute.xlu0 %1000
    %vm1003 = vcmask 785926
    %1004 = vst.msk [vmem:[#allocation3] sm:$0xc0] %vm1003, %v1001
    %vm1005 = vcmask 778752
    %1006 = vst.msk [vmem:[#allocation3 + $0x20] sm:$0x1] %vm1005, %v1001
    %s1007 = scalar_lea.vmem [#allocation2], 66
    %v1008 = vld [vmem:[%s1007] ss:$2 sm:$0x7]
    %v1010 = vrot.slane %v1008, 7
    %1011 = vrot.lane.b32.xlu0 %v1010, 64
    %v1012 = vpop.permute.xlu0 %1011
    %vm1014 = vcmask 781825
    %1015 = vst.msk [vmem:[#allocation3 + $0x20] sm:$0xe] %vm1014, %v1012
    %s1016 = scalar_lea.vmem [#allocation2], 82
    %v1017 = vld [vmem:[%s1016] ss:$2 sm:$0x7]
    %v1019 = vrot.slane %v1017, 4
    %1020 = vrot.lane.b32.xlu0 %v1019, 64
    %v1021 = vpop.permute.xlu0 %1020
    %vm1023 = vcmask 784900
    %1024 = vst.msk [vmem:[#allocation3 + $0x20] sm:$0x70] %vm1023, %v1021
    %s1025 = scalar_lea.vmem [#allocation2], 98
    %v1026 = vld [vmem:[%s1025] ss:$2 sm:$0x7]
    %v1028 = vrot.slane %v1026, 1
    %1029 = vrot.lane.b32.xlu0 %v1028, 64
    %v1030 = vpop.permute.xlu0 %1029
    %vm1032 = vcmask 785927
    %1033 = vst.msk [vmem:[#allocation3 + $0x20] sm:$0x80] %vm1032, %v1030
    %vm1034 = vcmask 779776
    %1035 = vst.msk [vmem:[#allocation3 + $0x40] sm:$0x3] %vm1034, %v1030
    %s1036 = scalar_lea.vmem [#allocation2], 3
    %v1037 = vld [vmem:[%s1036] ss:$2 sm:$0x7]
    %1039 = vrot.lane.b32.xlu0 %v1037, 96
    %v1040 = vpop.permute.xlu0 %1039
    %vm1042 = vcmask 1043200
    %1043 = vst.msk [vmem:[#allocation3] sm:$0x7] %vm1042, %v1040
    %s1044 = scalar_lea.vmem [#allocation2], 19
    %v1045 = vld [vmem:[%s1044] ss:$2 sm:$0x7]
    %v1047 = vrot.slane %v1045, 5
    %1048 = vrot.lane.b32.xlu0 %v1047, 96
    %v1049 = vpop.permute.xlu0 %1048
    %vm1051 = vcmask 1046275
    %1052 = vst.msk [vmem:[#allocation3] sm:$0x38] %vm1051, %v1049
    %s1053 = scalar_lea.vmem [#allocation2], 35
    %v1054 = vld [vmem:[%s1053] ss:$2 sm:$0x7]
    %v1056 = vrot.slane %v1054, 2
    %1057 = vrot.lane.b32.xlu0 %v1056, 96
    %v1058 = vpop.permute.xlu0 %1057
    %vm1060 = vcmask 1048326
    %1061 = vst.msk [vmem:[#allocation3] sm:$0xc0] %vm1060, %v1058
    %vm1062 = vcmask 1041152
    %1063 = vst.msk [vmem:[#allocation3 + $0x20] sm:$0x1] %vm1062, %v1058
    %s1064 = scalar_lea.vmem [#allocation2], 67
    %v1065 = vld [vmem:[%s1064] ss:$2 sm:$0x7]
    %v1067 = vrot.slane %v1065, 7
    %1068 = vrot.lane.b32.xlu0 %v1067, 96
    %v1069 = vpop.permute.xlu0 %1068
    %vm1071 = vcmask 1044225
    %1072 = vst.msk [vmem:[#allocation3 + $0x20] sm:$0xe] %vm1071, %v1069
    %s1073 = scalar_lea.vmem [#allocation2], 83
    %v1074 = vld [vmem:[%s1073] ss:$2 sm:$0x7]
    %v1076 = vrot.slane %v1074, 4
    %1077 = vrot.lane.b32.xlu0 %v1076, 96
    %v1078 = vpop.permute.xlu0 %1077
    %vm1080 = vcmask 1047300
    %1081 = vst.msk [vmem:[#allocation3 + $0x20] sm:$0x70] %vm1080, %v1078
    %s1082 = scalar_lea.vmem [#allocation2], 99
    %v1083 = vld [vmem:[%s1082] ss:$2 sm:$0x7]
    %v1085 = vrot.slane %v1083, 1
    %1086 = vrot.lane.b32.xlu0 %v1085, 96
    %v1087 = vpop.permute.xlu0 %1086
    %vm1089 = vcmask 1048327
    %1090 = vst.msk [vmem:[#allocation3 + $0x20] sm:$0x80] %vm1089, %v1087
    %vm1091 = vcmask 1042176
    %1092 = vst.msk [vmem:[#allocation3 + $0x40] sm:$0x3] %vm1091, %v1087
    %s1093 = scalar_lea.vmem [#allocation2], 8
    %v1094 = vld [vmem:[%s1093] ss:$2 sm:$0x7]
    %1095 = vst.msk [vmem:[#allocation3 + $0x8] sm:$0x7] %vm881, %v1094
    %s1096 = scalar_lea.vmem [#allocation2], 24
    %v1097 = vld [vmem:[%s1096] ss:$2 sm:$0x7]
    %v1099 = vrot.slane %v1097, 5
    %1101 = vst.msk [vmem:[#allocation3 + $0x8] sm:$0x38] %vm888, %v1099
    %s1102 = scalar_lea.vmem [#allocation2], 40
    %v1103 = vld [vmem:[%s1102] ss:$2 sm:$0x7]
    %v1105 = vrot.slane %v1103, 2
    %1107 = vst.msk [vmem:[#allocation3 + $0x8] sm:$0xc0] %vm895, %v1105
    %1108 = vst.msk [vmem:[#allocation3 + $0x28] sm:$0x1] %vm897, %v1105
    %s1109 = scalar_lea.vmem [#allocation2], 72
    %v1110 = vld [vmem:[%s1109] ss:$2 sm:$0x7]
    %v1112 = vrot.slane %v1110, 7
    %1114 = vst.msk [vmem:[#allocation3 + $0x28] sm:$0xe] %vm904, %v1112
    %s1115 = scalar_lea.vmem [#allocation2], 88
    %v1116 = vld [vmem:[%s1115] ss:$2 sm:$0x7]
    %v1118 = vrot.slane %v1116, 4
    %1120 = vst.msk [vmem:[#allocation3 + $0x28] sm:$0x70] %vm911, %v1118
    %s1121 = scalar_lea.vmem [#allocation2], 104
    %v1122 = vld [vmem:[%s1121] ss:$2 sm:$0x7]
    %v1124 = vrot.slane %v1122, 1
    %1126 = vst.msk [vmem:[#allocation3 + $0x28] sm:$0x80] %vm918, %v1124
    %1127 = vst.msk [vmem:[#allocation3 + $0x48] sm:$0x3] %vm920, %v1124
    %s1128 = scalar_lea.vmem [#allocation2], 9
    %v1129 = vld [vmem:[%s1128] ss:$2 sm:$0x7]
    %1131 = vrot.lane.b32.xlu0 %v1129, 32
    %v1132 = vpop.permute.xlu0 %1131
    %1134 = vst.msk [vmem:[#allocation3 + $0x8] sm:$0x7] %vm928, %v1132
    %s1135 = scalar_lea.vmem [#allocation2], 25
    %v1136 = vld [vmem:[%s1135] ss:$2 sm:$0x7]
    %v1138 = vrot.slane %v1136, 5
    %1139 = vrot.lane.b32.xlu0 %v1138, 32
    %v1140 = vpop.permute.xlu0 %1139
    %1142 = vst.msk [vmem:[#allocation3 + $0x8] sm:$0x38] %vm937, %v1140
    %s1143 = scalar_lea.vmem [#allocation2], 41
    %v1144 = vld [vmem:[%s1143] ss:$2 sm:$0x7]
    %v1146 = vrot.slane %v1144, 2
    %1147 = vrot.lane.b32.xlu0 %v1146, 32
    %v1148 = vpop.permute.xlu0 %1147
    %1150 = vst.msk [vmem:[#allocation3 + $0x8] sm:$0xc0] %vm946, %v1148
    %1151 = vst.msk [vmem:[#allocation3 + $0x28] sm:$0x1] %vm948, %v1148
    %s1152 = scalar_lea.vmem [#allocation2], 73
    %v1153 = vld [vmem:[%s1152] ss:$2 sm:$0x7]
    %v1155 = vrot.slane %v1153, 7
    %1156 = vrot.lane.b32.xlu0 %v1155, 32
    %v1157 = vpop.permute.xlu0 %1156
    %1159 = vst.msk [vmem:[#allocation3 + $0x28] sm:$0xe] %vm957, %v1157
    %s1160 = scalar_lea.vmem [#allocation2], 89
    %v1161 = vld [vmem:[%s1160] ss:$2 sm:$0x7]
    %v1163 = vrot.slane %v1161, 4
    %1164 = vrot.lane.b32.xlu0 %v1163, 32
    %v1165 = vpop.permute.xlu0 %1164
    %1167 = vst.msk [vmem:[#allocation3 + $0x28] sm:$0x70] %vm966, %v1165
    %s1168 = scalar_lea.vmem [#allocation2], 105
    %v1169 = vld [vmem:[%s1168] ss:$2 sm:$0x7]
    %v1171 = vrot.slane %v1169, 1
    %1172 = vrot.lane.b32.xlu0 %v1171, 32
    %v1173 = vpop.permute.xlu0 %1172
    %1175 = vst.msk [vmem:[#allocation3 + $0x28] sm:$0x80] %vm975, %v1173
    %1176 = vst.msk [vmem:[#allocation3 + $0x48] sm:$0x3] %vm977, %v1173
    %s1177 = scalar_lea.vmem [#allocation2], 10
    %v1178 = vld [vmem:[%s1177] ss:$2 sm:$0x7]
    %1180 = vrot.lane.b32.xlu0 %v1178, 64
    %v1181 = vpop.permute.xlu0 %1180
    %1183 = vst.msk [vmem:[#allocation3 + $0x8] sm:$0x7] %vm985, %v1181
    %s1184 = scalar_lea.vmem [#allocation2], 26
    %v1185 = vld [vmem:[%s1184] ss:$2 sm:$0x7]
    %v1187 = vrot.slane %v1185, 5
    %1188 = vrot.lane.b32.xlu0 %v1187, 64
    %v1189 = vpop.permute.xlu0 %1188
    %1191 = vst.msk [vmem:[#allocation3 + $0x8] sm:$0x38] %vm994, %v1189
    %s1192 = scalar_lea.vmem [#allocation2], 42
    %v1193 = vld [vmem:[%s1192] ss:$2 sm:$0x7]
    %v1195 = vrot.slane %v1193, 2
    %1196 = vrot.lane.b32.xlu0 %v1195, 64
    %v1197 = vpop.permute.xlu0 %1196
    %1199 = vst.msk [vmem:[#allocation3 + $0x8] sm:$0xc0] %vm1003, %v1197
    %1200 = vst.msk [vmem:[#allocation3 + $0x28] sm:$0x1] %vm1005, %v1197
    %s1201 = scalar_lea.vmem [#allocation2], 74
    %v1202 = vld [vmem:[%s1201] ss:$2 sm:$0x7]
    %v1204 = vrot.slane %v1202, 7
    %1205 = vrot.lane.b32.xlu0 %v1204, 64
    %v1206 = vpop.permute.xlu0 %1205
    %1208 = vst.msk [vmem:[#allocation3 + $0x28] sm:$0xe] %vm1014, %v1206
    %s1209 = scalar_lea.vmem [#allocation2], 90
    %v1210 = vld [vmem:[%s1209] ss:$2 sm:$0x7]
    %v1212 = vrot.slane %v1210, 4
    %1213 = vrot.lane.b32.xlu0 %v1212, 64
    %v1214 = vpop.permute.xlu0 %1213
    %1216 = vst.msk [vmem:[#allocation3 + $0x28] sm:$0x70] %vm1023, %v1214
    %s1217 = scalar_lea.vmem [#allocation2], 106
    %v1218 = vld [vmem:[%s1217] ss:$2 sm:$0x7]
    %v1220 = vrot.slane %v1218, 1
    %1221 = vrot.lane.b32.xlu0 %v1220, 64
    %v1222 = vpop.permute.xlu0 %1221
    %1224 = vst.msk [vmem:[#allocation3 + $0x28] sm:$0x80] %vm1032, %v1222
    %1225 = vst.msk [vmem:[#allocation3 + $0x48] sm:$0x3] %vm1034, %v1222
    %s1226 = scalar_lea.vmem [#allocation2], 11
    %v1227 = vld [vmem:[%s1226] ss:$2 sm:$0x7]
    %1229 = vrot.lane.b32.xlu0 %v1227, 96
    %v1230 = vpop.permute.xlu0 %1229
    %1232 = vst.msk [vmem:[#allocation3 + $0x8] sm:$0x7] %vm1042, %v1230
    %s1233 = scalar_lea.vmem [#allocation2], 27
    %v1234 = vld [vmem:[%s1233] ss:$2 sm:$0x7]
    %v1236 = vrot.slane %v1234, 5
    %1237 = vrot.lane.b32.xlu0 %v1236, 96
    %v1238 = vpop.permute.xlu0 %1237
    %1240 = vst.msk [vmem:[#allocation3 + $0x8] sm:$0x38] %vm1051, %v1238
    %s1241 = scalar_lea.vmem [#allocation2], 43
    %v1242 = vld [vmem:[%s1241] ss:$2 sm:$0x7]
    %v1244 = vrot.slane %v1242, 2
    %1245 = vrot.lane.b32.xlu0 %v1244, 96
    %v1246 = vpop.permute.xlu0 %1245
    %1248 = vst.msk [vmem:[#allocation3 + $0x8] sm:$0xc0] %vm1060, %v1246
    %1249 = vst.msk [vmem:[#allocation3 + $0x28] sm:$0x1] %vm1062, %v1246
    %s1250 = scalar_lea.vmem [#allocation2], 75
    %v1251 = vld [vmem:[%s1250] ss:$2 sm:$0x7]
    %v1253 = vrot.slane %v1251, 7
    %1254 = vrot.lane.b32.xlu0 %v1253, 96
    %v1255 = vpop.permute.xlu0 %1254
    %1257 = vst.msk [vmem:[#allocation3 + $0x28] sm:$0xe] %vm1071, %v1255
    %s1258 = scalar_lea.vmem [#allocation2], 91
    %v1259 = vld [vmem:[%s1258] ss:$2 sm:$0x7]
    %v1261 = vrot.slane %v1259, 4
    %1262 = vrot.lane.b32.xlu0 %v1261, 96
    %v1263 = vpop.permute.xlu0 %1262
    %1265 = vst.msk [vmem:[#allocation3 + $0x28] sm:$0x70] %vm1080, %v1263
    %s1266 = scalar_lea.vmem [#allocation2], 107
    %v1267 = vld [vmem:[%s1266] ss:$2 sm:$0x7]
    %v1269 = vrot.slane %v1267, 1
    %1270 = vrot.lane.b32.xlu0 %v1269, 96
    %v1271 = vpop.permute.xlu0 %1270
    %1273 = vst.msk [vmem:[#allocation3 + $0x28] sm:$0x80] %vm1089, %v1271
    %1274 = vst.msk [vmem:[#allocation3 + $0x48] sm:$0x3] %vm1091, %v1271
    %v1275 = vld [vmem:[%s883] ss:$2 sm:$0x7]
    %1276 = vst.msk [vmem:[#allocation3 + $0x10] sm:$0x7] %vm881, %v1275
    %v1277 = vld [vmem:[%s890] ss:$2 sm:$0x7]
    %v1279 = vrot.slane %v1277, 5
    %1281 = vst.msk [vmem:[#allocation3 + $0x10] sm:$0x38] %vm888, %v1279
    %s1282 = scalar_lea.vmem [#allocation2], 48
    %v1283 = vld [vmem:[%s1282] ss:$2 sm:$0x7]
    %v1285 = vrot.slane %v1283, 2
    %1287 = vst.msk [vmem:[#allocation3 + $0x10] sm:$0xc0] %vm895, %v1285
    %1288 = vst.msk [vmem:[#allocation3 + $0x30] sm:$0x1] %vm897, %v1285
    %v1289 = vld [vmem:[%s906] ss:$2 sm:$0x7]
    %v1291 = vrot.slane %v1289, 7
    %1293 = vst.msk [vmem:[#allocation3 + $0x30] sm:$0xe] %vm904, %v1291
    %v1294 = vld [vmem:[%s913] ss:$2 sm:$0x7]
    %v1296 = vrot.slane %v1294, 4
    %1298 = vst.msk [vmem:[#allocation3 + $0x30] sm:$0x70] %vm911, %v1296
    %s1299 = scalar_lea.vmem [#allocation2], 112
    %v1300 = vld [vmem:[%s1299] ss:$2 sm:$0x7]
    %v1302 = vrot.slane %v1300, 1
    %1304 = vst.msk [vmem:[#allocation3 + $0x30] sm:$0x80] %vm918, %v1302
    %1305 = vst.msk [vmem:[#allocation3 + $0x50] sm:$0x3] %vm920, %v1302
    %v1306 = vld [vmem:[%s930] ss:$2 sm:$0x7]
    %1308 = vrot.lane.b32.xlu0 %v1306, 32
    %v1309 = vpop.permute.xlu0 %1308
    %1311 = vst.msk [vmem:[#allocation3 + $0x10] sm:$0x7] %vm928, %v1309
    %v1312 = vld [vmem:[%s939] ss:$2 sm:$0x7]
    %v1314 = vrot.slane %v1312, 5
    %1315 = vrot.lane.b32.xlu0 %v1314, 32
    %v1316 = vpop.permute.xlu0 %1315
    %1318 = vst.msk [vmem:[#allocation3 + $0x10] sm:$0x38] %vm937, %v1316
    %s1319 = scalar_lea.vmem [#allocation2], 49
    %v1320 = vld [vmem:[%s1319] ss:$2 sm:$0x7]
    %v1322 = vrot.slane %v1320, 2
    %1323 = vrot.lane.b32.xlu0 %v1322, 32
    %v1324 = vpop.permute.xlu0 %1323
    %1326 = vst.msk [vmem:[#allocation3 + $0x10] sm:$0xc0] %vm946, %v1324
    %1327 = vst.msk [vmem:[#allocation3 + $0x30] sm:$0x1] %vm948, %v1324
    %v1328 = vld [vmem:[%s959] ss:$2 sm:$0x7]
    %v1330 = vrot.slane %v1328, 7
    %1331 = vrot.lane.b32.xlu0 %v1330, 32
    %v1332 = vpop.permute.xlu0 %1331
    %1334 = vst.msk [vmem:[#allocation3 + $0x30] sm:$0xe] %vm957, %v1332
    %v1335 = vld [vmem:[%s968] ss:$2 sm:$0x7]
    %v1337 = vrot.slane %v1335, 4
    %1338 = vrot.lane.b32.xlu0 %v1337, 32
    %v1339 = vpop.permute.xlu0 %1338
    %1341 = vst.msk [vmem:[#allocation3 + $0x30] sm:$0x70] %vm966, %v1339
    %s1342 = scalar_lea.vmem [#allocation2], 113
    %v1343 = vld [vmem:[%s1342] ss:$2 sm:$0x7]
    %v1345 = vrot.slane %v1343, 1
    %1346 = vrot.lane.b32.xlu0 %v1345, 32
    %v1347 = vpop.permute.xlu0 %1346
    %1349 = vst.msk [vmem:[#allocation3 + $0x30] sm:$0x80] %vm975, %v1347
    %1350 = vst.msk [vmem:[#allocation3 + $0x50] sm:$0x3] %vm977, %v1347
    %v1351 = vld [vmem:[%s987] ss:$2 sm:$0x7]
    %1353 = vrot.lane.b32.xlu0 %v1351, 64
    %v1354 = vpop.permute.xlu0 %1353
    %1356 = vst.msk [vmem:[#allocation3 + $0x10] sm:$0x7] %vm985, %v1354
    %v1357 = vld [vmem:[%s996] ss:$2 sm:$0x7]
    %v1359 = vrot.slane %v1357, 5
    %1360 = vrot.lane.b32.xlu0 %v1359, 64
    %v1361 = vpop.permute.xlu0 %1360
    %1363 = vst.msk [vmem:[#allocation3 + $0x10] sm:$0x38] %vm994, %v1361
    %s1364 = scalar_lea.vmem [#allocation2], 50
    %v1365 = vld [vmem:[%s1364] ss:$2 sm:$0x7]
    %v1367 = vrot.slane %v1365, 2
    %1368 = vrot.lane.b32.xlu0 %v1367, 64
    %v1369 = vpop.permute.xlu0 %1368
    %1371 = vst.msk [vmem:[#allocation3 + $0x10] sm:$0xc0] %vm1003, %v1369
    %1372 = vst.msk [vmem:[#allocation3 + $0x30] sm:$0x1] %vm1005, %v1369
    %v1373 = vld [vmem:[%s1016] ss:$2 sm:$0x7]
    %v1375 = vrot.slane %v1373, 7
    %1376 = vrot.lane.b32.xlu0 %v1375, 64
    %v1377 = vpop.permute.xlu0 %1376
    %1379 = vst.msk [vmem:[#allocation3 + $0x30] sm:$0xe] %vm1014, %v1377
    %v1380 = vld [vmem:[%s1025] ss:$2 sm:$0x7]
    %v1382 = vrot.slane %v1380, 4
    %1383 = vrot.lane.b32.xlu0 %v1382, 64
    %v1384 = vpop.permute.xlu0 %1383
    %1386 = vst.msk [vmem:[#allocation3 + $0x30] sm:$0x70] %vm1023, %v1384
    %s1387 = scalar_lea.vmem [#allocation2], 114
    %v1388 = vld [vmem:[%s1387] ss:$2 sm:$0x7]
    %v1390 = vrot.slane %v1388, 1
    %1391 = vrot.lane.b32.xlu0 %v1390, 64
    %v1392 = vpop.permute.xlu0 %1391
    %1394 = vst.msk [vmem:[#allocation3 + $0x30] sm:$0x80] %vm1032, %v1392
    %1395 = vst.msk [vmem:[#allocation3 + $0x50] sm:$0x3] %vm1034, %v1392
    %v1396 = vld [vmem:[%s1044] ss:$2 sm:$0x7]
    %1398 = vrot.lane.b32.xlu0 %v1396, 96
    %v1399 = vpop.permute.xlu0 %1398
    %1401 = vst.msk [vmem:[#allocation3 + $0x10] sm:$0x7] %vm1042, %v1399
    %v1402 = vld [vmem:[%s1053] ss:$2 sm:$0x7]
    %v1404 = vrot.slane %v1402, 5
    %1405 = vrot.lane.b32.xlu0 %v1404, 96
    %v1406 = vpop.permute.xlu0 %1405
    %1408 = vst.msk [vmem:[#allocation3 + $0x10] sm:$0x38] %vm1051, %v1406
    %s1409 = scalar_lea.vmem [#allocation2], 51
    %v1410 = vld [vmem:[%s1409] ss:$2 sm:$0x7]
    %v1412 = vrot.slane %v1410, 2
    %1413 = vrot.lane.b32.xlu0 %v1412, 96
    %v1414 = vpop.permute.xlu0 %1413
    %1416 = vst.msk [vmem:[#allocation3 + $0x10] sm:$0xc0] %vm1060, %v1414
    %1417 = vst.msk [vmem:[#allocation3 + $0x30] sm:$0x1] %vm1062, %v1414
    %v1418 = vld [vmem:[%s1073] ss:$2 sm:$0x7]
    %v1420 = vrot.slane %v1418, 7
    %1421 = vrot.lane.b32.xlu0 %v1420, 96
    %v1422 = vpop.permute.xlu0 %1421
    %1424 = vst.msk [vmem:[#allocation3 + $0x30] sm:$0xe] %vm1071, %v1422
    %v1425 = vld [vmem:[%s1082] ss:$2 sm:$0x7]
    %v1427 = vrot.slane %v1425, 4
    %1428 = vrot.lane.b32.xlu0 %v1427, 96
    %v1429 = vpop.permute.xlu0 %1428
    %1431 = vst.msk [vmem:[#allocation3 + $0x30] sm:$0x70] %vm1080, %v1429
    %s1432 = scalar_lea.vmem [#allocation2], 115
    %v1433 = vld [vmem:[%s1432] ss:$2 sm:$0x7]
    %v1435 = vrot.slane %v1433, 1
    %1436 = vrot.lane.b32.xlu0 %v1435, 96
    %v1437 = vpop.permute.xlu0 %1436
    %1439 = vst.msk [vmem:[#allocation3 + $0x30] sm:$0x80] %vm1089, %v1437
    %1440 = vst.msk [vmem:[#allocation3 + $0x50] sm:$0x3] %vm1091, %v1437
    %v1441 = vld [vmem:[%s1096] ss:$2 sm:$0x7]
    %1442 = vst.msk [vmem:[#allocation3 + $0x18] sm:$0x7] %vm881, %v1441
    %v1443 = vld [vmem:[%s1102] ss:$2 sm:$0x7]
    %v1445 = vrot.slane %v1443, 5
    %1447 = vst.msk [vmem:[#allocation3 + $0x18] sm:$0x38] %vm888, %v1445
    %s1448 = scalar_lea.vmem [#allocation2], 56
    %v1449 = vld [vmem:[%s1448] ss:$2 sm:$0x7]
    %v1451 = vrot.slane %v1449, 2
    %1453 = vst.msk [vmem:[#allocation3 + $0x18] sm:$0xc0] %vm895, %v1451
    %1454 = vst.msk [vmem:[#allocation3 + $0x38] sm:$0x1] %vm897, %v1451
    %v1455 = vld [vmem:[%s1115] ss:$2 sm:$0x7]
    %v1457 = vrot.slane %v1455, 7
    %1459 = vst.msk [vmem:[#allocation3 + $0x38] sm:$0xe] %vm904, %v1457
    %v1460 = vld [vmem:[%s1121] ss:$2 sm:$0x7]
    %v1462 = vrot.slane %v1460, 4
    %1464 = vst.msk [vmem:[#allocation3 + $0x38] sm:$0x70] %vm911, %v1462
    %s1465 = scalar_lea.vmem [#allocation2], 120
    %v1466 = vld [vmem:[%s1465] ss:$2 sm:$0x7]
    %v1468 = vrot.slane %v1466, 1
    %1470 = vst.msk [vmem:[#allocation3 + $0x38] sm:$0x80] %vm918, %v1468
    %1471 = vst.msk [vmem:[#allocation3 + $0x58] sm:$0x3] %vm920, %v1468
    %v1472 = vld [vmem:[%s1135] ss:$2 sm:$0x7]
    %1474 = vrot.lane.b32.xlu0 %v1472, 32
    %v1475 = vpop.permute.xlu0 %1474
    %1477 = vst.msk [vmem:[#allocation3 + $0x18] sm:$0x7] %vm928, %v1475
    %v1478 = vld [vmem:[%s1143] ss:$2 sm:$0x7]
    %v1480 = vrot.slane %v1478, 5
    %1481 = vrot.lane.b32.xlu0 %v1480, 32
    %v1482 = vpop.permute.xlu0 %1481
    %1484 = vst.msk [vmem:[#allocation3 + $0x18] sm:$0x38] %vm937, %v1482
    %s1485 = scalar_lea.vmem [#allocation2], 57
    %v1486 = vld [vmem:[%s1485] ss:$2 sm:$0x7]
    %v1488 = vrot.slane %v1486, 2
    %1489 = vrot.lane.b32.xlu0 %v1488, 32
    %v1490 = vpop.permute.xlu0 %1489
    %1492 = vst.msk [vmem:[#allocation3 + $0x18] sm:$0xc0] %vm946, %v1490
    %1493 = vst.msk [vmem:[#allocation3 + $0x38] sm:$0x1] %vm948, %v1490
    %v1494 = vld [vmem:[%s1160] ss:$2 sm:$0x7]
    %v1496 = vrot.slane %v1494, 7
    %1497 = vrot.lane.b32.xlu0 %v1496, 32
    %v1498 = vpop.permute.xlu0 %1497
    %1500 = vst.msk [vmem:[#allocation3 + $0x38] sm:$0xe] %vm957, %v1498
    %v1501 = vld [vmem:[%s1168] ss:$2 sm:$0x7]
    %v1503 = vrot.slane %v1501, 4
    %1504 = vrot.lane.b32.xlu0 %v1503, 32
    %v1505 = vpop.permute.xlu0 %1504
    %1507 = vst.msk [vmem:[#allocation3 + $0x38] sm:$0x70] %vm966, %v1505
    %s1508 = scalar_lea.vmem [#allocation2], 121
    %v1509 = vld [vmem:[%s1508] ss:$2 sm:$0x7]
    %v1511 = vrot.slane %v1509, 1
    %1512 = vrot.lane.b32.xlu0 %v1511, 32
    %v1513 = vpop.permute.xlu0 %1512
    %1515 = vst.msk [vmem:[#allocation3 + $0x38] sm:$0x80] %vm975, %v1513
    %1516 = vst.msk [vmem:[#allocation3 + $0x58] sm:$0x3] %vm977, %v1513
    %v1517 = vld [vmem:[%s1184] ss:$2 sm:$0x7]
    %1519 = vrot.lane.b32.xlu0 %v1517, 64
    %v1520 = vpop.permute.xlu0 %1519
    %1522 = vst.msk [vmem:[#allocation3 + $0x18] sm:$0x7] %vm985, %v1520
    %v1523 = vld [vmem:[%s1192] ss:$2 sm:$0x7]
    %v1525 = vrot.slane %v1523, 5
    %1526 = vrot.lane.b32.xlu0 %v1525, 64
    %v1527 = vpop.permute.xlu0 %1526
    %1529 = vst.msk [vmem:[#allocation3 + $0x18] sm:$0x38] %vm994, %v1527
    %s1530 = scalar_lea.vmem [#allocation2], 58
    %v1531 = vld [vmem:[%s1530] ss:$2 sm:$0x7]
    %v1533 = vrot.slane %v1531, 2
    %1534 = vrot.lane.b32.xlu0 %v1533, 64
    %v1535 = vpop.permute.xlu0 %1534
    %1537 = vst.msk [vmem:[#allocation3 + $0x18] sm:$0xc0] %vm1003, %v1535
    %1538 = vst.msk [vmem:[#allocation3 + $0x38] sm:$0x1] %vm1005, %v1535
    %v1539 = vld [vmem:[%s1209] ss:$2 sm:$0x7]
    %v1541 = vrot.slane %v1539, 7
    %1542 = vrot.lane.b32.xlu0 %v1541, 64
    %v1543 = vpop.permute.xlu0 %1542
    %1545 = vst.msk [vmem:[#allocation3 + $0x38] sm:$0xe] %vm1014, %v1543
    %v1546 = vld [vmem:[%s1217] ss:$2 sm:$0x7]
    %v1548 = vrot.slane %v1546, 4
    %1549 = vrot.lane.b32.xlu0 %v1548, 64
    %v1550 = vpop.permute.xlu0 %1549
    %1552 = vst.msk [vmem:[#allocation3 + $0x38] sm:$0x70] %vm1023, %v1550
    %s1553 = scalar_lea.vmem [#allocation2], 122
    %v1554 = vld [vmem:[%s1553] ss:$2 sm:$0x7]
    %v1556 = vrot.slane %v1554, 1
    %1557 = vrot.lane.b32.xlu0 %v1556, 64
    %v1558 = vpop.permute.xlu0 %1557
    %1560 = vst.msk [vmem:[#allocation3 + $0x38] sm:$0x80] %vm1032, %v1558
    %1561 = vst.msk [vmem:[#allocation3 + $0x58] sm:$0x3] %vm1034, %v1558
    %v1562 = vld [vmem:[%s1233] ss:$2 sm:$0x7]
    %1564 = vrot.lane.b32.xlu0 %v1562, 96
    %v1565 = vpop.permute.xlu0 %1564
    %1567 = vst.msk [vmem:[#allocation3 + $0x18] sm:$0x7] %vm1042, %v1565
    %v1568 = vld [vmem:[%s1241] ss:$2 sm:$0x7]
    %v1570 = vrot.slane %v1568, 5
    %1571 = vrot.lane.b32.xlu0 %v1570, 96
    %v1572 = vpop.permute.xlu0 %1571
    %1574 = vst.msk [vmem:[#allocation3 + $0x18] sm:$0x38] %vm1051, %v1572
    %s1575 = scalar_lea.vmem [#allocation2], 59
    %v1576 = vld [vmem:[%s1575] ss:$2 sm:$0x7]
    %v1578 = vrot.slane %v1576, 2
    %1579 = vrot.lane.b32.xlu0 %v1578, 96
    %v1580 = vpop.permute.xlu0 %1579
    %1582 = vst.msk [vmem:[#allocation3 + $0x18] sm:$0xc0] %vm1060, %v1580
    %1583 = vst.msk [vmem:[#allocation3 + $0x38] sm:$0x1] %vm1062, %v1580
    %v1584 = vld [vmem:[%s1258] ss:$2 sm:$0x7]
    %v1586 = vrot.slane %v1584, 7
    %1587 = vrot.lane.b32.xlu0 %v1586, 96
    %v1588 = vpop.permute.xlu0 %1587
    %1590 = vst.msk [vmem:[#allocation3 + $0x38] sm:$0xe] %vm1071, %v1588
    %v1591 = vld [vmem:[%s1266] ss:$2 sm:$0x7]
    %v1593 = vrot.slane %v1591, 4
    %1594 = vrot.lane.b32.xlu0 %v1593, 96
    %v1595 = vpop.permute.xlu0 %1594
    %1597 = vst.msk [vmem:[#allocation3 + $0x38] sm:$0x70] %vm1080, %v1595
    %s1598 = scalar_lea.vmem [#allocation2], 123
    %v1599 = vld [vmem:[%s1598] ss:$2 sm:$0x7]
    %v1601 = vrot.slane %v1599, 1
    %1602 = vrot.lane.b32.xlu0 %v1601, 96
    %v1603 = vpop.permute.xlu0 %1602
    %1605 = vst.msk [vmem:[#allocation3 + $0x38] sm:$0x80] %vm1089, %v1603
    %1606 = vst.msk [vmem:[#allocation3 + $0x58] sm:$0x3] %vm1091, %v1603
    %s1607 = smul.u32 4, 64
    %s1608 = smul.u32 %s1607, 1
    %s1609 = sshll.u32 %s1608, 4
    %1610 = dma.done [#allocation11], %s1609
    %v1611 = vld [vmem:[#allocation3] sm:$0xff]
    %v1612 = vld [vmem:[#allocation3 + $0x8] sm:$0xff]
    %v1613 = vld [vmem:[#allocation3 + $0x10] sm:$0xff]
    %v1614 = vld [vmem:[#allocation3 + $0x18] sm:$0xff]
    %v1615 = vld [vmem:[#allocation3 + $0x20] sm:$0xff]
    %v1616 = vld [vmem:[#allocation3 + $0x28] sm:$0xff]
    %v1617 = vld [vmem:[#allocation3 + $0x30] sm:$0xff]
    %v1618 = vld [vmem:[#allocation3 + $0x38] sm:$0xff]
    %v1619 = vld [vmem:[#allocation3 + $0x40] sm:$0x3]
    %v1620 = vld [vmem:[#allocation3 + $0x48] sm:$0x3]
    %v1621 = vld [vmem:[#allocation3 + $0x50] sm:$0x3]
    %v1622 = vld [vmem:[#allocation3 + $0x58] sm:$0x3]
    %v1623 = vpack.c.bf16 %v1615, %v1611
    %v1624 = vpack.c.bf16 %v1616, %v1612
    %v1625 = vpack.c.bf16 %v1617, %v1613
    %v1626 = vpack.c.bf16 %v1618, %v1614
    %v1627 = vpack.c.bf16 %v1619, %v1619
    %v1628 = vpack.c.bf16 %v1620, %v1620
    %v1629 = vpack.c.bf16 %v1621, %v1621
    %v1630 = vpack.c.bf16 %v1622, %v1622
    %v1631 = vld [vmem:[#allocation7] sm:$0xff]
    %v1632 = vld [vmem:[#allocation7 + $0x8] sm:$0xff]
    %v1633 = vld [vmem:[#allocation7 + $0x10] sm:$0xff]
    %v1634 = vld [vmem:[#allocation7 + $0x18] sm:$0xff]
    %v1635 = vld [vmem:[#allocation7 + $0x20] sm:$0xff]
    %v1636 = vld [vmem:[#allocation7 + $0x28] sm:$0xff]
    %v1637 = vld [vmem:[#allocation7 + $0x30] sm:$0xff]
    %v1638 = vld [vmem:[#allocation7 + $0x38] sm:$0xff]
    %v1639 = vld [vmem:[#allocation7 + $0x40] sm:$0xff]
    %v1640 = vld [vmem:[#allocation7 + $0x48] sm:$0xff]
    %v1641 = vld [vmem:[#allocation7 + $0x50] sm:$0xff]
    %v1642 = vld [vmem:[#allocation7 + $0x58] sm:$0xff]
    %v1643 = vld [vmem:[#allocation7 + $0x60] sm:$0xff]
    %v1644 = vld [vmem:[#allocation7 + $0x68] sm:$0xff]
    %v1645 = vld [vmem:[#allocation7 + $0x70] sm:$0xff]
    %v1646 = vld [vmem:[#allocation7 + $0x78] sm:$0xff]
    %v1647 = vld [vmem:[#allocation7 + $0x80] sm:$0xff]
    %v1648 = vld [vmem:[#allocation7 + $0x88] sm:$0xff]
    %v1649 = vld [vmem:[#allocation7 + $0x90] sm:$0xff]
    %v1650 = vld [vmem:[#allocation7 + $0x98] sm:$0xff]
    %v1651 = vld [vmem:[#allocation7 + $0xa0] sm:$0xff]
    %v1652 = vld [vmem:[#allocation7 + $0xa8] sm:$0xff]
    %v1653 = vld [vmem:[#allocation7 + $0xb0] sm:$0xff]
    %v1654 = vld [vmem:[#allocation7 + $0xb8] sm:$0xff]
    %v1655 = vld [vmem:[#allocation7 + $0xc0] sm:$0xff]
    %v1656 = vld [vmem:[#allocation7 + $0xc8] sm:$0xff]
    %v1657 = vld [vmem:[#allocation7 + $0xd0] sm:$0xff]
    %v1658 = vld [vmem:[#allocation7 + $0xd8] sm:$0xff]
    %v1659 = vld [vmem:[#allocation7 + $0xe0] sm:$0xff]
    %v1660 = vld [vmem:[#allocation7 + $0xe8] sm:$0xff]
    %v1661 = vld [vmem:[#allocation7 + $0xf0] sm:$0xff]
    %v1662 = vld [vmem:[#allocation7 + $0xf8] sm:$0xff]
    %v1663 = vld [vmem:[%s2 + $0x1] sm:$0x1]
    %v1665 = vlaneseq
    %v1666 = vshrl.u32 %v1665, 7
    %v1667 = vsub.s32 0, %v1666
    %v1668 = vrot.slane %v1663, %v1667
    %1670 = vmatprep.subr.bf16.mxu0 0
    %1671 = vmatpush1.bf16.msra.mxu0 %v1631
    %1672 = vmatprep.subr.bf16.mxu0 0
    %1673 = vmatpush1.bf16.msra.mxu0 %v1632
    %1674 = vmatprep.subr.bf16.mxu0 0
    %1675 = vmatpush1.bf16.msra.mxu0 %v1633
    %1676 = vmatprep.subr.bf16.mxu0 0
    %1677 = vmatpush1.bf16.msra.mxu0 %v1634
    %1678 = vmatprep.subr.bf16.mxu0 0
    %1679 = vmatpush1.bf16.msra.mxu0 %v1635
    %1680 = vmatprep.subr.bf16.mxu0 0
    %1681 = vmatpush1.bf16.msra.mxu0 %v1636
    %1682 = vmatprep.subr.bf16.mxu0 0
    %1683 = vmatpush1.bf16.msra.mxu0 %v1637
    %1684 = vmatprep.subr.bf16.mxu0 0
    %1685 = vmatpush1.bf16.msra.mxu0 %v1638
    %1686 = vmatprep.subr.bf16.mxu0 0
    %1687 = vmatpush1.bf16.msra.mxu0 %v1639
    %1688 = vmatprep.subr.bf16.mxu0 0
    %1689 = vmatpush1.bf16.msra.mxu0 %v1640
    %1690 = vmatprep.subr.bf16.mxu0 0
    %1691 = vmatpush1.bf16.msra.mxu0 %v1641
    %1692 = vmatprep.subr.bf16.mxu0 0
    %1693 = vmatpush1.bf16.msra.mxu0 %v1642
    %1694 = vmatprep.subr.bf16.mxu0 0
    %1695 = vmatpush1.bf16.msra.mxu0 %v1643
    %1696 = vmatprep.subr.bf16.mxu0 0
    %1697 = vmatpush1.bf16.msra.mxu0 %v1644
    %1698 = vmatprep.subr.bf16.mxu0 0
    %1699 = vmatpush1.bf16.msra.mxu0 %v1645
    %1700 = vmatprep.subr.bf16.mxu0 0
    %1701 = vmatpush1.bf16.msra.mxu0 %v1646
    %1702 = vmatprep.mubr.bf16.mxu0 %v1624
    %1703 = vmatmul.mubr.bf16.gmra.mrb[0].mxu0 %v1623
    %v1704 = vpop.f32.mrb[0].mxu0
    %v1705 = vadd.f32 %v1668, %v1704
    %v1706 = vpop.f32.mrb[0].mxu0
    %v1707 = vpop.f32.mrb[0].mxu0
    %v1708 = vadd.f32 %v1668, %v1707
    %v1709 = vpop.f32.mrb[0].mxu0
    %1710 = vmatprep.mubr.bf16.mxu0 %v1628
    %1711 = vmatmul.mubr.bf16.gmra.mrb[0].mxu0 %v1627
    %v1712 = vpop.f32.mrb[0].mxu0
    %v1713 = vadd.f32 %v1668, %v1712
    %v1714 = vpop.f32.mrb[0].mxu0
    %v1715 = vpop.f32.mrb[0].mxu0
    %v1716 = vpop.f32.mrb[0].mxu0
    %1717 = vdwg.mxu0
    %1718 = vmatprep.subr.bf16.mxu0 0
    %1719 = vmatpush1.bf16.msra.mxu0 %v1647
    %1720 = vmatprep.subr.bf16.mxu0 0
    %1721 = vmatpush1.bf16.msra.mxu0 %v1648
    %1722 = vmatprep.subr.bf16.mxu0 0
    %1723 = vmatpush1.bf16.msra.mxu0 %v1649
    %1724 = vmatprep.subr.bf16.mxu0 0
    %1725 = vmatpush1.bf16.msra.mxu0 %v1650
    %1726 = vmatprep.subr.bf16.mxu0 0
    %1727 = vmatpush1.bf16.msra.mxu0 %v1651
    %1728 = vmatprep.subr.bf16.mxu0 0
    %1729 = vmatpush1.bf16.msra.mxu0 %v1652
    %1730 = vmatprep.subr.bf16.mxu0 0
    %1731 = vmatpush1.bf16.msra.mxu0 %v1653
    %1732 = vmatprep.subr.bf16.mxu0 0
    %1733 = vmatpush1.bf16.msra.mxu0 %v1654
    %1734 = vmatprep.subr.bf16.mxu0 0
    %1735 = vmatpush1.bf16.msra.mxu0 %v1655
    %1736 = vmatprep.subr.bf16.mxu0 0
    %1737 = vmatpush1.bf16.msra.mxu0 %v1656
    %1738 = vmatprep.subr.bf16.mxu0 0
    %1739 = vmatpush1.bf16.msra.mxu0 %v1657
    %1740 = vmatprep.subr.bf16.mxu0 0
    %1741 = vmatpush1.bf16.msra.mxu0 %v1658
    %1742 = vmatprep.subr.bf16.mxu0 0
    %1743 = vmatpush1.bf16.msra.mxu0 %v1659
    %1744 = vmatprep.subr.bf16.mxu0 0
    %1745 = vmatpush1.bf16.msra.mxu0 %v1660
    %1746 = vmatprep.subr.bf16.mxu0 0
    %1747 = vmatpush1.bf16.msra.mxu0 %v1661
    %1748 = vmatprep.subr.bf16.mxu0 0
    %1749 = vmatpush1.bf16.msra.mxu0 %v1662
    %1750 = vmatprep.mubr.bf16.mxu0 %v1626
    %1751 = vmatmul.mubr.bf16.gmra.mrb[0].mxu0 %v1625
    %v1752 = vpop.f32.mrb[0].mxu0
    %v1753 = vadd.f32 %v1705, %v1752
    %v1754 = vpop.f32.mrb[0].mxu0
    %v1755 = vpop.f32.mrb[0].mxu0
    %v1756 = vadd.f32 %v1708, %v1755
    %v1757 = vpop.f32.mrb[0].mxu0
    %1758 = vmatprep.mubr.bf16.mxu0 %v1630
    %1759 = vmatmul.mubr.bf16.gmra.mrb[0].mxu0 %v1629
    %v1760 = vpop.f32.mrb[0].mxu0
    %v1761 = vadd.f32 %v1713, %v1760
    %v1762 = vpop.f32.mrb[0].mxu0
    %v1763 = vpop.f32.mrb[0].mxu0
    %v1764 = vpop.f32.mrb[0].mxu0
    %1765 = vdwg.mxu0
    %v1766 = vmax.f32 %v1753, 0.0
    %v1767 = vmax.f32 %v1756, 0.0
    %v1768 = vmax.f32 %v1761, 0.0
    %vm1769 = vcmask 523264
    %1770 = vst.msk [vmem:[#allocation4] sm:$0xff] %vm1769, %v1766
    %1771 = vst.msk [vmem:[#allocation4 + $0x8] sm:$0xff] %vm1769, %v1767
    %vm1772 = vcmask 517120
    %1773 = vst.msk [vmem:[#allocation4 + $0x10] sm:$0x3] %vm1772, %v1768
    %v1774 = vld [vmem:[#allocation4] sm:$0x1]
    %vm1775 = vcmask 516096
    %1776 = vst.msk [vmem:[#allocation5] sm:$0x1] %vm1775, %v1774
    %v1777 = vld [vmem:[#allocation4 + $0x9] sm:$0x1]
    %1778 = vst.msk [vmem:[#allocation5 + $0x1] sm:$0x1] %vm1775, %v1777
    %v1779 = vld [vmem:[#allocation4 + $0x1] sm:$0x1]
    %v1782 = vunpack.c.l.s4 1983009808
    %v1783 = vunpack.c.0.s8 %v1782
    %v1784 = vlaneseq
    %v1785 = vshrl.u32 %v1784, 7
    %v1786 = vsub.s32 %v1783, %v1785
    %v1787 = vrot.slane %v1779, %v1786
    %1788 = vrot.lane.b32.xlu0 %v1787, 64
    %v1789 = vpop.permute.xlu0 %1788
    %vm1791 = vcmask 1040896
    %1792 = vst.msk [vmem:[#allocation5] sm:$0x1] %vm1791, %v1789
    %v1793 = vld [vmem:[#allocation4 + $0xa] sm:$0x1]
    %v1796 = vunpack.c.l.s4 1983009808
    %v1797 = vunpack.c.0.s8 %v1796
    %v1798 = vlaneseq
    %v1799 = vshrl.u32 %v1798, 7
    %v1800 = vsub.s32 %v1797, %v1799
    %v1801 = vrot.slane %v1793, %v1800
    %1802 = vrot.lane.b32.xlu0 %v1801, 64
    %v1803 = vpop.permute.xlu0 %1802
    %1805 = vst.msk [vmem:[#allocation5 + $0x1] sm:$0x1] %vm1791, %v1803
    %v1806 = vld [vmem:[#allocation4 + $0x2] sm:$0x1]
    %1807 = vst.msk [vmem:[#allocation5 + $0x2] sm:$0x1] %vm1775, %v1806
    %v1808 = vld [vmem:[#allocation4 + $0xb] sm:$0x1]
    %1809 = vst.msk [vmem:[#allocation5 + $0x3] sm:$0x1] %vm1775, %v1808
    %v1810 = vld [vmem:[#allocation4 + $0x3] sm:$0x1]
    %v1813 = vunpack.c.l.s4 1983009808
    %v1814 = vunpack.c.0.s8 %v1813
    %v1815 = vlaneseq
    %v1816 = vshrl.u32 %v1815, 7
    %v1817 = vsub.s32 %v1814, %v1816
    %v1818 = vrot.slane %v1810, %v1817
    %1819 = vrot.lane.b32.xlu0 %v1818, 64
    %v1820 = vpop.permute.xlu0 %1819
    %1822 = vst.msk [vmem:[#allocation5 + $0x2] sm:$0x1] %vm1791, %v1820
    %v1823 = vld [vmem:[#allocation4 + $0xc] sm:$0x1]
    %v1826 = vunpack.c.l.s4 1983009808
    %v1827 = vunpack.c.0.s8 %v1826
    %v1828 = vlaneseq
    %v1829 = vshrl.u32 %v1828, 7
    %v1830 = vsub.s32 %v1827, %v1829
    %v1831 = vrot.slane %v1823, %v1830
    %1832 = vrot.lane.b32.xlu0 %v1831, 64
    %v1833 = vpop.permute.xlu0 %1832
    %1835 = vst.msk [vmem:[#allocation5 + $0x3] sm:$0x1] %vm1791, %v1833
    %v1836 = vld [vmem:[#allocation4 + $0x4] sm:$0x1]
    %1837 = vst.msk [vmem:[#allocation5 + $0x4] sm:$0x1] %vm1775, %v1836
    %v1838 = vld [vmem:[#allocation4 + $0xd] sm:$0x1]
    %1839 = vst.msk [vmem:[#allocation5 + $0x5] sm:$0x1] %vm1775, %v1838
    %v1840 = vld [vmem:[#allocation4 + $0x5] sm:$0x1]
    %v1843 = vunpack.c.l.s4 1983009808
    %v1844 = vunpack.c.0.s8 %v1843
    %v1845 = vlaneseq
    %v1846 = vshrl.u32 %v1845, 7
    %v1847 = vsub.s32 %v1844, %v1846
    %v1848 = vrot.slane %v1840, %v1847
    %1849 = vrot.lane.b32.xlu0 %v1848, 64
    %v1850 = vpop.permute.xlu0 %1849
    %1852 = vst.msk [vmem:[#allocation5 + $0x4] sm:$0x1] %vm1791, %v1850
    %v1853 = vld [vmem:[#allocation4 + $0xe] sm:$0x1]
    %v1856 = vunpack.c.l.s4 1983009808
    %v1857 = vunpack.c.0.s8 %v1856
    %v1858 = vlaneseq
    %v1859 = vshrl.u32 %v1858, 7
    %v1860 = vsub.s32 %v1857, %v1859
    %v1861 = vrot.slane %v1853, %v1860
    %1862 = vrot.lane.b32.xlu0 %v1861, 64
    %v1863 = vpop.permute.xlu0 %1862
    %1865 = vst.msk [vmem:[#allocation5 + $0x5] sm:$0x1] %vm1791, %v1863
    %v1866 = vld [vmem:[#allocation4 + $0x6] sm:$0x1]
    %1867 = vst.msk [vmem:[#allocation5 + $0x6] sm:$0x1] %vm1775, %v1866
    %v1868 = vld [vmem:[#allocation4 + $0xf] sm:$0x1]
    %1869 = vst.msk [vmem:[#allocation5 + $0x7] sm:$0x1] %vm1775, %v1868
    %v1870 = vld [vmem:[#allocation4 + $0x7] sm:$0x1]
    %v1873 = vunpack.c.l.s4 1983009808
    %v1874 = vunpack.c.0.s8 %v1873
    %v1875 = vlaneseq
    %v1876 = vshrl.u32 %v1875, 7
    %v1877 = vsub.s32 %v1874, %v1876
    %v1878 = vrot.slane %v1870, %v1877
    %1879 = vrot.lane.b32.xlu0 %v1878, 64
    %v1880 = vpop.permute.xlu0 %1879
    %1882 = vst.msk [vmem:[#allocation5 + $0x6] sm:$0x1] %vm1791, %v1880
    %v1883 = vld [vmem:[#allocation4 + $0x10] sm:$0x1]
    %v1886 = vunpack.c.l.s4 1983009808
    %v1887 = vunpack.c.0.s8 %v1886
    %v1888 = vlaneseq
    %v1889 = vshrl.u32 %v1888, 7
    %v1890 = vsub.s32 %v1887, %v1889
    %v1891 = vrot.slane %v1883, %v1890
    %1892 = vrot.lane.b32.xlu0 %v1891, 64
    %v1893 = vpop.permute.xlu0 %1892
    %1895 = vst.msk [vmem:[#allocation5 + $0x7] sm:$0x1] %vm1791, %v1893
    %v1896 = vld [vmem:[#allocation4 + $0x8] sm:$0x1]
    %1897 = vst.msk [vmem:[#allocation5 + $0x8] sm:$0x1] %vm1775, %v1896
    %v1898 = vld [vmem:[#allocation4 + $0x11] sm:$0x1]
    %1899 = vst.msk [vmem:[#allocation5 + $0x9] sm:$0x1] %vm1775, %v1898
    %s1900 = smul.u32 4, 72
    %s1901 = smul.u32 %s1900, 1
    %s1902 = sshll.u32 %s1901, 4
    %1903 = dma.done %s124, %s1902
    %v1904 = vld [vmem:[#allocation5] sm:$0xff]
    %v1905 = vld [vmem:[#allocation5 + $0x8] sm:$0x3]
    %v1908 = vcombine.high %v1904, %v1904
    %v1910 = vunpack.c.l.s4 1983009808
    %v1911 = vunpack.c.0.s8 %v1910
    %v1912 = vlaneseq
    %v1913 = vshrl.u32 %v1912, 7
    %v1914 = vsub.s32 %v1911, %v1913
    %v1915 = vrot.slane %v1904, %v1914
    %v1917 = vunpack.c.l.s4 1983009808
    %v1918 = vunpack.c.0.s8 %v1917
    %v1919 = vlaneseq
    %v1920 = vshrl.u32 %v1919, 7
    %v1921 = vsub.s32 %v1918, %v1920
    %v1922 = vrot.slane %v1908, %v1921
    %v1923 = vcombine.high %v1915, %v1915
    %v1924 = vcombine.high %v1922, %v1922
    %v1926 = vunpack.c.l.s4 1983009808
    %v1927 = vunpack.c.0.s8 %v1926
    %v1928 = vlaneseq
    %v1929 = vshrl.u32 %v1928, 7
    %v1930 = vsub.s32 %v1927, %v1929
    %v1931 = vrot.slane %v1905, %v1930
    %v1937 = vpack.c.bf16 %v1915, %v1915
    %v1938 = vpack.c.bf16 %v1923, %v1923
    %v1939 = vpack.c.bf16 %v1922, %v1922
    %v1940 = vpack.c.bf16 %v1924, %v1924
    %v1941 = vpack.c.bf16 %v1931, %v1931
    %v1942 = vld [vmem:[#allocation8] sm:$0xff]
    %v1943 = vld [vmem:[#allocation8 + $0x8] sm:$0xff]
    %v1944 = vld [vmem:[#allocation8 + $0x10] sm:$0xff]
    %v1945 = vld [vmem:[#allocation8 + $0x18] sm:$0xff]
    %v1946 = vld [vmem:[#allocation8 + $0x20] sm:$0xff]
    %v1947 = vld [vmem:[#allocation8 + $0x28] sm:$0xff]
    %v1948 = vld [vmem:[#allocation8 + $0x30] sm:$0xff]
    %v1949 = vld [vmem:[#allocation8 + $0x38] sm:$0xff]
    %v1950 = vld [vmem:[#allocation8 + $0x40] sm:$0xff]
    %v1951 = vld [vmem:[#allocation8 + $0x48] sm:$0xff]
    %v1952 = vld [vmem:[#allocation8 + $0x50] sm:$0xff]
    %v1953 = vld [vmem:[#allocation8 + $0x58] sm:$0xff]
    %v1954 = vld [vmem:[#allocation8 + $0x60] sm:$0xff]
    %v1955 = vld [vmem:[#allocation8 + $0x68] sm:$0xff]
    %v1956 = vld [vmem:[#allocation8 + $0x70] sm:$0xff]
    %v1957 = vld [vmem:[#allocation8 + $0x78] sm:$0xff]
    %v1958 = vld [vmem:[#allocation8 + $0x80] sm:$0xff]
    %v1959 = vld [vmem:[#allocation8 + $0x88] sm:$0xff]
    %v1960 = vld [vmem:[#allocation8 + $0x90] sm:$0xff]
    %v1961 = vld [vmem:[#allocation8 + $0x98] sm:$0xff]
    %v1962 = vld [vmem:[#allocation8 + $0xa0] sm:$0xff]
    %v1963 = vld [vmem:[#allocation8 + $0xa8] sm:$0xff]
    %v1964 = vld [vmem:[#allocation8 + $0xb0] sm:$0xff]
    %v1965 = vld [vmem:[#allocation8 + $0xb8] sm:$0xff]
    %v1966 = vld [vmem:[#allocation8 + $0xc0] sm:$0xff]
    %v1967 = vld [vmem:[#allocation8 + $0xc8] sm:$0xff]
    %v1968 = vld [vmem:[#allocation8 + $0xd0] sm:$0xff]
    %v1969 = vld [vmem:[#allocation8 + $0xd8] sm:$0xff]
    %v1970 = vld [vmem:[#allocation8 + $0xe0] sm:$0xff]
    %v1971 = vld [vmem:[#allocation8 + $0xe8] sm:$0xff]
    %v1972 = vld [vmem:[#allocation8 + $0xf0] sm:$0xff]
    %v1973 = vld [vmem:[#allocation8 + $0xf8] sm:$0xff]
    %v1974 = vld [vmem:[#allocation8 + $0x100] sm:$0xff]
    %v1975 = vld [vmem:[#allocation8 + $0x108] sm:$0xff]
    %v1976 = vld [vmem:[#allocation8 + $0x110] sm:$0xff]
    %v1977 = vld [vmem:[#allocation8 + $0x118] sm:$0xff]
    %v1978 = vld [vmem:[%s2 + $0x2] sm:$0x1]
    %v1980 = vlaneseq
    %v1981 = vshrl.u32 %v1980, 7
    %v1982 = vsub.s32 0, %v1981
    %v1983 = vrot.slane %v1978, %v1982
    %v1986 = vsel %vm1769, %v1941, 0
    %1988 = vmatprep.subr.bf16.mxu0 0
    %1989 = vmatpush1.bf16.msra.mxu0 %v1942
    %1990 = vmatprep.subr.bf16.mxu0 0
    %1991 = vmatpush1.bf16.msra.mxu0 %v1943
    %1992 = vmatprep.subr.bf16.mxu0 0
    %1993 = vmatpush1.bf16.msra.mxu0 %v1944
    %1994 = vmatprep.subr.bf16.mxu0 0
    %1995 = vmatpush1.bf16.msra.mxu0 %v1945
    %1996 = vmatprep.subr.bf16.mxu0 0
    %1997 = vmatpush1.bf16.msra.mxu0 %v1946
    %1998 = vmatprep.subr.bf16.mxu0 0
    %1999 = vmatpush1.bf16.msra.mxu0 %v1947
    %2000 = vmatprep.subr.bf16.mxu0 0
    %2001 = vmatpush1.bf16.msra.mxu0 %v1948
    %2002 = vmatprep.subr.bf16.mxu0 0
    %2003 = vmatpush1.bf16.msra.mxu0 %v1949
    %2004 = vmatprep.subr.bf16.mxu0 0
    %2005 = vmatpush1.bf16.msra.mxu0 %v1950
    %2006 = vmatprep.subr.bf16.mxu0 0
    %2007 = vmatpush1.bf16.msra.mxu0 %v1951
    %2008 = vmatprep.subr.bf16.mxu0 0
    %2009 = vmatpush1.bf16.msra.mxu0 %v1952
    %2010 = vmatprep.subr.bf16.mxu0 0
    %2011 = vmatpush1.bf16.msra.mxu0 %v1953
    %2012 = vmatprep.subr.bf16.mxu0 0
    %2013 = vmatpush1.bf16.msra.mxu0 %v1954
    %2014 = vmatprep.subr.bf16.mxu0 0
    %2015 = vmatpush1.bf16.msra.mxu0 %v1955
    %2016 = vmatprep.subr.bf16.mxu0 0
    %2017 = vmatpush1.bf16.msra.mxu0 %v1956
    %2018 = vmatprep.subr.bf16.mxu0 0
    %2019 = vmatpush1.bf16.msra.mxu0 %v1957
    %2020 = vmatprep.mubr.bf16.mxu0 %v1938
    %2021 = vmatmul.mubr.bf16.gmra.mrb[0].mxu0 %v1937
    %v2022 = vpop.f32.mrb[0].mxu0
    %v2023 = vadd.f32 %v1983, %v2022
    %v2024 = vpop.f32.mrb[0].mxu0
    %v2025 = vpop.f32.mrb[0].mxu0
    %v2026 = vpop.f32.mrb[0].mxu0
    %2027 = vdwg.mxu0
    %2028 = vmatprep.subr.bf16.mxu0 0
    %2029 = vmatpush1.bf16.msra.mxu0 %v1958
    %2030 = vmatprep.subr.bf16.mxu0 0
    %2031 = vmatpush1.bf16.msra.mxu0 %v1959
    %2032 = vmatprep.subr.bf16.mxu0 0
    %2033 = vmatpush1.bf16.msra.mxu0 %v1960
    %2034 = vmatprep.subr.bf16.mxu0 0
    %2035 = vmatpush1.bf16.msra.mxu0 %v1961
    %2036 = vmatprep.subr.bf16.mxu0 0
    %2037 = vmatpush1.bf16.msra.mxu0 %v1962
    %2038 = vmatprep.subr.bf16.mxu0 0
    %2039 = vmatpush1.bf16.msra.mxu0 %v1963
    %2040 = vmatprep.subr.bf16.mxu0 0
    %2041 = vmatpush1.bf16.msra.mxu0 %v1964
    %2042 = vmatprep.subr.bf16.mxu0 0
    %2043 = vmatpush1.bf16.msra.mxu0 %v1965
    %2044 = vmatprep.subr.bf16.mxu0 0
    %2045 = vmatpush1.bf16.msra.mxu0 %v1966
    %2046 = vmatprep.subr.bf16.mxu0 0
    %2047 = vmatpush1.bf16.msra.mxu0 %v1967
    %2048 = vmatprep.subr.bf16.mxu0 0
    %2049 = vmatpush1.bf16.msra.mxu0 %v1968
    %2050 = vmatprep.subr.bf16.mxu0 0
    %2051 = vmatpush1.bf16.msra.mxu0 %v1969
    %2052 = vmatprep.subr.bf16.mxu0 0
    %2053 = vmatpush1.bf16.msra.mxu0 %v1970
    %2054 = vmatprep.subr.bf16.mxu0 0
    %2055 = vmatpush1.bf16.msra.mxu0 %v1971
    %2056 = vmatprep.subr.bf16.mxu0 0
    %2057 = vmatpush1.bf16.msra.mxu0 %v1972
    %2058 = vmatprep.subr.bf16.mxu0 0
    %2059 = vmatpush1.bf16.msra.mxu0 %v1973
    %2060 = vmatprep.mubr.bf16.mxu0 %v1940
    %2061 = vmatmul.mubr.bf16.gmra.mrb[0].mxu0 %v1939
    %v2062 = vpop.f32.mrb[0].mxu0
    %v2063 = vadd.f32 %v2023, %v2062
    %v2064 = vpop.f32.mrb[0].mxu0
    %v2065 = vpop.f32.mrb[0].mxu0
    %v2066 = vpop.f32.mrb[0].mxu0
    %2067 = vdwg.mxu0
    %2068 = vmatprep.subr.bf16.mxu0 0
    %2069 = vmatpush1.bf16.msra.mxu0 %v1974
    %2070 = vmatprep.subr.bf16.mxu0 0
    %2071 = vmatpush1.bf16.msra.mxu0 %v1975
    %2072 = vmatprep.subr.bf16.mxu0 0
    %2073 = vmatpush1.bf16.msra.mxu0 %v1976
    %2074 = vmatprep.subr.bf16.mxu0 0
    %2075 = vmatpush1.bf16.msra.mxu0 %v1977
    %2076 = vmatprep.subr.bf16.mxu0 0
    %2077 = vmatpush1.bf16.msra.mxu0 0
    %2078 = vmatprep.subr.bf16.mxu0 0
    %2079 = vmatpush1.bf16.msra.mxu0 0
    %2080 = vmatprep.subr.bf16.mxu0 0
    %2081 = vmatpush1.bf16.msra.mxu0 0
    %2082 = vmatprep.subr.bf16.mxu0 0
    %2083 = vmatpush1.bf16.msra.mxu0 0
    %2084 = vmatprep.subr.bf16.mxu0 0
    %2085 = vmatpush1.bf16.msra.mxu0 0
    %2086 = vmatprep.subr.bf16.mxu0 0
    %2087 = vmatpush1.bf16.msra.mxu0 0
    %2088 = vmatprep.subr.bf16.mxu0 0
    %2089 = vmatpush1.bf16.msra.mxu0 0
    %2090 = vmatprep.subr.bf16.mxu0 0
    %2091 = vmatpush1.bf16.msra.mxu0 0
    %2092 = vmatprep.subr.bf16.mxu0 0
    %2093 = vmatpush1.bf16.msra.mxu0 0
    %2094 = vmatprep.subr.bf16.mxu0 0
    %2095 = vmatpush1.bf16.msra.mxu0 0
    %2096 = vmatprep.subr.bf16.mxu0 0
    %2097 = vmatpush1.bf16.msra.mxu0 0
    %2098 = vmatprep.subr.bf16.mxu0 0
    %2099 = vmatpush1.bf16.msra.mxu0 0
    %2100 = vmatprep.mubr.bf16.mxu0 0
    %2101 = vmatmul.mubr.bf16.gmra.mrb[0].mxu0 %v1986
    %v2102 = vpop.f32.mrb[0].mxu0
    %v2103 = vadd.f32 %v2063, %v2102
    %v2104 = vpop.f32.mrb[0].mxu0
    %v2105 = vpop.f32.mrb[0].mxu0
    %v2106 = vpop.f32.mrb[0].mxu0
    %2107 = vdwg.mxu0
    %v2108 = vmax.f32 %v2103, 0.0
    %2109 = vst.msk [vmem:[#allocation6] sm:$0x3] %vm1772, %v2108
    %v2110 = vld [vmem:[#allocation6] sm:$0x3]
    %s2111 = smul.u32 4, 8
    %s2112 = smul.u32 %s2111, 4
    %s2113 = sshll.u32 %s2112, 4
    %2114 = dma.done %s237, %s2113
    %v2115 = vpack.c.bf16 %v2110, %v2110
    %v2116 = vld [vmem:[#allocation9] sm:$0xff]
    %v2117 = vld [vmem:[#allocation9 + $0x8] sm:$0xff]
    %v2118 = vld [vmem:[#allocation9 + $0x10] sm:$0xff]
    %v2119 = vld [vmem:[#allocation9 + $0x18] sm:$0xff]
    %v2120 = vld [vmem:[#allocation9 + $0x20] sm:$0xff]
    %v2121 = vld [vmem:[#allocation9 + $0x28] sm:$0xff]
    %v2122 = vld [vmem:[#allocation9 + $0x30] sm:$0xff]
    %v2123 = vld [vmem:[#allocation9 + $0x38] sm:$0xff]
    %v2124 = vld [vmem:[#allocation9 + $0x40] sm:$0xff]
    %v2125 = vld [vmem:[#allocation9 + $0x48] sm:$0xff]
    %v2126 = vld [vmem:[#allocation9 + $0x50] sm:$0xff]
    %v2127 = vld [vmem:[#allocation9 + $0x58] sm:$0xff]
    %v2128 = vld [vmem:[#allocation9 + $0x60] sm:$0xff]
    %v2129 = vld [vmem:[#allocation9 + $0x68] sm:$0xff]
    %v2130 = vld [vmem:[#allocation9 + $0x70] sm:$0xff]
    %v2131 = vld [vmem:[#allocation9 + $0x78] sm:$0xff]
    %v2132 = vld [vmem:[%s2 + $0x3] sm:$0xf]
    %v2134 = vlaneseq
    %v2135 = vshrl.u32 %v2134, 7
    %v2136 = vsub.s32 0, %v2135
    %v2137 = vrot.slane %v2132, %v2136
    %v2138 = vlaneseq
    %v2139 = vshrl.u32 %v2138, 7
    %v2140 = vsub.s32 1, %v2139
    %v2141 = vrot.slane %v2132, %v2140
    %v2142 = vlaneseq
    %v2143 = vshrl.u32 %v2142, 7
    %v2144 = vsub.s32 2, %v2143
    %v2145 = vrot.slane %v2132, %v2144
    %v2146 = vlaneseq
    %v2147 = vshrl.u32 %v2146, 7
    %v2148 = vsub.s32 3, %v2147
    %v2149 = vrot.slane %v2132, %v2148
    %v2155 = vsel %vm1769, %v2115, 0
    %2157 = vmatprep.subr.bf16.mxu0 %v2117
    %2158 = vmatpush1.bf16.msra.mxu0 %v2116
    %2159 = vmatprep.subr.bf16.mxu0 %v2121
    %2160 = vmatpush1.bf16.msra.mxu0 %v2120
    %2161 = vmatprep.subr.bf16.mxu0 %v2125
    %2162 = vmatpush1.bf16.msra.mxu0 %v2124
    %2163 = vmatprep.subr.bf16.mxu0 %v2129
    %2164 = vmatpush1.bf16.msra.mxu0 %v2128
    %2165 = vmatprep.subr.bf16.mxu0 0
    %2166 = vmatpush1.bf16.msra.mxu0 0
    %2167 = vmatprep.subr.bf16.mxu0 0
    %2168 = vmatpush1.bf16.msra.mxu0 0
    %2169 = vmatprep.subr.bf16.mxu0 0
    %2170 = vmatpush1.bf16.msra.mxu0 0
    %2171 = vmatprep.subr.bf16.mxu0 0
    %2172 = vmatpush1.bf16.msra.mxu0 0
    %2173 = vmatprep.subr.bf16.mxu0 0
    %2174 = vmatpush1.bf16.msra.mxu0 0
    %2175 = vmatprep.subr.bf16.mxu0 0
    %2176 = vmatpush1.bf16.msra.mxu0 0
    %2177 = vmatprep.subr.bf16.mxu0 0
    %2178 = vmatpush1.bf16.msra.mxu0 0
    %2179 = vmatprep.subr.bf16.mxu0 0
    %2180 = vmatpush1.bf16.msra.mxu0 0
    %2181 = vmatprep.subr.bf16.mxu0 0
    %2182 = vmatpush1.bf16.msra.mxu0 0
    %2183 = vmatprep.subr.bf16.mxu0 0
    %2184 = vmatpush1.bf16.msra.mxu0 0
    %2185 = vmatprep.subr.bf16.mxu0 0
    %2186 = vmatpush1.bf16.msra.mxu0 0
    %2187 = vmatprep.subr.bf16.mxu0 0
    %2188 = vmatpush1.bf16.msra.mxu0 0
    %2189 = vmatprep.mubr.bf16.mxu0 0
    %2190 = vmatmul.mubr.bf16.gmra.mrb[0].mxu0 %v2155
    %v2191 = vpop.f32.mrb[0].mxu0
    %v2192 = vadd.f32 %v2137, %v2191
    %v2193 = vpop.f32.mrb[0].mxu0
    %v2194 = vadd.f32 %v2141, %v2193
    %v2195 = vpop.f32.mrb[0].mxu0
    %v2196 = vpop.f32.mrb[0].mxu0
    %2197 = vdwg.mxu0
    %2198 = vmatprep.subr.bf16.mxu0 %v2119
    %2199 = vmatpush1.bf16.msra.mxu0 %v2118
    %2200 = vmatprep.subr.bf16.mxu0 %v2123
    %2201 = vmatpush1.bf16.msra.mxu0 %v2122
    %2202 = vmatprep.subr.bf16.mxu0 %v2127
    %2203 = vmatpush1.bf16.msra.mxu0 %v2126
    %2204 = vmatprep.subr.bf16.mxu0 %v2131
    %2205 = vmatpush1.bf16.msra.mxu0 %v2130
    %2206 = vmatprep.subr.bf16.mxu0 0
    %2207 = vmatpush1.bf16.msra.mxu0 0
    %2208 = vmatprep.subr.bf16.mxu0 0
    %2209 = vmatpush1.bf16.msra.mxu0 0
    %2210 = vmatprep.subr.bf16.mxu0 0
    %2211 = vmatpush1.bf16.msra.mxu0 0
    %2212 = vmatprep.subr.bf16.mxu0 0
    %2213 = vmatpush1.bf16.msra.mxu0 0
    %2214 = vmatprep.subr.bf16.mxu0 0
    %2215 = vmatpush1.bf16.msra.mxu0 0
    %2216 = vmatprep.subr.bf16.mxu0 0
    %2217 = vmatpush1.bf16.msra.mxu0 0
    %2218 = vmatprep.subr.bf16.mxu0 0
    %2219 = vmatpush1.bf16.msra.mxu0 0
    %2220 = vmatprep.subr.bf16.mxu0 0
    %2221 = vmatpush1.bf16.msra.mxu0 0
    %2222 = vmatprep.subr.bf16.mxu0 0
    %2223 = vmatpush1.bf16.msra.mxu0 0
    %2224 = vmatprep.subr.bf16.mxu0 0
    %2225 = vmatpush1.bf16.msra.mxu0 0
    %2226 = vmatprep.subr.bf16.mxu0 0
    %2227 = vmatpush1.bf16.msra.mxu0 0
    %2228 = vmatprep.subr.bf16.mxu0 0
    %2229 = vmatpush1.bf16.msra.mxu0 0
    %2230 = vmatprep.mubr.bf16.mxu0 0
    %2231 = vmatmul.mubr.bf16.gmra.mrb[0].mxu0 %v2155
    %v2232 = vpop.f32.mrb[0].mxu0
    %v2233 = vadd.f32 %v2145, %v2232
    %v2234 = vpop.f32.mrb[0].mxu0
    %v2235 = vadd.f32 %v2149, %v2234
    %v2236 = vpop.f32.mrb[0].mxu0
    %v2237 = vpop.f32.mrb[0].mxu0
    %2238 = vdwg.mxu0
    %v2239 = vmax.f32 %v2192, 0.0
    %v2240 = vmax.f32 %v2194, 0.0
    %v2241 = vmax.f32 %v2233, 0.0
    %v2242 = vmax.f32 %v2235, 0.0
    %s2243 = sshll.u32 %s1608, 4
    %2244 = dma.done %s414, %s2243
    %v2245 = vpack.c.bf16 %v2239, %v2239
    %v2246 = vpack.c.bf16 %v2240, %v2240
    %v2247 = vpack.c.bf16 %v2241, %v2241
    %v2248 = vpack.c.bf16 %v2242, %v2242
    %v2249 = vld [vmem:[#allocation10] sm:$0xff]
    %v2250 = vld [vmem:[#allocation10 + $0x8] sm:$0xff]
    %v2251 = vld [vmem:[#allocation10 + $0x10] sm:$0xff]
    %v2252 = vld [vmem:[#allocation10 + $0x18] sm:$0xff]
    %v2253 = vld [vmem:[#allocation10 + $0x20] sm:$0xff]
    %v2254 = vld [vmem:[#allocation10 + $0x28] sm:$0xff]
    %v2255 = vld [vmem:[#allocation10 + $0x30] sm:$0xff]
    %v2256 = vld [vmem:[#allocation10 + $0x38] sm:$0xff]
    %v2257 = vld [vmem:[#allocation10 + $0x40] sm:$0xff]
    %v2258 = vld [vmem:[#allocation10 + $0x48] sm:$0xff]
    %v2259 = vld [vmem:[#allocation10 + $0x50] sm:$0xff]
    %v2260 = vld [vmem:[#allocation10 + $0x58] sm:$0xff]
    %v2261 = vld [vmem:[#allocation10 + $0x60] sm:$0xff]
    %v2262 = vld [vmem:[#allocation10 + $0x68] sm:$0xff]
    %v2263 = vld [vmem:[#allocation10 + $0x70] sm:$0xff]
    %v2264 = vld [vmem:[#allocation10 + $0x78] sm:$0xff]
    %v2265 = vld [vmem:[#allocation10 + $0x80] sm:$0xff]
    %v2266 = vld [vmem:[#allocation10 + $0x88] sm:$0xff]
    %v2267 = vld [vmem:[#allocation10 + $0x90] sm:$0xff]
    %v2268 = vld [vmem:[#allocation10 + $0x98] sm:$0xff]
    %v2269 = vld [vmem:[#allocation10 + $0xa0] sm:$0xff]
    %v2270 = vld [vmem:[#allocation10 + $0xa8] sm:$0xff]
    %v2271 = vld [vmem:[#allocation10 + $0xb0] sm:$0xff]
    %v2272 = vld [vmem:[#allocation10 + $0xb8] sm:$0xff]
    %v2273 = vld [vmem:[#allocation10 + $0xc0] sm:$0xff]
    %v2274 = vld [vmem:[#allocation10 + $0xc8] sm:$0xff]
    %v2275 = vld [vmem:[#allocation10 + $0xd0] sm:$0xff]
    %v2276 = vld [vmem:[#allocation10 + $0xd8] sm:$0xff]
    %v2277 = vld [vmem:[#allocation10 + $0xe0] sm:$0xff]
    %v2278 = vld [vmem:[#allocation10 + $0xe8] sm:$0xff]
    %v2279 = vld [vmem:[#allocation10 + $0xf0] sm:$0xff]
    %v2280 = vld [vmem:[#allocation10 + $0xf8] sm:$0xff]
    %v2281 = vld [vmem:[%s2 + $0x7] sm:$0x1]
    %v2283 = vlaneseq
    %v2284 = vshrl.u32 %v2283, 7
    %v2285 = vsub.s32 0, %v2284
    %v2286 = vrot.slane %v2281, %v2285
    %2288 = vmatprep.subr.bf16.mxu0 0
    %2289 = vmatpush1.bf16.msra.mxu0 %v2249
    %2290 = vmatprep.subr.bf16.mxu0 0
    %2291 = vmatpush1.bf16.msra.mxu0 %v2250
    %2292 = vmatprep.subr.bf16.mxu0 0
    %2293 = vmatpush1.bf16.msra.mxu0 %v2251
    %2294 = vmatprep.subr.bf16.mxu0 0
    %2295 = vmatpush1.bf16.msra.mxu0 %v2252
    %2296 = vmatprep.subr.bf16.mxu0 0
    %2297 = vmatpush1.bf16.msra.mxu0 %v2253
    %2298 = vmatprep.subr.bf16.mxu0 0
    %2299 = vmatpush1.bf16.msra.mxu0 %v2254
    %2300 = vmatprep.subr.bf16.mxu0 0
    %2301 = vmatpush1.bf16.msra.mxu0 %v2255
    %2302 = vmatprep.subr.bf16.mxu0 0
    %2303 = vmatpush1.bf16.msra.mxu0 %v2256
    %2304 = vmatprep.subr.bf16.mxu0 0
    %2305 = vmatpush1.bf16.msra.mxu0 %v2257
    %2306 = vmatprep.subr.bf16.mxu0 0
    %2307 = vmatpush1.bf16.msra.mxu0 %v2258
    %2308 = vmatprep.subr.bf16.mxu0 0
    %2309 = vmatpush1.bf16.msra.mxu0 %v2259
    %2310 = vmatprep.subr.bf16.mxu0 0
    %2311 = vmatpush1.bf16.msra.mxu0 %v2260
    %2312 = vmatprep.subr.bf16.mxu0 0
    %2313 = vmatpush1.bf16.msra.mxu0 %v2261
    %2314 = vmatprep.subr.bf16.mxu0 0
    %2315 = vmatpush1.bf16.msra.mxu0 %v2262
    %2316 = vmatprep.subr.bf16.mxu0 0
    %2317 = vmatpush1.bf16.msra.mxu0 %v2263
    %2318 = vmatprep.subr.bf16.mxu0 0
    %2319 = vmatpush1.bf16.msra.mxu0 %v2264
    %2320 = vmatprep.mubr.bf16.mxu0 %v2246
    %2321 = vmatmul.mubr.bf16.gmra.mrb[0].mxu0 %v2245
    %v2322 = vpop.f32.mrb[0].mxu0
    %v2323 = vadd.f32 %v2286, %v2322
    %v2324 = vpop.f32.mrb[0].mxu0
    %v2325 = vpop.f32.mrb[0].mxu0
    %v2326 = vpop.f32.mrb[0].mxu0
    %2327 = vdwg.mxu0
    %2328 = vmatprep.subr.bf16.mxu0 0
    %2329 = vmatpush1.bf16.msra.mxu0 %v2265
    %2330 = vmatprep.subr.bf16.mxu0 0
    %2331 = vmatpush1.bf16.msra.mxu0 %v2266
    %2332 = vmatprep.subr.bf16.mxu0 0
    %2333 = vmatpush1.bf16.msra.mxu0 %v2267
    %2334 = vmatprep.subr.bf16.mxu0 0
    %2335 = vmatpush1.bf16.msra.mxu0 %v2268
    %2336 = vmatprep.subr.bf16.mxu0 0
    %2337 = vmatpush1.bf16.msra.mxu0 %v2269
    %2338 = vmatprep.subr.bf16.mxu0 0
    %2339 = vmatpush1.bf16.msra.mxu0 %v2270
    %2340 = vmatprep.subr.bf16.mxu0 0
    %2341 = vmatpush1.bf16.msra.mxu0 %v2271
    %2342 = vmatprep.subr.bf16.mxu0 0
    %2343 = vmatpush1.bf16.msra.mxu0 %v2272
    %2344 = vmatprep.subr.bf16.mxu0 0
    %2345 = vmatpush1.bf16.msra.mxu0 %v2273
    %2346 = vmatprep.subr.bf16.mxu0 0
    %2347 = vmatpush1.bf16.msra.mxu0 %v2274
    %2348 = vmatprep.subr.bf16.mxu0 0
    %2349 = vmatpush1.bf16.msra.mxu0 %v2275
    %2350 = vmatprep.subr.bf16.mxu0 0
    %2351 = vmatpush1.bf16.msra.mxu0 %v2276
    %2352 = vmatprep.subr.bf16.mxu0 0
    %2353 = vmatpush1.bf16.msra.mxu0 %v2277
    %2354 = vmatprep.subr.bf16.mxu0 0
    %2355 = vmatpush1.bf16.msra.mxu0 %v2278
    %2356 = vmatprep.subr.bf16.mxu0 0
    %2357 = vmatpush1.bf16.msra.mxu0 %v2279
    %2358 = vmatprep.subr.bf16.mxu0 0
    %2359 = vmatpush1.bf16.msra.mxu0 %v2280
    %2360 = vmatprep.mubr.bf16.mxu0 %v2248
    %2361 = vmatmul.mubr.bf16.gmra.mrb[0].mxu0 %v2247
    %v2362 = vpop.f32.mrb[0].mxu0
    %v2363 = vadd.f32 %v2323, %v2362
    %v2364 = vpop.f32.mrb[0].mxu0
    %v2365 = vpop.f32.mrb[0].mxu0
    %v2366 = vpop.f32.mrb[0].mxu0
    %2367 = vdwg.mxu0
    %2368 = vst [vmem:[#allocation12] sm:$0x3] %v2363
    // Predicated region
    $region153: #{forward.1} parent=1 // pred_check
      _
    $region154: #{forward.1} parent=1 // pred_check_branch
      %2370 = sbr.rel (0) target = $region156
    $region155: #{forward.1} parent=1 // pred_region
      %s2372 = ssub.s32 32, 32
      %2373 = vsyncadd [#allocation13], %s2372
      %s2375 = sshll.u32 [#allocation12], 4
      %s2376 = int_to_ptr.vmem [resolvable:$true] %s2375
      %2378 = dma.vmem_to_hbm [thread:$0]  %s2376, 32, %s7, [#allocation13]
    $region156: #{forward.1} parent=1 // pred_fallthru
      _
    // Predicated region
    $region157: #{forward.1} parent=1 // pred_check
      _
    $region158: #{forward.1} parent=1 // pred_check_branch
      %2380 = sbr.rel (0) target = $region160
    $region159: #{forward.1} parent=1 // pred_region
      %2381 = dma.done [#allocation13], 32
    $region160: #{forward.1} parent=1 // pred_fallthru
      _
    %2382 = vsyncpa [#allocation13], 1
  %2383 = vsyncmov [#allocation11]
  %s2384 = vpop.sfrf %2383
  %p2385 = scmp.eq.s32.totalorder %s2384, 0
  %p2386 = pneg %p2385
  %2388 = shalt.err (%p2386)
  %s2389 = scalar_lea.sflag [#allocation11], 1
  %2390 = vsyncmov %s2389
  %s2391 = vpop.sfrf %2390
  %p2392 = scmp.eq.s32.totalorder %s2391, 0
  %p2393 = pneg %p2392
  %2395 = shalt.err (%p2393)
  %s2396 = scalar_lea.sflag [#allocation11], 2
  %2397 = vsyncmov %s2396
  %s2398 = vpop.sfrf %2397
  %p2399 = scmp.eq.s32.totalorder %s2398, 0
  %p2400 = pneg %p2399
  %2402 = shalt.err (%p2400)
  %s2403 = scalar_lea.sflag [#allocation11], 3
  %2404 = vsyncmov %s2403
  %s2405 = vpop.sfrf %2404
  %p2406 = scmp.eq.s32.totalorder %s2405, 0
  %p2407 = pneg %p2406
  %2409 = shalt.err (%p2407)

</llo_original>
